<compile_context>
chip_gen: v7x
topology: tpu7x:2x2x1
jax: 0.10.0
libtpu: 0.0.40
codegen_flags: <defaults>
</compile_context>

<pallas_src>
import jax
import jax.numpy as jnp
import numpy as np
from jax import lax
from jax.experimental import pallas as pl
from jax.experimental.pallas import tpu as pltpu


# ----------------------------- kernel -----------------------------

def _make_kernel(cm, cm2, H1, W1, H2, W2):
    def kernel(xt_ref, B1, br1, B2a, br2a, B2b, br2b, B3a, B3b, br3, B4, br4,
               o_ref, y1p, y2ap, x1p, x2bp):
        f32 = jnp.float32
        mdt = B1.dtype                      # MXU operand dtype (bf16 by default)
        WCM = W1 * cm

        # ---- zero ONLY the pad borders; interiors are fully rewritten below.
        y1p[H1:H1 + 1, :] = jnp.zeros((1, (W1 + 1) * cm), f32)      # bottom pad row
        y1p[:, WCM:(W1 + 1) * cm] = jnp.zeros((H1 + 1, cm), f32)    # right pad column
        y2ap[H1:H1 + 1, :] = jnp.zeros((1, W1 * cm2), f32)          # bottom pad row
        x1p[0:1, :] = jnp.zeros((1, WCM), f32)                      # top pad row (stem3 p=1)
        x2bp[0:1, :] = jnp.zeros((1, WCM), f32)                     # top pad row (stem3 p=1)

        # ---- stem1: Conv 3x3 / s2 / p1 + ReLU (H taps pre-de-interleaved) ----
        acc = jnp.broadcast_to(br1[...], (H1, WCM))
        for dh in range(3):
            acc = acc + jnp.dot(xt_ref[dh], B1[dh], preferred_element_type=f32)
        y1p[0:H1, 0:WCM] = jnp.maximum(acc, 0.0)

        # ---- stem2a: Conv 2x2 / s1 / p0 on the padded stem1 output + ReLU ----
        acc = jnp.broadcast_to(br2a[...], (H1, W1 * cm2))
        for dh in range(2):
            acc = acc + jnp.dot(y1p[dh:dh + H1, 0:WCM].astype(mdt), B2a[dh],
                                preferred_element_type=f32)
        y2ap[0:H1, :] = jnp.maximum(acc, 0.0)

        # ---- stem2b: Conv 2x2 / s1 / p0 + ReLU --------------------------------
        acc = jnp.broadcast_to(br2b[...], (H1, WCM))
        for dh in range(2):
            acc = acc + jnp.dot(y2ap[dh:dh + H1, :].astype(mdt), B2b[dh],
                                preferred_element_type=f32)
        x2bp[1:H1 + 1, :] = jnp.maximum(acc, 0.0)   # stored pre-padded for stem3

        # ---- maxpool 2x2 / s1 / ceil on the padded stem1 output ---------------
        # The explicit zero pad row/column mirrors the reference's F.pad before
        # pooling; ReLU outputs are >= 0, so the zeros never win the max.
        x1 = jnp.maximum(
            jnp.maximum(y1p[0:H1, 0:WCM], y1p[0:H1, cm:cm + WCM]),
            jnp.maximum(y1p[1:H1 + 1, 0:WCM], y1p[1:H1 + 1, cm:cm + WCM]))
        x1p[1:H1 + 1, :] = x1                       # stored pre-padded for stem3

        # ---- stem3: Conv 3x3 / s2 / p1 on concat([pool, stem2b]) + ReLU -------
        # Channel concat folded into two banded weights accumulating together.
        acc = jnp.broadcast_to(br3[...], (H2, W2 * cm))
        for dh in range(3):
            acc = acc + jnp.dot(x1p[pl.ds(dh, H2, stride=2), :].astype(mdt),
                                B3a[dh], preferred_element_type=f32)
            acc = acc + jnp.dot(x2bp[pl.ds(dh, H2, stride=2), :].astype(mdt),
                                B3b[dh], preferred_element_type=f32)
        y3 = jnp.maximum(acc, 0.0)

        # ---- stem4: Conv 1x1 / s1 + ReLU --------------------------------------
        y4 = jnp.dot(y3.astype(mdt), B4[...], preferred_element_type=f32) + br4[...]
        o_ref[...] = jnp.maximum(y4, 0.0)

    return kernel


# ----------------------------- wrapper -----------------------------

def _band(w, win, stride, wout, pad_left=0):
    """Lower a conv weight (O, I, kh, kw) to kh banded matrices.

    Input rows are lane-dense (W, C): lane p*I + ci holds column p, channel ci.
    B[dh] has shape (win*I, wout*O) with
      B[dh][p*I + ci, j*O + co] = w[co, ci, dh, dw]   where p = stride*j + dw - pad_left
    and taps with p outside [0, win) dropped (zero padding folded into the
    matrix), so one matmul yields one H-tap of the conv for every output
    column / channel at once.
    """
    cout, cin, kh, kw = w.shape
    j = np.arange(wout)
    sel = np.zeros((kw, win, wout), np.float32)
    for dw in range(kw):
        cols = stride * j + dw - pad_left
        ok = (cols >= 0) & (cols < win)
        sel[dw, cols[ok], j[ok]] = 1.0
    B = jnp.einsum("kpj,oihk->hpijo", jnp.asarray(sel), w)
    return B.reshape(kh, win * cin, wout * cout)


def hgstem(x, params, mxu_dtype=jnp.bfloat16):
    """HGStem forward.  x: (N, c1, H, W) NCHW f32 -> (N, c2, H//4, W//4) f32."""
    w1, b1, w2a, b2a, w2b, b2b, w3, b3, w4, b4 = params
    N, c1, H, W = x.shape
    cm = int(w1.shape[0])
    cm2 = cm // 2
    c2 = int(w4.shape[0])
    assert H % 4 == 0 and W % 4 == 0, "demo path assumes H and W divisible by 4"
    H1, W1 = H // 2, W // 2
    H2, W2 = H1 // 2, W1 // 2

    # NCHW -> lane-dense NHWC with (W, C) merged onto the lane axis, one zero
    # pad row on top (stem1 top pad; the bottom pad row is never read because
    # the stride is 2 and H is even).  The three H-taps of stem1's stride-2
    # conv are de-interleaved here so the kernel only does contiguous loads.
    xph = jnp.pad(jnp.transpose(x, (0, 2, 3, 1)), ((0, 0), (1, 0), (0, 0), (0, 0)))
    xph = xph.reshape(N, H + 1, W * c1)
    xt = jnp.stack([xph[:, dh:dh + 2 * H1:2, :] for dh in range(3)], axis=1)
    xt = xt.astype(mxu_dtype)                                  # (N, 3, H1, W*c1)

    # Banded (lowered) conv weights; W taps, W stride and W zero padding are
    # all folded in.  stem3's weight is split into the pool branch (first cm
    # input channels) and the stem2b branch (last cm).
    B1 = _band(w1, W, 2, W1, pad_left=1).astype(mxu_dtype)
    B2a = _band(w2a, W1, 1, W1).astype(mxu_dtype)
    B2b = _band(w2b, W1, 1, W1).astype(mxu_dtype)
    B3a = _band(w3[:, :cm], W1, 2, W2, pad_left=1).astype(mxu_dtype)
    B3b = _band(w3[:, cm:], W1, 2, W2, pad_left=1).astype(mxu_dtype)
    B4 = _band(w4, W2, 1, W2)[0].astype(mxu_dtype)

    # Biases pre-tiled into lane layout (1, Wout*Cout), kept f32 (they seed the
    # f32 accumulators).
    br1 = jnp.tile(b1, W1)[None, :]
    br2a = jnp.tile(b2a, W1)[None, :]
    br2b = jnp.tile(b2b, W1)[None, :]
    br3 = jnp.tile(b3, W2)[None, :]
    br4 = jnp.tile(b4, W2)[None, :]
    weights = (B1, br1, B2a, br2a, B2b, br2b, B3a, B3b, br3, B4, br4)

    # Per-generation VMEM budget: ~3/4 of physical, capped at 100 MiB
    # (v5e/v6e: 128 MiB physical -> ~96 MiB; v7x: 64 MiB -> 48 MiB).
    try:
        cap = int(pltpu.get_tpu_info().vmem_capacity_bytes)
        vmem_limit = min((cap * 3) // 4, 100 * 1024 * 1024)
    except Exception:
        vmem_limit = 48 * 1024 * 1024

    # Advisory cost: actual banded-matmul MACs plus activation scratch traffic.
    macs = (3 * H1 * (W * c1) * (W1 * cm)
            + 2 * H1 * (W1 * cm) * (W1 * cm2)
            + 2 * H1 * (W1 * cm2) * (W1 * cm)
            + 6 * H2 * (W1 * cm) * (W2 * cm)
            + H2 * (W2 * cm) * (W2 * c2))
    scratch_elems = ((H1 + 1) * (W1 + 1) * cm + (H1 + 1) * W1 * cm2
                     + 2 * (H1 + 1) * W1 * cm)
    bytes_acc = (int(xt.size) * xt.dtype.itemsize
                 + sum(int(w.size) * w.dtype.itemsize for w in weights)
                 + N * H2 * W2 * c2 * 4
                 + N * 2 * scratch_elems * 4)
    cost = pl.CostEstimate(flops=2 * N * macs, transcendentals=0,
                           bytes_accessed=bytes_acc)

    kernel = _make_kernel(cm, cm2, H1, W1, H2, W2)

    def run(single_buffer_consts):
        def wspec(w):
            nd = w.ndim
            if single_buffer_consts:
                return pl.BlockSpec(w.shape, lambda n: (0,) * nd,
                                    pipeline_mode=pl.Buffered(1))
            return pl.BlockSpec(w.shape, lambda n: (0,) * nd)

        return pl.pallas_call(
            kernel,
            out_shape=jax.ShapeDtypeStruct((N, H2, W2 * c2), jnp.float32),
            grid=(N,),
            in_specs=[pl.BlockSpec((None, 3, H1, W * c1), lambda n: (n, 0, 0, 0))]
                     + [wspec(w) for w in weights],
            out_specs=pl.BlockSpec((None, H2, W2 * c2), lambda n: (n, 0, 0)),
            scratch_shapes=[
                pltpu.VMEM((H1 + 1, (W1 + 1) * cm), jnp.float32),  # stem1 out (padded)
                pltpu.VMEM((H1 + 1, W1 * cm2), jnp.float32),       # stem2a out (padded)
                pltpu.VMEM((H1 + 1, W1 * cm), jnp.float32),        # pool out (padded)
                pltpu.VMEM((H1 + 1, W1 * cm), jnp.float32),        # stem2b out (padded)
            ],
            compiler_params=pltpu.CompilerParams(
                dimension_semantics=("parallel",),
                vmem_limit_bytes=vmem_limit),
            cost_estimate=cost,
        )(xt, *weights)

    try:
        out2d = run(True)      # constants single-buffered
    except Exception:
        # pipeline_mode=pl.Buffered(1) unsupported on this JAX build; fall back
        # to default (double-buffered) specs for the constant operands.
        out2d = run(False)

    out = out2d.reshape(N, H2, W2, c2)
    return jnp.transpose(out, (0, 3, 1, 2))


# ----------------------------- parameter setup (glue) -----------------------------

def _fold_bn_conv(key, cout, cin, kh, kw, eps=1e-5):
    """Deterministic conv weight + BatchNorm stats folded to (weight, bias)."""
    k1, k2, k3, k4, k5 = jax.random.split(key, 5)
    w = 0.3 * jax.random.normal(k1, (cout, cin, kh, kw), jnp.float32)
    gamma = 1.0 + 0.1 * jax.random.normal(k2, (cout,), jnp.float32)
    beta = 0.1 * jax.random.normal(k3, (cout,), jnp.float32)
    mean = 0.1 * jax.random.normal(k4, (cout,), jnp.float32)
    var = 1.0 + 0.1 * jnp.abs(jax.random.normal(k5, (cout,), jnp.float32))
    scale = gamma / jnp.sqrt(var + eps)
    return w * scale.reshape(-1, 1, 1, 1), beta - mean * scale


def make_params(key, c1, cm, c2):
    ks = jax.random.split(key, 5)
    w1, b1 = _fold_bn_conv(ks[0], cm, c1, 3, 3)         # stem1 : 3x3 / s2 / p1
    w2a, b2a = _fold_bn_conv(ks[1], cm // 2, cm, 2, 2)  # stem2a: 2x2 / s1 / p0
    w2b, b2b = _fold_bn_conv(ks[2], cm, cm // 2, 2, 2)  # stem2b: 2x2 / s1 / p0
    w3, b3 = _fold_bn_conv(ks[3], cm, 2 * cm, 3, 3)     # stem3 : 3x3 / s2 / p1
    w4, b4 = _fold_bn_conv(ks[4], c2, cm, 1, 1)         # stem4 : 1x1 / s1 / p0
    return (w1, b1, w2a, b2a, w2b, b2b, w3, b3, w4, b4)


# ----------------------------- pure-JAX reference -----------------------------

def hgstem_ref(x, params, act_dtype=jnp.float32):
    """Pure-JAX mirror of the PyTorch HGStem.forward (BN folded).

    With act_dtype=bfloat16 the intermediate activations are quantized at the
    same points where the Pallas kernel feeds them to the next MXU matmul, so
    the comparison against the bf16 kernel path stays tight.
    """
    w1, b1, w2a, b2a, w2b, b2b, w3, b3, w4, b4 = params

    def q(v):
        return v.astype(act_dtype).astype(jnp.float32)

    def conv(v, w, b, stride, pad):
        y = lax.conv_general_dilated(
            v, w, (stride, stride), ((pad, pad), (pad, pad)),
            dimension_numbers=("NCHW", "OIHW", "NCHW"),
            precision=lax.Precision.HIGHEST)
        return jax.nn.relu(y + b[None, :, None, None])

    y = q(conv(x, w1, b1, 2, 1))                                 # stem1
    y = jnp.pad(y, ((0, 0), (0, 0), (0, 1), (0, 1)))             # F.pad [0,1,0,1]
    x2 = q(conv(y, w2a, b2a, 1, 0))                              # stem2a
    x2 = jnp.pad(x2, ((0, 0), (0, 0), (0, 1), (0, 1)))           # F.pad [0,1,0,1]
    x2 = q(conv(x2, w2b, b2b, 1, 0))                             # stem2b
    x1 = lax.reduce_window(y, -jnp.inf, lax.max,
                           (1, 1, 2, 2), (1, 1, 1, 1), "VALID")  # maxpool 2x2/s1
    z = jnp.concatenate([x1, x2], axis=1)
    z = q(conv(z, w3, b3, 2, 1))                                 # stem3
    z = conv(z, w4, b4, 1, 0)                                    # stem4
    return z


if __name__ == "__main__":
    key = jax.random.PRNGKey(0)
    N, c1, cm, c2, H, W = 2, 3, 8, 16, 32, 32
    kx, kp = jax.random.split(key)
    x = jax.random.normal(kx, (N, c1, H, W), jnp.float32)
    params = make_params(kp, c1, cm, c2)

    # Quantize the input and conv weights to bf16-representable values once, so
    # the kernel's internal bf16 casts are lossless and the f32 reference (with
    # matching activation-quantization points) remains a tight check.
    def q16(v):
        return v.astype(jnp.bfloat16).astype(jnp.float32)

    weight_idx = {0, 2, 4, 6, 8}
    params_q = tuple(q16(p) if i in weight_idx else p for i, p in enumerate(params))
    x_q = q16(x)

    out = jax.block_until_ready(hgstem(x_q, params_q))           # bf16 MXU path
    ref = hgstem_ref(x_q, params_q, act_dtype=jnp.bfloat16)

    assert out.shape == (N, c2, H // 4, W // 4), out.shape
    err = float(jnp.max(jnp.abs(out - ref)))
    # Residual mismatch comes only from f32 summation-order differences plus a
    # handful of bf16 rounding-boundary flips at the activation quantization
    # points; 2% of the output range bounds that comfortably while still
    # catching any real indexing / padding / tap bug (O(1) errors).
    tol = 2e-2 * max(1.0, float(jnp.max(jnp.abs(ref))))
    assert err < tol, f"max abs error {err} exceeds tolerance {tol}"
    print("KERNEL_OK")
</pallas_src>

<mosaic_0001>
module attributes {stable_mosaic.version = 11 : i64} {
  func.func @kernel(%arg0: i32, %arg1: memref<1x3x16x96xbf16, #tpu.memory_space<vmem>>, %arg2: memref<3x96x128xbf16, #tpu.memory_space<vmem>>, %arg3: memref<1x128xf32, #tpu.memory_space<vmem>>, %arg4: memref<2x128x64xbf16, #tpu.memory_space<vmem>>, %arg5: memref<1x64xf32, #tpu.memory_space<vmem>>, %arg6: memref<2x64x128xbf16, #tpu.memory_space<vmem>>, %arg7: memref<1x128xf32, #tpu.memory_space<vmem>>, %arg8: memref<3x128x64xbf16, #tpu.memory_space<vmem>>, %arg9: memref<3x128x64xbf16, #tpu.memory_space<vmem>>, %arg10: memref<1x64xf32, #tpu.memory_space<vmem>>, %arg11: memref<64x128xbf16, #tpu.memory_space<vmem>>, %arg12: memref<1x128xf32, #tpu.memory_space<vmem>>, %arg13: memref<1x8x128xf32, #tpu.memory_space<vmem>>, %arg14: memref<17x136xf32, #tpu.memory_space<vmem>>, %arg15: memref<17x64xf32, #tpu.memory_space<vmem>>, %arg16: memref<17x128xf32, #tpu.memory_space<vmem>>, %arg17: memref<17x128xf32, #tpu.memory_space<vmem>>) attributes {dimension_semantics = [#tpu.dimension_semantics<parallel>], iteration_bounds = array<i64: 2>, scalar_prefetch = 0 : i64, scratch_operands = 4 : i64, tpu.core_type = #tpu.core_type<tc>, window_params = [{transform_indices = @transform_0, window_bounds = array<i64: 1, 3, 16, 96>}, {pipeline_mode = #tpu.pipeline_mode<synchronous>, transform_indices = @transform_1, window_bounds = array<i64: 3, 96, 128>}, {pipeline_mode = #tpu.pipeline_mode<synchronous>, transform_indices = @transform_2, window_bounds = array<i64: 1, 128>}, {pipeline_mode = #tpu.pipeline_mode<synchronous>, transform_indices = @transform_3, window_bounds = array<i64: 2, 128, 64>}, {pipeline_mode = #tpu.pipeline_mode<synchronous>, transform_indices = @transform_4, window_bounds = array<i64: 1, 64>}, {pipeline_mode = #tpu.pipeline_mode<synchronous>, transform_indices = @transform_5, window_bounds = array<i64: 2, 64, 128>}, {pipeline_mode = #tpu.pipeline_mode<synchronous>, transform_indices = @transform_6, window_bounds = array<i64: 1, 128>}, {pipeline_mode = #tpu.pipeline_mode<synchronous>, transform_indices = @transform_7, window_bounds = array<i64: 3, 128, 64>}, {pipeline_mode = #tpu.pipeline_mode<synchronous>, transform_indices = @transform_8, window_bounds = array<i64: 3, 128, 64>}, {pipeline_mode = #tpu.pipeline_mode<synchronous>, transform_indices = @transform_9, window_bounds = array<i64: 1, 64>}, {pipeline_mode = #tpu.pipeline_mode<synchronous>, transform_indices = @transform_10, window_bounds = array<i64: 64, 128>}, {pipeline_mode = #tpu.pipeline_mode<synchronous>, transform_indices = @transform_11, window_bounds = array<i64: 1, 128>}, {transform_indices = @transform_12, window_bounds = array<i64: 1, 8, 128>}]} {
    %cst = arith.constant 0.000000e+00 : f32
    %0 = vector.broadcast %cst : f32 to vector<1x136xf32>
    %c16 = arith.constant 16 : index
    %c0 = arith.constant 0 : index
    %1 = vector.load %arg14[%c16, %c0] : memref<17x136xf32, #tpu.memory_space<vmem>>, vector<1x136xf32>
    tpu.vector_store %arg14[%c16, %c0], %0 {strides = array<i32>} : memref<17x136xf32, #tpu.memory_space<vmem>>, vector<1x136xf32>,
    %cst_0 = arith.constant 0.000000e+00 : f32
    %2 = vector.broadcast %cst_0 : f32 to vector<17x8xf32>
    %c0_1 = arith.constant 0 : index
    %c128 = arith.constant 128 : index
    %3 = vector.load %arg14[%c0_1, %c128] : memref<17x136xf32, #tpu.memory_space<vmem>>, vector<17x8xf32>
    tpu.vector_store %arg14[%c0_1, %c128], %2 {strides = array<i32>} : memref<17x136xf32, #tpu.memory_space<vmem>>, vector<17x8xf32>,
    %cst_2 = arith.constant 0.000000e+00 : f32
    %4 = vector.broadcast %cst_2 : f32 to vector<1x64xf32>
    %c16_3 = arith.constant 16 : index
    %c0_4 = arith.constant 0 : index
    %5 = vector.load %arg15[%c16_3, %c0_4] : memref<17x64xf32, #tpu.memory_space<vmem>>, vector<1x64xf32>
    tpu.vector_store %arg15[%c16_3, %c0_4], %4 {strides = array<i32>} : memref<17x64xf32, #tpu.memory_space<vmem>>, vector<1x64xf32>,
    %cst_5 = arith.constant 0.000000e+00 : f32
    %6 = vector.broadcast %cst_5 : f32 to vector<1x128xf32>
    %c0_6 = arith.constant 0 : index
    %c0_7 = arith.constant 0 : index
    %7 = vector.load %arg16[%c0_6, %c0_7] : memref<17x128xf32, #tpu.memory_space<vmem>>, vector<1x128xf32>
    tpu.vector_store %arg16[%c0_6, %c0_7], %6 {strides = array<i32>} : memref<17x128xf32, #tpu.memory_space<vmem>>, vector<1x128xf32>,
    %cst_8 = arith.constant 0.000000e+00 : f32
    %8 = vector.broadcast %cst_8 : f32 to vector<1x128xf32>
    %c0_9 = arith.constant 0 : index
    %c0_10 = arith.constant 0 : index
    %9 = vector.load %arg17[%c0_9, %c0_10] : memref<17x128xf32, #tpu.memory_space<vmem>>, vector<1x128xf32>
    tpu.vector_store %arg17[%c0_9, %c0_10], %8 {strides = array<i32>} : memref<17x128xf32, #tpu.memory_space<vmem>>, vector<1x128xf32>,
    %c0_11 = arith.constant 0 : index
    %c0_12 = arith.constant 0 : index
    %10 = vector.load %arg3[%c0_11, %c0_12] : memref<1x128xf32, #tpu.memory_space<vmem>>, vector<1x128xf32>
    %11 = vector.shape_cast %10 : vector<1x128xf32> to vector<1x128xf32>
    %12 = vector.broadcast %11 : vector<1x128xf32> to vector<16x128xf32>
    %c0_13 = arith.constant 0 : index
    %c0_14 = arith.constant 0 : index
    %c0_15 = arith.constant 0 : index
    %c0_16 = arith.constant 0 : index
    %13 = vector.load %arg1[%c0_13, %c0_14, %c0_15, %c0_16] : memref<1x3x16x96xbf16, #tpu.memory_space<vmem>>, vector<1x1x16x96xbf16>
    %14 = vector.shape_cast %13 : vector<1x1x16x96xbf16> to vector<16x96xbf16>
    %c0_17 = arith.constant 0 : index
    %c0_18 = arith.constant 0 : index
    %c0_19 = arith.constant 0 : index
    %15 = vector.load %arg2[%c0_17, %c0_18, %c0_19] : memref<3x96x128xbf16, #tpu.memory_space<vmem>>, vector<1x96x128xbf16>
    %16 = vector.shape_cast %15 : vector<1x96x128xbf16> to vector<96x128xbf16>
    %cst_20 = arith.constant dense<0.000000e+00> : vector<16x128xf32>
    %17 = tpu.matmul %14, %16, %cst_20 {dimension_numbers = #tpu.dot_dimension_numbers<[1], [0], [0], [1], [0, 0, 1, 1], [], []>} : vector<16x96xbf16>, vector<96x128xbf16>, vector<16x128xf32> -> vector<16x128xf32>
    %18 = arith.addf %12, %17 : vector<16x128xf32>
    %c0_21 = arith.constant 0 : index
    %c1 = arith.constant 1 : index
    %c0_22 = arith.constant 0 : index
    %c0_23 = arith.constant 0 : index
    %19 = vector.load %arg1[%c0_21, %c1, %c0_22, %c0_23] : memref<1x3x16x96xbf16, #tpu.memory_space<vmem>>, vector<1x1x16x96xbf16>
    %20 = vector.shape_cast %19 : vector<1x1x16x96xbf16> to vector<16x96xbf16>
    %c1_24 = arith.constant 1 : index
    %c0_25 = arith.constant 0 : index
    %c0_26 = arith.constant 0 : index
    %21 = vector.load %arg2[%c1_24, %c0_25, %c0_26] : memref<3x96x128xbf16, #tpu.memory_space<vmem>>, vector<1x96x128xbf16>
    %22 = vector.shape_cast %21 : vector<1x96x128xbf16> to vector<96x128xbf16>
    %cst_27 = arith.constant dense<0.000000e+00> : vector<16x128xf32>
    %23 = tpu.matmul %20, %22, %cst_27 {dimension_numbers = #tpu.dot_dimension_numbers<[1], [0], [0], [1], [0, 0, 1, 1], [], []>} : vector<16x96xbf16>, vector<96x128xbf16>, vector<16x128xf32> -> vector<16x128xf32>
    %24 = arith.addf %18, %23 : vector<16x128xf32>
    %c0_28 = arith.constant 0 : index
    %c2 = arith.constant 2 : index
    %c0_29 = arith.constant 0 : index
    %c0_30 = arith.constant 0 : index
    %25 = vector.load %arg1[%c0_28, %c2, %c0_29, %c0_30] : memref<1x3x16x96xbf16, #tpu.memory_space<vmem>>, vector<1x1x16x96xbf16>
    %26 = vector.shape_cast %25 : vector<1x1x16x96xbf16> to vector<16x96xbf16>
    %c2_31 = arith.constant 2 : index
    %c0_32 = arith.constant 0 : index
    %c0_33 = arith.constant 0 : index
    %27 = vector.load %arg2[%c2_31, %c0_32, %c0_33] : memref<3x96x128xbf16, #tpu.memory_space<vmem>>, vector<1x96x128xbf16>
    %28 = vector.shape_cast %27 : vector<1x96x128xbf16> to vector<96x128xbf16>
    %cst_34 = arith.constant dense<0.000000e+00> : vector<16x128xf32>
    %29 = tpu.matmul %26, %28, %cst_34 {dimension_numbers = #tpu.dot_dimension_numbers<[1], [0], [0], [1], [0, 0, 1, 1], [], []>} : vector<16x96xbf16>, vector<96x128xbf16>, vector<16x128xf32> -> vector<16x128xf32>
    %30 = arith.addf %24, %29 : vector<16x128xf32>
    %cst_35 = arith.constant 0.000000e+00 : f32
    %31 = vector.broadcast %cst_35 : f32 to vector<16x128xf32>
    %32 = arith.maximumf %30, %31 : vector<16x128xf32>
    %c0_36 = arith.constant 0 : index
    %c0_37 = arith.constant 0 : index
    %33 = vector.load %arg14[%c0_36, %c0_37] : memref<17x136xf32, #tpu.memory_space<vmem>>, vector<16x128xf32>
    tpu.vector_store %arg14[%c0_36, %c0_37], %32 {strides = array<i32>} : memref<17x136xf32, #tpu.memory_space<vmem>>, vector<16x128xf32>,
    %c0_38 = arith.constant 0 : index
    %c0_39 = arith.constant 0 : index
    %34 = vector.load %arg5[%c0_38, %c0_39] : memref<1x64xf32, #tpu.memory_space<vmem>>, vector<1x64xf32>
    %35 = vector.shape_cast %34 : vector<1x64xf32> to vector<1x64xf32>
    %36 = vector.broadcast %35 : vector<1x64xf32> to vector<16x64xf32>
    %c0_40 = arith.constant 0 : index
    %c0_41 = arith.constant 0 : index
    %37 = vector.load %arg14[%c0_40, %c0_41] : memref<17x136xf32, #tpu.memory_space<vmem>>, vector<16x128xf32>
    %38 = arith.truncf %37 : vector<16x128xf32> to vector<16x128xbf16>
    %c0_42 = arith.constant 0 : index
    %c0_43 = arith.constant 0 : index
    %c0_44 = arith.constant 0 : index
    %39 = vector.load %arg4[%c0_42, %c0_43, %c0_44] : memref<2x128x64xbf16, #tpu.memory_space<vmem>>, vector<1x128x64xbf16>
    %40 = vector.shape_cast %39 : vector<1x128x64xbf16> to vector<128x64xbf16>
    %cst_45 = arith.constant dense<0.000000e+00> : vector<16x64xf32>
    %41 = tpu.matmul %38, %40, %cst_45 {dimension_numbers = #tpu.dot_dimension_numbers<[1], [0], [0], [1], [0, 0, 1, 1], [], []>} : vector<16x128xbf16>, vector<128x64xbf16>, vector<16x64xf32> -> vector<16x64xf32>
    %42 = arith.addf %36, %41 : vector<16x64xf32>
    %c1_46 = arith.constant 1 : index
    %c0_47 = arith.constant 0 : index
    %43 = vector.load %arg14[%c1_46, %c0_47] : memref<17x136xf32, #tpu.memory_space<vmem>>, vector<16x128xf32>
    %44 = arith.truncf %43 : vector<16x128xf32> to vector<16x128xbf16>
    %c1_48 = arith.constant 1 : index
    %c0_49 = arith.constant 0 : index
    %c0_50 = arith.constant 0 : index
    %45 = vector.load %arg4[%c1_48, %c0_49, %c0_50] : memref<2x128x64xbf16, #tpu.memory_space<vmem>>, vector<1x128x64xbf16>
    %46 = vector.shape_cast %45 : vector<1x128x64xbf16> to vector<128x64xbf16>
    %cst_51 = arith.constant dense<0.000000e+00> : vector<16x64xf32>
    %47 = tpu.matmul %44, %46, %cst_51 {dimension_numbers = #tpu.dot_dimension_numbers<[1], [0], [0], [1], [0, 0, 1, 1], [], []>} : vector<16x128xbf16>, vector<128x64xbf16>, vector<16x64xf32> -> vector<16x64xf32>
    %48 = arith.addf %42, %47 : vector<16x64xf32>
    %cst_52 = arith.constant 0.000000e+00 : f32
    %49 = vector.broadcast %cst_52 : f32 to vector<16x64xf32>
    %50 = arith.maximumf %48, %49 : vector<16x64xf32>
    %c0_53 = arith.constant 0 : index
    %c0_54 = arith.constant 0 : index
    %51 = vector.load %arg15[%c0_53, %c0_54] : memref<17x64xf32, #tpu.memory_space<vmem>>, vector<16x64xf32>
    tpu.vector_store %arg15[%c0_53, %c0_54], %50 {strides = array<i32>} : memref<17x64xf32, #tpu.memory_space<vmem>>, vector<16x64xf32>,
    %c0_55 = arith.constant 0 : index
    %c0_56 = arith.constant 0 : index
    %52 = vector.load %arg7[%c0_55, %c0_56] : memref<1x128xf32, #tpu.memory_space<vmem>>, vector<1x128xf32>
    %53 = vector.shape_cast %52 : vector<1x128xf32> to vector<1x128xf32>
    %54 = vector.broadcast %53 : vector<1x128xf32> to vector<16x128xf32>
    %c0_57 = arith.constant 0 : index
    %c0_58 = arith.constant 0 : index
    %55 = vector.load %arg15[%c0_57, %c0_58] : memref<17x64xf32, #tpu.memory_space<vmem>>, vector<16x64xf32>
    %56 = arith.truncf %55 : vector<16x64xf32> to vector<16x64xbf16>
    %c0_59 = arith.constant 0 : index
    %c0_60 = arith.constant 0 : index
    %c0_61 = arith.constant 0 : index
    %57 = vector.load %arg6[%c0_59, %c0_60, %c0_61] : memref<2x64x128xbf16, #tpu.memory_space<vmem>>, vector<1x64x128xbf16>
    %58 = vector.shape_cast %57 : vector<1x64x128xbf16> to vector<64x128xbf16>
    %cst_62 = arith.constant dense<0.000000e+00> : vector<16x128xf32>
    %59 = tpu.matmul %56, %58, %cst_62 {dimension_numbers = #tpu.dot_dimension_numbers<[1], [0], [0], [1], [0, 0, 1, 1], [], []>} : vector<16x64xbf16>, vector<64x128xbf16>, vector<16x128xf32> -> vector<16x128xf32>
    %60 = arith.addf %54, %59 : vector<16x128xf32>
    %c1_63 = arith.constant 1 : index
    %c0_64 = arith.constant 0 : index
    %61 = vector.load %arg15[%c1_63, %c0_64] : memref<17x64xf32, #tpu.memory_space<vmem>>, vector<16x64xf32>
    %62 = arith.truncf %61 : vector<16x64xf32> to vector<16x64xbf16>
    %c1_65 = arith.constant 1 : index
    %c0_66 = arith.constant 0 : index
    %c0_67 = arith.constant 0 : index
    %63 = vector.load %arg6[%c1_65, %c0_66, %c0_67] : memref<2x64x128xbf16, #tpu.memory_space<vmem>>, vector<1x64x128xbf16>
    %64 = vector.shape_cast %63 : vector<1x64x128xbf16> to vector<64x128xbf16>
    %cst_68 = arith.constant dense<0.000000e+00> : vector<16x128xf32>
    %65 = tpu.matmul %62, %64, %cst_68 {dimension_numbers = #tpu.dot_dimension_numbers<[1], [0], [0], [1], [0, 0, 1, 1], [], []>} : vector<16x64xbf16>, vector<64x128xbf16>, vector<16x128xf32> -> vector<16x128xf32>
    %66 = arith.addf %60, %65 : vector<16x128xf32>
    %cst_69 = arith.constant 0.000000e+00 : f32
    %67 = vector.broadcast %cst_69 : f32 to vector<16x128xf32>
    %68 = arith.maximumf %66, %67 : vector<16x128xf32>
    %c1_70 = arith.constant 1 : index
    %c0_71 = arith.constant 0 : index
    %69 = vector.load %arg17[%c1_70, %c0_71] : memref<17x128xf32, #tpu.memory_space<vmem>>, vector<16x128xf32>
    tpu.vector_store %arg17[%c1_70, %c0_71], %68 {strides = array<i32>} : memref<17x128xf32, #tpu.memory_space<vmem>>, vector<16x128xf32>,
    %c0_72 = arith.constant 0 : index
    %c0_73 = arith.constant 0 : index
    %70 = vector.load %arg14[%c0_72, %c0_73] : memref<17x136xf32, #tpu.memory_space<vmem>>, vector<16x128xf32>
    %c0_74 = arith.constant 0 : index
    %c8 = arith.constant 8 : index
    %71 = vector.load %arg14[%c0_74, %c8] : memref<17x136xf32, #tpu.memory_space<vmem>>, vector<16x128xf32>
    %72 = arith.maximumf %70, %71 : vector<16x128xf32>
    %c1_75 = arith.constant 1 : index
    %c0_76 = arith.constant 0 : index
    %73 = vector.load %arg14[%c1_75, %c0_76] : memref<17x136xf32, #tpu.memory_space<vmem>>, vector<16x128xf32>
    %c1_77 = arith.constant 1 : index
    %c8_78 = arith.constant 8 : index
    %74 = vector.load %arg14[%c1_77, %c8_78] : memref<17x136xf32, #tpu.memory_space<vmem>>, vector<16x128xf32>
    %75 = arith.maximumf %73, %74 : vector<16x128xf32>
    %76 = arith.maximumf %72, %75 : vector<16x128xf32>
    %c1_79 = arith.constant 1 : index
    %c0_80 = arith.constant 0 : index
    %77 = vector.load %arg16[%c1_79, %c0_80] : memref<17x128xf32, #tpu.memory_space<vmem>>, vector<16x128xf32>
    tpu.vector_store %arg16[%c1_79, %c0_80], %76 {strides = array<i32>} : memref<17x128xf32, #tpu.memory_space<vmem>>, vector<16x128xf32>,
    %c0_81 = arith.constant 0 : index
    %c0_82 = arith.constant 0 : index
    %78 = vector.load %arg10[%c0_81, %c0_82] : memref<1x64xf32, #tpu.memory_space<vmem>>, vector<1x64xf32>
    %79 = vector.shape_cast %78 : vector<1x64xf32> to vector<1x64xf32>
    %80 = vector.broadcast %79 : vector<1x64xf32> to vector<8x64xf32>
    %c0_83 = arith.constant 0 : index
    %c0_84 = arith.constant 0 : index
    %81 = tpu.strided_load %arg16[%c0_83, %c0_84] {strides = array<i32: 2, 1>} : memref<17x128xf32, #tpu.memory_space<vmem>>, vector<8x128xf32>
    %82 = arith.truncf %81 : vector<8x128xf32> to vector<8x128xbf16>
    %c0_85 = arith.constant 0 : index
    %c0_86 = arith.constant 0 : index
    %c0_87 = arith.constant 0 : index
    %83 = vector.load %arg8[%c0_85, %c0_86, %c0_87] : memref<3x128x64xbf16, #tpu.memory_space<vmem>>, vector<1x128x64xbf16>
    %84 = vector.shape_cast %83 : vector<1x128x64xbf16> to vector<128x64xbf16>
    %cst_88 = arith.constant dense<0.000000e+00> : vector<8x64xf32>
    %85 = tpu.matmul %82, %84, %cst_88 {dimension_numbers = #tpu.dot_dimension_numbers<[1], [0], [0], [1], [0, 0, 1, 1], [], []>} : vector<8x128xbf16>, vector<128x64xbf16>, vector<8x64xf32> -> vector<8x64xf32>
    %86 = arith.addf %80, %85 : vector<8x64xf32>
    %c0_89 = arith.constant 0 : index
    %c0_90 = arith.constant 0 : index
    %87 = tpu.strided_load %arg17[%c0_89, %c0_90] {strides = array<i32: 2, 1>} : memref<17x128xf32, #tpu.memory_space<vmem>>, vector<8x128xf32>
    %88 = arith.truncf %87 : vector<8x128xf32> to vector<8x128xbf16>
    %c0_91 = arith.constant 0 : index
    %c0_92 = arith.constant 0 : index
    %c0_93 = arith.constant 0 : index
    %89 = vector.load %arg9[%c0_91, %c0_92, %c0_93] : memref<3x128x64xbf16, #tpu.memory_space<vmem>>, vector<1x128x64xbf16>
    %90 = vector.shape_cast %89 : vector<1x128x64xbf16> to vector<128x64xbf16>
    %cst_94 = arith.constant dense<0.000000e+00> : vector<8x64xf32>
    %91 = tpu.matmul %88, %90, %cst_94 {dimension_numbers = #tpu.dot_dimension_numbers<[1], [0], [0], [1], [0, 0, 1, 1], [], []>} : vector<8x128xbf16>, vector<128x64xbf16>, vector<8x64xf32> -> vector<8x64xf32>
    %92 = arith.addf %86, %91 : vector<8x64xf32>
    %c1_95 = arith.constant 1 : index
    %c0_96 = arith.constant 0 : index
    %93 = tpu.strided_load %arg16[%c1_95, %c0_96] {strides = array<i32: 2, 1>} : memref<17x128xf32, #tpu.memory_space<vmem>>, vector<8x128xf32>
    %94 = arith.truncf %93 : vector<8x128xf32> to vector<8x128xbf16>
    %c1_97 = arith.constant 1 : index
    %c0_98 = arith.constant 0 : index
    %c0_99 = arith.constant 0 : index
    %95 = vector.load %arg8[%c1_97, %c0_98, %c0_99] : memref<3x128x64xbf16, #tpu.memory_space<vmem>>, vector<1x128x64xbf16>
    %96 = vector.shape_cast %95 : vector<1x128x64xbf16> to vector<128x64xbf16>
    %cst_100 = arith.constant dense<0.000000e+00> : vector<8x64xf32>
    %97 = tpu.matmul %94, %96, %cst_100 {dimension_numbers = #tpu.dot_dimension_numbers<[1], [0], [0], [1], [0, 0, 1, 1], [], []>} : vector<8x128xbf16>, vector<128x64xbf16>, vector<8x64xf32> -> vector<8x64xf32>
    %98 = arith.addf %92, %97 : vector<8x64xf32>
    %c1_101 = arith.constant 1 : index
    %c0_102 = arith.constant 0 : index
    %99 = tpu.strided_load %arg17[%c1_101, %c0_102] {strides = array<i32: 2, 1>} : memref<17x128xf32, #tpu.memory_space<vmem>>, vector<8x128xf32>
    %100 = arith.truncf %99 : vector<8x128xf32> to vector<8x128xbf16>
    %c1_103 = arith.constant 1 : index
    %c0_104 = arith.constant 0 : index
    %c0_105 = arith.constant 0 : index
    %101 = vector.load %arg9[%c1_103, %c0_104, %c0_105] : memref<3x128x64xbf16, #tpu.memory_space<vmem>>, vector<1x128x64xbf16>
    %102 = vector.shape_cast %101 : vector<1x128x64xbf16> to vector<128x64xbf16>
    %cst_106 = arith.constant dense<0.000000e+00> : vector<8x64xf32>
    %103 = tpu.matmul %100, %102, %cst_106 {dimension_numbers = #tpu.dot_dimension_numbers<[1], [0], [0], [1], [0, 0, 1, 1], [], []>} : vector<8x128xbf16>, vector<128x64xbf16>, vector<8x64xf32> -> vector<8x64xf32>
    %104 = arith.addf %98, %103 : vector<8x64xf32>
    %c2_107 = arith.constant 2 : index
    %c0_108 = arith.constant 0 : index
    %105 = tpu.strided_load %arg16[%c2_107, %c0_108] {strides = array<i32: 2, 1>} : memref<17x128xf32, #tpu.memory_space<vmem>>, vector<8x128xf32>
    %106 = arith.truncf %105 : vector<8x128xf32> to vector<8x128xbf16>
    %c2_109 = arith.constant 2 : index
    %c0_110 = arith.constant 0 : index
    %c0_111 = arith.constant 0 : index
    %107 = vector.load %arg8[%c2_109, %c0_110, %c0_111] : memref<3x128x64xbf16, #tpu.memory_space<vmem>>, vector<1x128x64xbf16>
    %108 = vector.shape_cast %107 : vector<1x128x64xbf16> to vector<128x64xbf16>
    %cst_112 = arith.constant dense<0.000000e+00> : vector<8x64xf32>
    %109 = tpu.matmul %106, %108, %cst_112 {dimension_numbers = #tpu.dot_dimension_numbers<[1], [0], [0], [1], [0, 0, 1, 1], [], []>} : vector<8x128xbf16>, vector<128x64xbf16>, vector<8x64xf32> -> vector<8x64xf32>
    %110 = arith.addf %104, %109 : vector<8x64xf32>
    %c2_113 = arith.constant 2 : index
    %c0_114 = arith.constant 0 : index
    %111 = tpu.strided_load %arg17[%c2_113, %c0_114] {strides = array<i32: 2, 1>} : memref<17x128xf32, #tpu.memory_space<vmem>>, vector<8x128xf32>
    %112 = arith.truncf %111 : vector<8x128xf32> to vector<8x128xbf16>
    %c2_115 = arith.constant 2 : index
    %c0_116 = arith.constant 0 : index
    %c0_117 = arith.constant 0 : index
    %113 = vector.load %arg9[%c2_115, %c0_116, %c0_117] : memref<3x128x64xbf16, #tpu.memory_space<vmem>>, vector<1x128x64xbf16>
    %114 = vector.shape_cast %113 : vector<1x128x64xbf16> to vector<128x64xbf16>
    %cst_118 = arith.constant dense<0.000000e+00> : vector<8x64xf32>
    %115 = tpu.matmul %112, %114, %cst_118 {dimension_numbers = #tpu.dot_dimension_numbers<[1], [0], [0], [1], [0, 0, 1, 1], [], []>} : vector<8x128xbf16>, vector<128x64xbf16>, vector<8x64xf32> -> vector<8x64xf32>
    %116 = arith.addf %110, %115 : vector<8x64xf32>
    %cst_119 = arith.constant 0.000000e+00 : f32
    %117 = vector.broadcast %cst_119 : f32 to vector<8x64xf32>
    %118 = arith.maximumf %116, %117 : vector<8x64xf32>
    %119 = arith.truncf %118 : vector<8x64xf32> to vector<8x64xbf16>
    %c0_120 = arith.constant 0 : index
    %c0_121 = arith.constant 0 : index
    %120 = vector.load %arg11[%c0_120, %c0_121] : memref<64x128xbf16, #tpu.memory_space<vmem>>, vector<64x128xbf16>
    %cst_122 = arith.constant dense<0.000000e+00> : vector<8x128xf32>
    %121 = tpu.matmul %119, %120, %cst_122 {dimension_numbers = #tpu.dot_dimension_numbers<[1], [0], [0], [1], [0, 0, 1, 1], [], []>} : vector<8x64xbf16>, vector<64x128xbf16>, vector<8x128xf32> -> vector<8x128xf32>
    %c0_123 = arith.constant 0 : index
    %c0_124 = arith.constant 0 : index
    %122 = vector.load %arg12[%c0_123, %c0_124] : memref<1x128xf32, #tpu.memory_space<vmem>>, vector<1x128xf32>
    %123 = vector.broadcast %122 : vector<1x128xf32> to vector<8x128xf32>
    %124 = arith.addf %121, %123 : vector<8x128xf32>
    %cst_125 = arith.constant 0.000000e+00 : f32
    %125 = vector.broadcast %cst_125 : f32 to vector<8x128xf32>
    %126 = arith.maximumf %124, %125 : vector<8x128xf32>
    %c0_126 = arith.constant 0 : index
    %c0_127 = arith.constant 0 : index
    %c0_128 = arith.constant 0 : index
    %127 = vector.load %arg13[%c0_126, %c0_127, %c0_128] : memref<1x8x128xf32, #tpu.memory_space<vmem>>, vector<1x8x128xf32>
    %128 = vector.shape_cast %127 : vector<1x8x128xf32> to vector<8x128xf32>
    %129 = vector.shape_cast %126 : vector<8x128xf32> to vector<1x8x128xf32>
    tpu.vector_store %arg13[%c0_126, %c0_127, %c0_128], %129 {strides = array<i32>} : memref<1x8x128xf32, #tpu.memory_space<vmem>>, vector<1x8x128xf32>,
    return
  }
  func.func @transform_0(%arg0: i32) -> (i32, i32, i32, i32) {
    %c0_i32 = arith.constant 0 : i32
    %c0_i32_0 = arith.constant 0 : i32
    %c0_i32_1 = arith.constant 0 : i32
    %c0_i32_2 = arith.constant 0 : i32
    return %arg0, %c0_i32, %c0_i32_0, %c0_i32_1 : i32, i32, i32, i32
  }
  func.func @transform_1(%arg0: i32) -> (i32, i32, i32) {
    %c0_i32 = arith.constant 0 : i32
    %c0_i32_0 = arith.constant 0 : i32
    %c0_i32_1 = arith.constant 0 : i32
    %c0_i32_2 = arith.constant 0 : i32
    return %c0_i32, %c0_i32_0, %c0_i32_1 : i32, i32, i32
  }
  func.func @transform_2(%arg0: i32) -> (i32, i32) {
    %c0_i32 = arith.constant 0 : i32
    %c0_i32_0 = arith.constant 0 : i32
    %c0_i32_1 = arith.constant 0 : i32
    return %c0_i32, %c0_i32_0 : i32, i32
  }
  func.func @transform_3(%arg0: i32) -> (i32, i32, i32) {
    %c0_i32 = arith.constant 0 : i32
    %c0_i32_0 = arith.constant 0 : i32
    %c0_i32_1 = arith.constant 0 : i32
    %c0_i32_2 = arith.constant 0 : i32
    return %c0_i32, %c0_i32_0, %c0_i32_1 : i32, i32, i32
  }
  func.func @transform_4(%arg0: i32) -> (i32, i32) {
    %c0_i32 = arith.constant 0 : i32
    %c0_i32_0 = arith.constant 0 : i32
    %c0_i32_1 = arith.constant 0 : i32
    return %c0_i32, %c0_i32_0 : i32, i32
  }
  func.func @transform_5(%arg0: i32) -> (i32, i32, i32) {
    %c0_i32 = arith.constant 0 : i32
    %c0_i32_0 = arith.constant 0 : i32
    %c0_i32_1 = arith.constant 0 : i32
    %c0_i32_2 = arith.constant 0 : i32
    return %c0_i32, %c0_i32_0, %c0_i32_1 : i32, i32, i32
  }
  func.func @transform_6(%arg0: i32) -> (i32, i32) {
    %c0_i32 = arith.constant 0 : i32
    %c0_i32_0 = arith.constant 0 : i32
    %c0_i32_1 = arith.constant 0 : i32
    return %c0_i32, %c0_i32_0 : i32, i32
  }
  func.func @transform_7(%arg0: i32) -> (i32, i32, i32) {
    %c0_i32 = arith.constant 0 : i32
    %c0_i32_0 = arith.constant 0 : i32
    %c0_i32_1 = arith.constant 0 : i32
    %c0_i32_2 = arith.constant 0 : i32
    return %c0_i32, %c0_i32_0, %c0_i32_1 : i32, i32, i32
  }
  func.func @transform_8(%arg0: i32) -> (i32, i32, i32) {
    %c0_i32 = arith.constant 0 : i32
    %c0_i32_0 = arith.constant 0 : i32
    %c0_i32_1 = arith.constant 0 : i32
    %c0_i32_2 = arith.constant 0 : i32
    return %c0_i32, %c0_i32_0, %c0_i32_1 : i32, i32, i32
  }
  func.func @transform_9(%arg0: i32) -> (i32, i32) {
    %c0_i32 = arith.constant 0 : i32
    %c0_i32_0 = arith.constant 0 : i32
    %c0_i32_1 = arith.constant 0 : i32
    return %c0_i32, %c0_i32_0 : i32, i32
  }
  func.func @transform_10(%arg0: i32) -> (i32, i32) {
    %c0_i32 = arith.constant 0 : i32
    %c0_i32_0 = arith.constant 0 : i32
    %c0_i32_1 = arith.constant 0 : i32
    return %c0_i32, %c0_i32_0 : i32, i32
  }
  func.func @transform_11(%arg0: i32) -> (i32, i32) {
    %c0_i32 = arith.constant 0 : i32
    %c0_i32_0 = arith.constant 0 : i32
    %c0_i32_1 = arith.constant 0 : i32
    return %c0_i32, %c0_i32_0 : i32, i32
  }
  func.func @transform_12(%arg0: i32) -> (i32, i32, i32) {
    %c0_i32 = arith.constant 0 : i32
    %c0_i32_0 = arith.constant 0 : i32
    %c0_i32_1 = arith.constant 0 : i32
    return %arg0, %c0_i32, %c0_i32_0 : i32, i32, i32
  }
}

module attributes {stable_mosaic.version = 11 : i64} {
  func.func @kernel(%arg0: i32, %arg1: memref<1x3x16x96xbf16, #tpu.memory_space<vmem>>, %arg2: memref<3x96x128xbf16, #tpu.memory_space<vmem>>, %arg3: memref<1x128xf32, #tpu.memory_space<vmem>>, %arg4: memref<2x128x64xbf16, #tpu.memory_space<vmem>>, %arg5: memref<1x64xf32, #tpu.memory_space<vmem>>, %arg6: memref<2x64x128xbf16, #tpu.memory_space<vmem>>, %arg7: memref<1x128xf32, #tpu.memory_space<vmem>>, %arg8: memref<3x128x64xbf16, #tpu.memory_space<vmem>>, %arg9: memref<3x128x64xbf16, #tpu.memory_space<vmem>>, %arg10: memref<1x64xf32, #tpu.memory_space<vmem>>, %arg11: memref<64x128xbf16, #tpu.memory_space<vmem>>, %arg12: memref<1x128xf32, #tpu.memory_space<vmem>>, %arg13: memref<1x8x128xf32, #tpu.memory_space<vmem>>, %arg14: memref<17x136xf32, #tpu.memory_space<vmem>>, %arg15: memref<17x64xf32, #tpu.memory_space<vmem>>, %arg16: memref<17x128xf32, #tpu.memory_space<vmem>>, %arg17: memref<17x128xf32, #tpu.memory_space<vmem>>) attributes {dimension_semantics = [#tpu.dimension_semantics<parallel>], iteration_bounds = array<i64: 2>, scalar_prefetch = 0 : i64, scratch_operands = 4 : i64, tpu.core_type = #tpu.core_type<tc>, window_params = [{transform_indices = @transform_0, window_bounds = array<i64: 1, 3, 16, 96>}, {pipeline_mode = #tpu.pipeline_mode<synchronous>, transform_indices = @transform_1, window_bounds = array<i64: 3, 96, 128>}, {pipeline_mode = #tpu.pipeline_mode<synchronous>, transform_indices = @transform_2, window_bounds = array<i64: 1, 128>}, {pipeline_mode = #tpu.pipeline_mode<synchronous>, transform_indices = @transform_3, window_bounds = array<i64: 2, 128, 64>}, {pipeline_mode = #tpu.pipeline_mode<synchronous>, transform_indices = @transform_4, window_bounds = array<i64: 1, 64>}, {pipeline_mode = #tpu.pipeline_mode<synchronous>, transform_indices = @transform_5, window_bounds = array<i64: 2, 64, 128>}, {pipeline_mode = #tpu.pipeline_mode<synchronous>, transform_indices = @transform_6, window_bounds = array<i64: 1, 128>}, {pipeline_mode = #tpu.pipeline_mode<synchronous>, transform_indices = @transform_7, window_bounds = array<i64: 3, 128, 64>}, {pipeline_mode = #tpu.pipeline_mode<synchronous>, transform_indices = @transform_8, window_bounds = array<i64: 3, 128, 64>}, {pipeline_mode = #tpu.pipeline_mode<synchronous>, transform_indices = @transform_9, window_bounds = array<i64: 1, 64>}, {pipeline_mode = #tpu.pipeline_mode<synchronous>, transform_indices = @transform_10, window_bounds = array<i64: 64, 128>}, {pipeline_mode = #tpu.pipeline_mode<synchronous>, transform_indices = @transform_11, window_bounds = array<i64: 1, 128>}, {transform_indices = @transform_12, window_bounds = array<i64: 1, 8, 128>}]} {
    %cst = arith.constant 0.000000e+00 : f32
    %0 = vector.broadcast %cst : f32 to vector<1x136xf32>
    %c16 = arith.constant 16 : index
    %c0 = arith.constant 0 : index
    %1 = vector.load %arg14[%c16, %c0] : memref<17x136xf32, #tpu.memory_space<vmem>>, vector<1x136xf32>
    tpu.vector_store %arg14[%c16, %c0], %0 {strides = array<i32>} : memref<17x136xf32, #tpu.memory_space<vmem>>, vector<1x136xf32>,
    %cst_0 = arith.constant 0.000000e+00 : f32
    %2 = vector.broadcast %cst_0 : f32 to vector<17x8xf32>
    %c0_1 = arith.constant 0 : index
    %c128 = arith.constant 128 : index
    %3 = vector.load %arg14[%c0_1, %c128] : memref<17x136xf32, #tpu.memory_space<vmem>>, vector<17x8xf32>
    tpu.vector_store %arg14[%c0_1, %c128], %2 {strides = array<i32>} : memref<17x136xf32, #tpu.memory_space<vmem>>, vector<17x8xf32>,
    %cst_2 = arith.constant 0.000000e+00 : f32
    %4 = vector.broadcast %cst_2 : f32 to vector<1x64xf32>
    %c16_3 = arith.constant 16 : index
    %c0_4 = arith.constant 0 : index
    %5 = vector.load %arg15[%c16_3, %c0_4] : memref<17x64xf32, #tpu.memory_space<vmem>>, vector<1x64xf32>
    tpu.vector_store %arg15[%c16_3, %c0_4], %4 {strides = array<i32>} : memref<17x64xf32, #tpu.memory_space<vmem>>, vector<1x64xf32>,
    %cst_5 = arith.constant 0.000000e+00 : f32
    %6 = vector.broadcast %cst_5 : f32 to vector<1x128xf32>
    %c0_6 = arith.constant 0 : index
    %c0_7 = arith.constant 0 : index
    %7 = vector.load %arg16[%c0_6, %c0_7] : memref<17x128xf32, #tpu.memory_space<vmem>>, vector<1x128xf32>
    tpu.vector_store %arg16[%c0_6, %c0_7], %6 {strides = array<i32>} : memref<17x128xf32, #tpu.memory_space<vmem>>, vector<1x128xf32>,
    %cst_8 = arith.constant 0.000000e+00 : f32
    %8 = vector.broadcast %cst_8 : f32 to vector<1x128xf32>
    %c0_9 = arith.constant 0 : index
    %c0_10 = arith.constant 0 : index
    %9 = vector.load %arg17[%c0_9, %c0_10] : memref<17x128xf32, #tpu.memory_space<vmem>>, vector<1x128xf32>
    tpu.vector_store %arg17[%c0_9, %c0_10], %8 {strides = array<i32>} : memref<17x128xf32, #tpu.memory_space<vmem>>, vector<1x128xf32>,
    %c0_11 = arith.constant 0 : index
    %c0_12 = arith.constant 0 : index
    %10 = vector.load %arg3[%c0_11, %c0_12] : memref<1x128xf32, #tpu.memory_space<vmem>>, vector<1x128xf32>
    %11 = vector.shape_cast %10 : vector<1x128xf32> to vector<1x128xf32>
    %12 = vector.broadcast %11 : vector<1x128xf32> to vector<16x128xf32>
    %c0_13 = arith.constant 0 : index
    %c0_14 = arith.constant 0 : index
    %c0_15 = arith.constant 0 : index
    %c0_16 = arith.constant 0 : index
    %13 = vector.load %arg1[%c0_13, %c0_14, %c0_15, %c0_16] : memref<1x3x16x96xbf16, #tpu.memory_space<vmem>>, vector<1x1x16x96xbf16>
    %14 = vector.shape_cast %13 : vector<1x1x16x96xbf16> to vector<16x96xbf16>
    %c0_17 = arith.constant 0 : index
    %c0_18 = arith.constant 0 : index
    %c0_19 = arith.constant 0 : index
    %15 = vector.load %arg2[%c0_17, %c0_18, %c0_19] : memref<3x96x128xbf16, #tpu.memory_space<vmem>>, vector<1x96x128xbf16>
    %16 = vector.shape_cast %15 : vector<1x96x128xbf16> to vector<96x128xbf16>
    %cst_20 = arith.constant dense<0.000000e+00> : vector<16x128xf32>
    %17 = tpu.matmul %14, %16, %cst_20 {dimension_numbers = #tpu.dot_dimension_numbers<[1], [0], [0], [1], [0, 0, 1, 1], [], []>} : vector<16x96xbf16>, vector<96x128xbf16>, vector<16x128xf32> -> vector<16x128xf32>
    %18 = arith.addf %12, %17 : vector<16x128xf32>
    %c0_21 = arith.constant 0 : index
    %c1 = arith.constant 1 : index
    %c0_22 = arith.constant 0 : index
    %c0_23 = arith.constant 0 : index
    %19 = vector.load %arg1[%c0_21, %c1, %c0_22, %c0_23] : memref<1x3x16x96xbf16, #tpu.memory_space<vmem>>, vector<1x1x16x96xbf16>
    %20 = vector.shape_cast %19 : vector<1x1x16x96xbf16> to vector<16x96xbf16>
    %c1_24 = arith.constant 1 : index
    %c0_25 = arith.constant 0 : index
    %c0_26 = arith.constant 0 : index
    %21 = vector.load %arg2[%c1_24, %c0_25, %c0_26] : memref<3x96x128xbf16, #tpu.memory_space<vmem>>, vector<1x96x128xbf16>
    %22 = vector.shape_cast %21 : vector<1x96x128xbf16> to vector<96x128xbf16>
    %cst_27 = arith.constant dense<0.000000e+00> : vector<16x128xf32>
    %23 = tpu.matmul %20, %22, %cst_27 {dimension_numbers = #tpu.dot_dimension_numbers<[1], [0], [0], [1], [0, 0, 1, 1], [], []>} : vector<16x96xbf16>, vector<96x128xbf16>, vector<16x128xf32> -> vector<16x128xf32>
    %24 = arith.addf %18, %23 : vector<16x128xf32>
    %c0_28 = arith.constant 0 : index
    %c2 = arith.constant 2 : index
    %c0_29 = arith.constant 0 : index
    %c0_30 = arith.constant 0 : index
    %25 = vector.load %arg1[%c0_28, %c2, %c0_29, %c0_30] : memref<1x3x16x96xbf16, #tpu.memory_space<vmem>>, vector<1x1x16x96xbf16>
    %26 = vector.shape_cast %25 : vector<1x1x16x96xbf16> to vector<16x96xbf16>
    %c2_31 = arith.constant 2 : index
    %c0_32 = arith.constant 0 : index
    %c0_33 = arith.constant 0 : index
    %27 = vector.load %arg2[%c2_31, %c0_32, %c0_33] : memref<3x96x128xbf16, #tpu.memory_space<vmem>>, vector<1x96x128xbf16>
    %28 = vector.shape_cast %27 : vector<1x96x128xbf16> to vector<96x128xbf16>
    %cst_34 = arith.constant dense<0.000000e+00> : vector<16x128xf32>
    %29 = tpu.matmul %26, %28, %cst_34 {dimension_numbers = #tpu.dot_dimension_numbers<[1], [0], [0], [1], [0, 0, 1, 1], [], []>} : vector<16x96xbf16>, vector<96x128xbf16>, vector<16x128xf32> -> vector<16x128xf32>
    %30 = arith.addf %24, %29 : vector<16x128xf32>
    %cst_35 = arith.constant 0.000000e+00 : f32
    %31 = vector.broadcast %cst_35 : f32 to vector<16x128xf32>
    %32 = arith.maximumf %30, %31 : vector<16x128xf32>
    %c0_36 = arith.constant 0 : index
    %c0_37 = arith.constant 0 : index
    %33 = vector.load %arg14[%c0_36, %c0_37] : memref<17x136xf32, #tpu.memory_space<vmem>>, vector<16x128xf32>
    tpu.vector_store %arg14[%c0_36, %c0_37], %32 {strides = array<i32>} : memref<17x136xf32, #tpu.memory_space<vmem>>, vector<16x128xf32>,
    %c0_38 = arith.constant 0 : index
    %c0_39 = arith.constant 0 : index
    %34 = vector.load %arg5[%c0_38, %c0_39] : memref<1x64xf32, #tpu.memory_space<vmem>>, vector<1x64xf32>
    %35 = vector.shape_cast %34 : vector<1x64xf32> to vector<1x64xf32>
    %36 = vector.broadcast %35 : vector<1x64xf32> to vector<16x64xf32>
    %c0_40 = arith.constant 0 : index
    %c0_41 = arith.constant 0 : index
    %37 = vector.load %arg14[%c0_40, %c0_41] : memref<17x136xf32, #tpu.memory_space<vmem>>, vector<16x128xf32>
    %38 = arith.truncf %37 : vector<16x128xf32> to vector<16x128xbf16>
    %c0_42 = arith.constant 0 : index
    %c0_43 = arith.constant 0 : index
    %c0_44 = arith.constant 0 : index
    %39 = vector.load %arg4[%c0_42, %c0_43, %c0_44] : memref<2x128x64xbf16, #tpu.memory_space<vmem>>, vector<1x128x64xbf16>
    %40 = vector.shape_cast %39 : vector<1x128x64xbf16> to vector<128x64xbf16>
    %cst_45 = arith.constant dense<0.000000e+00> : vector<16x64xf32>
    %41 = tpu.matmul %38, %40, %cst_45 {dimension_numbers = #tpu.dot_dimension_numbers<[1], [0], [0], [1], [0, 0, 1, 1], [], []>} : vector<16x128xbf16>, vector<128x64xbf16>, vector<16x64xf32> -> vector<16x64xf32>
    %42 = arith.addf %36, %41 : vector<16x64xf32>
    %c1_46 = arith.constant 1 : index
    %c0_47 = arith.constant 0 : index
    %43 = vector.load %arg14[%c1_46, %c0_47] : memref<17x136xf32, #tpu.memory_space<vmem>>, vector<16x128xf32>
    %44 = arith.truncf %43 : vector<16x128xf32> to vector<16x128xbf16>
    %c1_48 = arith.constant 1 : index
    %c0_49 = arith.constant 0 : index
    %c0_50 = arith.constant 0 : index
    %45 = vector.load %arg4[%c1_48, %c0_49, %c0_50] : memref<2x128x64xbf16, #tpu.memory_space<vmem>>, vector<1x128x64xbf16>
    %46 = vector.shape_cast %45 : vector<1x128x64xbf16> to vector<128x64xbf16>
    %cst_51 = arith.constant dense<0.000000e+00> : vector<16x64xf32>
    %47 = tpu.matmul %44, %46, %cst_51 {dimension_numbers = #tpu.dot_dimension_numbers<[1], [0], [0], [1], [0, 0, 1, 1], [], []>} : vector<16x128xbf16>, vector<128x64xbf16>, vector<16x64xf32> -> vector<16x64xf32>
    %48 = arith.addf %42, %47 : vector<16x64xf32>
    %cst_52 = arith.constant 0.000000e+00 : f32
    %49 = vector.broadcast %cst_52 : f32 to vector<16x64xf32>
    %50 = arith.maximumf %48, %49 : vector<16x64xf32>
    %c0_53 = arith.constant 0 : index
    %c0_54 = arith.constant 0 : index
    %51 = vector.load %arg15[%c0_53, %c0_54] : memref<17x64xf32, #tpu.memory_space<vmem>>, vector<16x64xf32>
    tpu.vector_store %arg15[%c0_53, %c0_54], %50 {strides = array<i32>} : memref<17x64xf32, #tpu.memory_space<vmem>>, vector<16x64xf32>,
    %c0_55 = arith.constant 0 : index
    %c0_56 = arith.constant 0 : index
    %52 = vector.load %arg7[%c0_55, %c0_56] : memref<1x128xf32, #tpu.memory_space<vmem>>, vector<1x128xf32>
    %53 = vector.shape_cast %52 : vector<1x128xf32> to vector<1x128xf32>
    %54 = vector.broadcast %53 : vector<1x128xf32> to vector<16x128xf32>
    %c0_57 = arith.constant 0 : index
    %c0_58 = arith.constant 0 : index
    %55 = vector.load %arg15[%c0_57, %c0_58] : memref<17x64xf32, #tpu.memory_space<vmem>>, vector<16x64xf32>
    %56 = arith.truncf %55 : vector<16x64xf32> to vector<16x64xbf16>
    %c0_59 = arith.constant 0 : index
    %c0_60 = arith.constant 0 : index
    %c0_61 = arith.constant 0 : index
    %57 = vector.load %arg6[%c0_59, %c0_60, %c0_61] : memref<2x64x128xbf16, #tpu.memory_space<vmem>>, vector<1x64x128xbf16>
    %58 = vector.shape_cast %57 : vector<1x64x128xbf16> to vector<64x128xbf16>
    %cst_62 = arith.constant dense<0.000000e+00> : vector<16x128xf32>
    %59 = tpu.matmul %56, %58, %cst_62 {dimension_numbers = #tpu.dot_dimension_numbers<[1], [0], [0], [1], [0, 0, 1, 1], [], []>} : vector<16x64xbf16>, vector<64x128xbf16>, vector<16x128xf32> -> vector<16x128xf32>
    %60 = arith.addf %54, %59 : vector<16x128xf32>
    %c1_63 = arith.constant 1 : index
    %c0_64 = arith.constant 0 : index
    %61 = vector.load %arg15[%c1_63, %c0_64] : memref<17x64xf32, #tpu.memory_space<vmem>>, vector<16x64xf32>
    %62 = arith.truncf %61 : vector<16x64xf32> to vector<16x64xbf16>
    %c1_65 = arith.constant 1 : index
    %c0_66 = arith.constant 0 : index
    %c0_67 = arith.constant 0 : index
    %63 = vector.load %arg6[%c1_65, %c0_66, %c0_67] : memref<2x64x128xbf16, #tpu.memory_space<vmem>>, vector<1x64x128xbf16>
    %64 = vector.shape_cast %63 : vector<1x64x128xbf16> to vector<64x128xbf16>
    %cst_68 = arith.constant dense<0.000000e+00> : vector<16x128xf32>
    %65 = tpu.matmul %62, %64, %cst_68 {dimension_numbers = #tpu.dot_dimension_numbers<[1], [0], [0], [1], [0, 0, 1, 1], [], []>} : vector<16x64xbf16>, vector<64x128xbf16>, vector<16x128xf32> -> vector<16x128xf32>
    %66 = arith.addf %60, %65 : vector<16x128xf32>
    %cst_69 = arith.constant 0.000000e+00 : f32
    %67 = vector.broadcast %cst_69 : f32 to vector<16x128xf32>
    %68 = arith.maximumf %66, %67 : vector<16x128xf32>
    %c1_70 = arith.constant 1 : index
    %c0_71 = arith.constant 0 : index
    %69 = vector.load %arg17[%c1_70, %c0_71] : memref<17x128xf32, #tpu.memory_space<vmem>>, vector<16x128xf32>
    tpu.vector_store %arg17[%c1_70, %c0_71], %68 {strides = array<i32>} : memref<17x128xf32, #tpu.memory_space<vmem>>, vector<16x128xf32>,
    %c0_72 = arith.constant 0 : index
    %c0_73 = arith.constant 0 : index
    %70 = vector.load %arg14[%c0_72, %c0_73] : memref<17x136xf32, #tpu.memory_space<vmem>>, vector<16x128xf32>
    %c0_74 = arith.constant 0 : index
    %c8 = arith.constant 8 : index
    %71 = vector.load %arg14[%c0_74, %c8] : memref<17x136xf32, #tpu.memory_space<vmem>>, vector<16x128xf32>
    %72 = arith.maximumf %70, %71 : vector<16x128xf32>
    %c1_75 = arith.constant 1 : index
    %c0_76 = arith.constant 0 : index
    %73 = vector.load %arg14[%c1_75, %c0_76] : memref<17x136xf32, #tpu.memory_space<vmem>>, vector<16x128xf32>
    %c1_77 = arith.constant 1 : index
    %c8_78 = arith.constant 8 : index
    %74 = vector.load %arg14[%c1_77, %c8_78] : memref<17x136xf32, #tpu.memory_space<vmem>>, vector<16x128xf32>
    %75 = arith.maximumf %73, %74 : vector<16x128xf32>
    %76 = arith.maximumf %72, %75 : vector<16x128xf32>
    %c1_79 = arith.constant 1 : index
    %c0_80 = arith.constant 0 : index
    %77 = vector.load %arg16[%c1_79, %c0_80] : memref<17x128xf32, #tpu.memory_space<vmem>>, vector<16x128xf32>
    tpu.vector_store %arg16[%c1_79, %c0_80], %76 {strides = array<i32>} : memref<17x128xf32, #tpu.memory_space<vmem>>, vector<16x128xf32>,
    %c0_81 = arith.constant 0 : index
    %c0_82 = arith.constant 0 : index
    %78 = vector.load %arg10[%c0_81, %c0_82] : memref<1x64xf32, #tpu.memory_space<vmem>>, vector<1x64xf32>
    %79 = vector.shape_cast %78 : vector<1x64xf32> to vector<1x64xf32>
    %80 = vector.broadcast %79 : vector<1x64xf32> to vector<8x64xf32>
    %c0_83 = arith.constant 0 : index
    %c0_84 = arith.constant 0 : index
    %81 = tpu.strided_load %arg16[%c0_83, %c0_84] {strides = array<i32: 2, 1>} : memref<17x128xf32, #tpu.memory_space<vmem>>, vector<8x128xf32>
    %82 = arith.truncf %81 : vector<8x128xf32> to vector<8x128xbf16>
    %c0_85 = arith.constant 0 : index
    %c0_86 = arith.constant 0 : index
    %c0_87 = arith.constant 0 : index
    %83 = vector.load %arg8[%c0_85, %c0_86, %c0_87] : memref<3x128x64xbf16, #tpu.memory_space<vmem>>, vector<1x128x64xbf16>
    %84 = vector.shape_cast %83 : vector<1x128x64xbf16> to vector<128x64xbf16>
    %cst_88 = arith.constant dense<0.000000e+00> : vector<8x64xf32>
    %85 = tpu.matmul %82, %84, %cst_88 {dimension_numbers = #tpu.dot_dimension_numbers<[1], [0], [0], [1], [0, 0, 1, 1], [], []>} : vector<8x128xbf16>, vector<128x64xbf16>, vector<8x64xf32> -> vector<8x64xf32>
    %86 = arith.addf %80, %85 : vector<8x64xf32>
    %c0_89 = arith.constant 0 : index
    %c0_90 = arith.constant 0 : index
    %87 = tpu.strided_load %arg17[%c0_89, %c0_90] {strides = array<i32: 2, 1>} : memref<17x128xf32, #tpu.memory_space<vmem>>, vector<8x128xf32>
    %88 = arith.truncf %87 : vector<8x128xf32> to vector<8x128xbf16>
    %c0_91 = arith.constant 0 : index
    %c0_92 = arith.constant 0 : index
    %c0_93 = arith.constant 0 : index
    %89 = vector.load %arg9[%c0_91, %c0_92, %c0_93] : memref<3x128x64xbf16, #tpu.memory_space<vmem>>, vector<1x128x64xbf16>
    %90 = vector.shape_cast %89 : vector<1x128x64xbf16> to vector<128x64xbf16>
    %cst_94 = arith.constant dense<0.000000e+00> : vector<8x64xf32>
    %91 = tpu.matmul %88, %90, %cst_94 {dimension_numbers = #tpu.dot_dimension_numbers<[1], [0], [0], [1], [0, 0, 1, 1], [], []>} : vector<8x128xbf16>, vector<128x64xbf16>, vector<8x64xf32> -> vector<8x64xf32>
    %92 = arith.addf %86, %91 : vector<8x64xf32>
    %c1_95 = arith.constant 1 : index
    %c0_96 = arith.constant 0 : index
    %93 = tpu.strided_load %arg16[%c1_95, %c0_96] {strides = array<i32: 2, 1>} : memref<17x128xf32, #tpu.memory_space<vmem>>, vector<8x128xf32>
    %94 = arith.truncf %93 : vector<8x128xf32> to vector<8x128xbf16>
    %c1_97 = arith.constant 1 : index
    %c0_98 = arith.constant 0 : index
    %c0_99 = arith.constant 0 : index
    %95 = vector.load %arg8[%c1_97, %c0_98, %c0_99] : memref<3x128x64xbf16, #tpu.memory_space<vmem>>, vector<1x128x64xbf16>
    %96 = vector.shape_cast %95 : vector<1x128x64xbf16> to vector<128x64xbf16>
    %cst_100 = arith.constant dense<0.000000e+00> : vector<8x64xf32>
    %97 = tpu.matmul %94, %96, %cst_100 {dimension_numbers = #tpu.dot_dimension_numbers<[1], [0], [0], [1], [0, 0, 1, 1], [], []>} : vector<8x128xbf16>, vector<128x64xbf16>, vector<8x64xf32> -> vector<8x64xf32>
    %98 = arith.addf %92, %97 : vector<8x64xf32>
    %c1_101 = arith.constant 1 : index
    %c0_102 = arith.constant 0 : index
    %99 = tpu.strided_load %arg17[%c1_101, %c0_102] {strides = array<i32: 2, 1>} : memref<17x128xf32, #tpu.memory_space<vmem>>, vector<8x128xf32>
    %100 = arith.truncf %99 : vector<8x128xf32> to vector<8x128xbf16>
    %c1_103 = arith.constant 1 : index
    %c0_104 = arith.constant 0 : index
    %c0_105 = arith.constant 0 : index
    %101 = vector.load %arg9[%c1_103, %c0_104, %c0_105] : memref<3x128x64xbf16, #tpu.memory_space<vmem>>, vector<1x128x64xbf16>
    %102 = vector.shape_cast %101 : vector<1x128x64xbf16> to vector<128x64xbf16>
    %cst_106 = arith.constant dense<0.000000e+00> : vector<8x64xf32>
    %103 = tpu.matmul %100, %102, %cst_106 {dimension_numbers = #tpu.dot_dimension_numbers<[1], [0], [0], [1], [0, 0, 1, 1], [], []>} : vector<8x128xbf16>, vector<128x64xbf16>, vector<8x64xf32> -> vector<8x64xf32>
    %104 = arith.addf %98, %103 : vector<8x64xf32>
    %c2_107 = arith.constant 2 : index
    %c0_108 = arith.constant 0 : index
    %105 = tpu.strided_load %arg16[%c2_107, %c0_108] {strides = array<i32: 2, 1>} : memref<17x128xf32, #tpu.memory_space<vmem>>, vector<8x128xf32>
    %106 = arith.truncf %105 : vector<8x128xf32> to vector<8x128xbf16>
    %c2_109 = arith.constant 2 : index
    %c0_110 = arith.constant 0 : index
    %c0_111 = arith.constant 0 : index
    %107 = vector.load %arg8[%c2_109, %c0_110, %c0_111] : memref<3x128x64xbf16, #tpu.memory_space<vmem>>, vector<1x128x64xbf16>
    %108 = vector.shape_cast %107 : vector<1x128x64xbf16> to vector<128x64xbf16>
    %cst_112 = arith.constant dense<0.000000e+00> : vector<8x64xf32>
    %109 = tpu.matmul %106, %108, %cst_112 {dimension_numbers = #tpu.dot_dimension_numbers<[1], [0], [0], [1], [0, 0, 1, 1], [], []>} : vector<8x128xbf16>, vector<128x64xbf16>, vector<8x64xf32> -> vector<8x64xf32>
    %110 = arith.addf %104, %109 : vector<8x64xf32>
    %c2_113 = arith.constant 2 : index
    %c0_114 = arith.constant 0 : index
    %111 = tpu.strided_load %arg17[%c2_113, %c0_114] {strides = array<i32: 2, 1>} : memref<17x128xf32, #tpu.memory_space<vmem>>, vector<8x128xf32>
    %112 = arith.truncf %111 : vector<8x128xf32> to vector<8x128xbf16>
    %c2_115 = arith.constant 2 : index
    %c0_116 = arith.constant 0 : index
    %c0_117 = arith.constant 0 : index
    %113 = vector.load %arg9[%c2_115, %c0_116, %c0_117] : memref<3x128x64xbf16, #tpu.memory_space<vmem>>, vector<1x128x64xbf16>
    %114 = vector.shape_cast %113 : vector<1x128x64xbf16> to vector<128x64xbf16>
    %cst_118 = arith.constant dense<0.000000e+00> : vector<8x64xf32>
    %115 = tpu.matmul %112, %114, %cst_118 {dimension_numbers = #tpu.dot_dimension_numbers<[1], [0], [0], [1], [0, 0, 1, 1], [], []>} : vector<8x128xbf16>, vector<128x64xbf16>, vector<8x64xf32> -> vector<8x64xf32>
    %116 = arith.addf %110, %115 : vector<8x64xf32>
    %cst_119 = arith.constant 0.000000e+00 : f32
    %117 = vector.broadcast %cst_119 : f32 to vector<8x64xf32>
    %118 = arith.maximumf %116, %117 : vector<8x64xf32>
    %119 = arith.truncf %118 : vector<8x64xf32> to vector<8x64xbf16>
    %c0_120 = arith.constant 0 : index
    %c0_121 = arith.constant 0 : index
    %120 = vector.load %arg11[%c0_120, %c0_121] : memref<64x128xbf16, #tpu.memory_space<vmem>>, vector<64x128xbf16>
    %cst_122 = arith.constant dense<0.000000e+00> : vector<8x128xf32>
    %121 = tpu.matmul %119, %120, %cst_122 {dimension_numbers = #tpu.dot_dimension_numbers<[1], [0], [0], [1], [0, 0, 1, 1], [], []>} : vector<8x64xbf16>, vector<64x128xbf16>, vector<8x128xf32> -> vector<8x128xf32>
    %c0_123 = arith.constant 0 : index
    %c0_124 = arith.constant 0 : index
    %122 = vector.load %arg12[%c0_123, %c0_124] : memref<1x128xf32, #tpu.memory_space<vmem>>, vector<1x128xf32>
    %123 = vector.broadcast %122 : vector<1x128xf32> to vector<8x128xf32>
    %124 = arith.addf %121, %123 : vector<8x128xf32>
    %cst_125 = arith.constant 0.000000e+00 : f32
    %125 = vector.broadcast %cst_125 : f32 to vector<8x128xf32>
    %126 = arith.maximumf %124, %125 : vector<8x128xf32>
    %c0_126 = arith.constant 0 : index
    %c0_127 = arith.constant 0 : index
    %c0_128 = arith.constant 0 : index
    %127 = vector.load %arg13[%c0_126, %c0_127, %c0_128] : memref<1x8x128xf32, #tpu.memory_space<vmem>>, vector<1x8x128xf32>
    %128 = vector.shape_cast %127 : vector<1x8x128xf32> to vector<8x128xf32>
    %129 = vector.shape_cast %126 : vector<8x128xf32> to vector<1x8x128xf32>
    tpu.vector_store %arg13[%c0_126, %c0_127, %c0_128], %129 {strides = array<i32>} : memref<1x8x128xf32, #tpu.memory_space<vmem>>, vector<1x8x128xf32>,
    return
  }
  func.func @transform_0(%arg0: i32) -> (i32, i32, i32, i32) {
    %c0_i32 = arith.constant 0 : i32
    %c0_i32_0 = arith.constant 0 : i32
    %c0_i32_1 = arith.constant 0 : i32
    %c0_i32_2 = arith.constant 0 : i32
    return %arg0, %c0_i32, %c0_i32_0, %c0_i32_1 : i32, i32, i32, i32
  }
  func.func @transform_1(%arg0: i32) -> (i32, i32, i32) {
    %c0_i32 = arith.constant 0 : i32
    %c0_i32_0 = arith.constant 0 : i32
    %c0_i32_1 = arith.constant 0 : i32
    %c0_i32_2 = arith.constant 0 : i32
    return %c0_i32, %c0_i32_0, %c0_i32_1 : i32, i32, i32
  }
  func.func @transform_2(%arg0: i32) -> (i32, i32) {
    %c0_i32 = arith.constant 0 : i32
    %c0_i32_0 = arith.constant 0 : i32
    %c0_i32_1 = arith.constant 0 : i32
    return %c0_i32, %c0_i32_0 : i32, i32
  }
  func.func @transform_3(%arg0: i32) -> (i32, i32, i32) {
    %c0_i32 = arith.constant 0 : i32
    %c0_i32_0 = arith.constant 0 : i32
    %c0_i32_1 = arith.constant 0 : i32
    %c0_i32_2 = arith.constant 0 : i32
    return %c0_i32, %c0_i32_0, %c0_i32_1 : i32, i32, i32
  }
  func.func @transform_4(%arg0: i32) -> (i32, i32) {
    %c0_i32 = arith.constant 0 : i32
    %c0_i32_0 = arith.constant 0 : i32
    %c0_i32_1 = arith.constant 0 : i32
    return %c0_i32, %c0_i32_0 : i32, i32
  }
  func.func @transform_5(%arg0: i32) -> (i32, i32, i32) {
    %c0_i32 = arith.constant 0 : i32
    %c0_i32_0 = arith.constant 0 : i32
    %c0_i32_1 = arith.constant 0 : i32
    %c0_i32_2 = arith.constant 0 : i32
    return %c0_i32, %c0_i32_0, %c0_i32_1 : i32, i32, i32
  }
  func.func @transform_6(%arg0: i32) -> (i32, i32) {
    %c0_i32 = arith.constant 0 : i32
    %c0_i32_0 = arith.constant 0 : i32
    %c0_i32_1 = arith.constant 0 : i32
    return %c0_i32, %c0_i32_0 : i32, i32
  }
  func.func @transform_7(%arg0: i32) -> (i32, i32, i32) {
    %c0_i32 = arith.constant 0 : i32
    %c0_i32_0 = arith.constant 0 : i32
    %c0_i32_1 = arith.constant 0 : i32
    %c0_i32_2 = arith.constant 0 : i32
    return %c0_i32, %c0_i32_0, %c0_i32_1 : i32, i32, i32
  }
  func.func @transform_8(%arg0: i32) -> (i32, i32, i32) {
    %c0_i32 = arith.constant 0 : i32
    %c0_i32_0 = arith.constant 0 : i32
    %c0_i32_1 = arith.constant 0 : i32
    %c0_i32_2 = arith.constant 0 : i32
    return %c0_i32, %c0_i32_0, %c0_i32_1 : i32, i32, i32
  }
  func.func @transform_9(%arg0: i32) -> (i32, i32) {
    %c0_i32 = arith.constant 0 : i32
    %c0_i32_0 = arith.constant 0 : i32
    %c0_i32_1 = arith.constant 0 : i32
    return %c0_i32, %c0_i32_0 : i32, i32
  }
  func.func @transform_10(%arg0: i32) -> (i32, i32) {
    %c0_i32 = arith.constant 0 : i32
    %c0_i32_0 = arith.constant 0 : i32
    %c0_i32_1 = arith.constant 0 : i32
    return %c0_i32, %c0_i32_0 : i32, i32
  }
  func.func @transform_11(%arg0: i32) -> (i32, i32) {
    %c0_i32 = arith.constant 0 : i32
    %c0_i32_0 = arith.constant 0 : i32
    %c0_i32_1 = arith.constant 0 : i32
    return %c0_i32, %c0_i32_0 : i32, i32
  }
  func.func @transform_12(%arg0: i32) -> (i32, i32, i32) {
    %c0_i32 = arith.constant 0 : i32
    %c0_i32_0 = arith.constant 0 : i32
    %c0_i32_1 = arith.constant 0 : i32
    return %arg0, %c0_i32, %c0_i32_0 : i32, i32, i32
  }
}

</mosaic_0001>

<llo_original>
// kernel: tpu_custom_call.1
$region0: #{tpu_custom_call.1}
  #allocation0 [shape = 'u32[]', space=smem, size = 0x4, offset = 0x4, fixed_abs, tag = 'smem constant byte address 0x4 - core index']
  #allocation1 [shape = 'u32[144,128]{1,0:T(1,128)}', space=vmem, size = 0x12000, scoped, tag = 'internal scratch']
  #allocation2 [shape = 'f32[17,136]{1,0:T(8,128)}', space=vmem, size = 0x6000, scoped, tag = 'scratch operand']
  #allocation3 [shape = 'f32[17,64]{1,0:T(8,128)}', space=vmem, size = 0x3000, scoped, tag = 'scratch operand']
  #allocation4 [shape = 'f32[17,128]{1,0:T(8,128)}', space=vmem, size = 0x3000, scoped, tag = 'scratch operand']
  #allocation5 [shape = 'f32[17,128]{1,0:T(8,128)}', space=vmem, size = 0x3000, scoped, tag = 'scratch operand']
  %s0 = inlined_call_operand.vmem [shape: bf16[2,3,16,96], index: 0, kind: input, shape index: {}]
  %s1 = inlined_call_operand.vmem [shape: bf16[3,96,128], index: 1, kind: input, shape index: {}]
  %s2 = inlined_call_operand.vmem [shape: f32[1,128], index: 2, kind: input, shape index: {}]
  %s3 = inlined_call_operand.vmem [shape: bf16[2,128,64], index: 3, kind: input, shape index: {}]
  %s4 = inlined_call_operand.vmem [shape: f32[1,64], index: 4, kind: input, shape index: {}]
  %s5 = inlined_call_operand.vmem [shape: bf16[2,64,128], index: 5, kind: input, shape index: {}]
  %s6 = inlined_call_operand.vmem [shape: f32[1,128], index: 6, kind: input, shape index: {}]
  %s7 = inlined_call_operand.vmem [shape: bf16[3,128,64], index: 7, kind: input, shape index: {}]
  %s8 = inlined_call_operand.vmem [shape: bf16[3,128,64], index: 8, kind: input, shape index: {}]
  %s9 = inlined_call_operand.vmem [shape: f32[1,64], index: 9, kind: input, shape index: {}]
  %s10 = inlined_call_operand.vmem [shape: bf16[64,128], index: 10, kind: input, shape index: {}]
  %s11 = inlined_call_operand.vmem [shape: f32[1,128], index: 11, kind: input, shape index: {}]
  %s12 = inlined_call_operand.hbm [shape: f32[2,8,128], index: 12, kind: output, shape index: {}]
  %s13 = sld [smem:[#allocation0]]
  $region81: #{tpu_custom_call.1} parent=0
    _
  %s15 = ssub.s32 1, %s13
  %s16 = scalar_select 0, %s15, %s13
  $region1: #{tpu_custom_call.1} parent=0
    #allocation6 [shape = 'u8[8192]{0}', space=vmem, size = 0x2000, scoped, tag = 'output window, operand 0']
    #allocation7 [shape = 's32[2]{0}', space=sflag, size = 0x8, scoped, tag = 'scoped memory for tpu_custom_call.1']
    %17 = vsyncpa [#allocation7], 0
    %s18 = scalar_lea.sflag [#allocation7], 1
    %19 = vsyncpa %s18, 0
    loop: start=0, step=1, limit=4
    $region2: #{tpu_custom_call.1} parent=1 // loop_pre_header
      _
    $region3: #{tpu_custom_call.1} parent=1 // loop_header
      %s21 = sphi 0, %s25
      %p22 = scmp.ge.s32.totalorder %s21, 4
      %s31 = sphi 0, %s33
      %s34 = sphi 0, %s31
      %s35 = sphi 0, %s34
      %s51 = sphi 0, %s35
      %s55 = sphi 0, %s55
      %s57 = sphi 0, %s55
      %s58 = sphi 0, %s57
      %s72 = sphi 0, %s58
      %s76 = sphi 0, %s76
      %s78 = sphi 0, %s76
      %s79 = sphi 0, %s78
      %s93 = sphi 0, %s79
      %s97 = sphi 0, %s97
      %s99 = sphi 0, %s97
      %s100 = sphi 0, %s99
      %s114 = sphi 0, %s100
      %s118 = sphi 0, %s118
      %s120 = sphi 0, %s118
      %s121 = sphi 0, %s120
      %s135 = sphi 0, %s121
      %s139 = sphi 0, %s139
      %s141 = sphi 0, %s139
      %s142 = sphi 0, %s141
      %s156 = sphi 0, %s142
      %s160 = sphi 0, %s160
      %s162 = sphi 0, %s160
      %s163 = sphi 0, %s162
      %s177 = sphi 0, %s163
      %s181 = sphi 0, %s181
      %s183 = sphi 0, %s181
      %s184 = sphi 0, %s183
      %s198 = sphi 0, %s184
      %s202 = sphi 0, %s202
      %s204 = sphi 0, %s202
      %s205 = sphi 0, %s204
      %s219 = sphi 0, %s205
      %s223 = sphi 0, %s223
      %s225 = sphi 0, %s223
      %s226 = sphi 0, %s225
      %s240 = sphi 0, %s226
      %s244 = sphi 0, %s244
      %s246 = sphi 0, %s244
      %s247 = sphi 0, %s246
      %s261 = sphi 0, %s247
      %s265 = sphi 0, %s265
      %s267 = sphi 0, %s265
      %s268 = sphi 0, %s267
      %s282 = sphi 0, %s268
      %s288 = sphi 0, %s290
      %s291 = sphi 0, %s288
      %s292 = sphi 0, %s291
      %s308 = sphi 0, %s292
    $region4: #{tpu_custom_call.1} parent=1 // loop_header_branch
      %24 = sbr.rel (%p22) target = $region8
    $region5: #{tpu_custom_call.1} parent=1 // loop_body
      %s26 = ssub.s32 %s21, 1
      %s27 = ssub.s32 %s21, 2
      %s28 = sadd.s32 %s21, 1
      %s29 = ssub.s32 %s21, %s28
      %p30 = scmp.eq.s32.totalorder %s29, 0
      %s32 = sadd.s32 %s31, 1
      %s33 = scalar_select %p30, %s31, %s32
      %p36 = pneg %p30
      %p37 = scmp.eq.s32.totalorder %s21, 1
      %p38 = por %p36, %p37
      %p39 = scmp.ne.s32.totalorder %s31, %s34
      %p40 = scmp.eq.s32.totalorder %s21, 0
      %p41 = por %p39, %p40
      %p42 = scmp.ne.s32.totalorder %s31, %s34
      %p43 = scmp.eq.s32.totalorder %s26, 1
      %p44 = por %p42, %p43
      %p45 = scmp.ne.s32.totalorder %s34, %s35
      %p46 = scmp.eq.s32.totalorder %s26, 0
      %p47 = por %p45, %p46
      %p48 = scmp.ne.s32.totalorder %s34, %s35
      %p49 = scmp.eq.s32.totalorder %s27, 1
      %p50 = por %p48, %p49
      %p52 = scmp.ne.s32.totalorder %s35, %s51
      %p53 = scmp.eq.s32.totalorder %s27, 0
      %p54 = por %p52, %p53
      %s56 = sadd.s32 %s55, 1
      %p59 = scmp.eq.s32.totalorder %s21, 1
      %p60 = scmp.ne.s32.totalorder %s55, %s57
      %p61 = scmp.eq.s32.totalorder %s21, 0
      %p62 = por %p60, %p61
      %p63 = scmp.ne.s32.totalorder %s55, %s57
      %p64 = scmp.eq.s32.totalorder %s26, 1
      %p65 = por %p63, %p64
      %p66 = scmp.ne.s32.totalorder %s57, %s58
      %p67 = scmp.eq.s32.totalorder %s26, 0
      %p68 = por %p66, %p67
      %p69 = scmp.ne.s32.totalorder %s57, %s58
      %p70 = scmp.eq.s32.totalorder %s27, 1
      %p71 = por %p69, %p70
      %p73 = scmp.ne.s32.totalorder %s58, %s72
      %p74 = scmp.eq.s32.totalorder %s27, 0
      %p75 = por %p73, %p74
      %s77 = sadd.s32 %s76, 1
      %p80 = scmp.eq.s32.totalorder %s21, 1
      %p81 = scmp.ne.s32.totalorder %s76, %s78
      %p82 = scmp.eq.s32.totalorder %s21, 0
      %p83 = por %p81, %p82
      %p84 = scmp.ne.s32.totalorder %s76, %s78
      %p85 = scmp.eq.s32.totalorder %s26, 1
      %p86 = por %p84, %p85
      %p87 = scmp.ne.s32.totalorder %s78, %s79
      %p88 = scmp.eq.s32.totalorder %s26, 0
      %p89 = por %p87, %p88
      %p90 = scmp.ne.s32.totalorder %s78, %s79
      %p91 = scmp.eq.s32.totalorder %s27, 1
      %p92 = por %p90, %p91
      %p94 = scmp.ne.s32.totalorder %s79, %s93
      %p95 = scmp.eq.s32.totalorder %s27, 0
      %p96 = por %p94, %p95
      %s98 = sadd.s32 %s97, 1
      %p101 = scmp.eq.s32.totalorder %s21, 1
      %p102 = scmp.ne.s32.totalorder %s97, %s99
      %p103 = scmp.eq.s32.totalorder %s21, 0
      %p104 = por %p102, %p103
      %p105 = scmp.ne.s32.totalorder %s97, %s99
      %p106 = scmp.eq.s32.totalorder %s26, 1
      %p107 = por %p105, %p106
      %p108 = scmp.ne.s32.totalorder %s99, %s100
      %p109 = scmp.eq.s32.totalorder %s26, 0
      %p110 = por %p108, %p109
      %p111 = scmp.ne.s32.totalorder %s99, %s100
      %p112 = scmp.eq.s32.totalorder %s27, 1
      %p113 = por %p111, %p112
      %p115 = scmp.ne.s32.totalorder %s100, %s114
      %p116 = scmp.eq.s32.totalorder %s27, 0
      %p117 = por %p115, %p116
      %s119 = sadd.s32 %s118, 1
      %p122 = scmp.eq.s32.totalorder %s21, 1
      %p123 = scmp.ne.s32.totalorder %s118, %s120
      %p124 = scmp.eq.s32.totalorder %s21, 0
      %p125 = por %p123, %p124
      %p126 = scmp.ne.s32.totalorder %s118, %s120
      %p127 = scmp.eq.s32.totalorder %s26, 1
      %p128 = por %p126, %p127
      %p129 = scmp.ne.s32.totalorder %s120, %s121
      %p130 = scmp.eq.s32.totalorder %s26, 0
      %p131 = por %p129, %p130
      %p132 = scmp.ne.s32.totalorder %s120, %s121
      %p133 = scmp.eq.s32.totalorder %s27, 1
      %p134 = por %p132, %p133
      %p136 = scmp.ne.s32.totalorder %s121, %s135
      %p137 = scmp.eq.s32.totalorder %s27, 0
      %p138 = por %p136, %p137
      %s140 = sadd.s32 %s139, 1
      %p143 = scmp.eq.s32.totalorder %s21, 1
      %p144 = scmp.ne.s32.totalorder %s139, %s141
      %p145 = scmp.eq.s32.totalorder %s21, 0
      %p146 = por %p144, %p145
      %p147 = scmp.ne.s32.totalorder %s139, %s141
      %p148 = scmp.eq.s32.totalorder %s26, 1
      %p149 = por %p147, %p148
      %p150 = scmp.ne.s32.totalorder %s141, %s142
      %p151 = scmp.eq.s32.totalorder %s26, 0
      %p152 = por %p150, %p151
      %p153 = scmp.ne.s32.totalorder %s141, %s142
      %p154 = scmp.eq.s32.totalorder %s27, 1
      %p155 = por %p153, %p154
      %p157 = scmp.ne.s32.totalorder %s142, %s156
      %p158 = scmp.eq.s32.totalorder %s27, 0
      %p159 = por %p157, %p158
      %s161 = sadd.s32 %s160, 1
      %p164 = scmp.eq.s32.totalorder %s21, 1
      %p165 = scmp.ne.s32.totalorder %s160, %s162
      %p166 = scmp.eq.s32.totalorder %s21, 0
      %p167 = por %p165, %p166
      %p168 = scmp.ne.s32.totalorder %s160, %s162
      %p169 = scmp.eq.s32.totalorder %s26, 1
      %p170 = por %p168, %p169
      %p171 = scmp.ne.s32.totalorder %s162, %s163
      %p172 = scmp.eq.s32.totalorder %s26, 0
      %p173 = por %p171, %p172
      %p174 = scmp.ne.s32.totalorder %s162, %s163
      %p175 = scmp.eq.s32.totalorder %s27, 1
      %p176 = por %p174, %p175
      %p178 = scmp.ne.s32.totalorder %s163, %s177
      %p179 = scmp.eq.s32.totalorder %s27, 0
      %p180 = por %p178, %p179
      %s182 = sadd.s32 %s181, 1
      %p185 = scmp.eq.s32.totalorder %s21, 1
      %p186 = scmp.ne.s32.totalorder %s181, %s183
      %p187 = scmp.eq.s32.totalorder %s21, 0
      %p188 = por %p186, %p187
      %p189 = scmp.ne.s32.totalorder %s181, %s183
      %p190 = scmp.eq.s32.totalorder %s26, 1
      %p191 = por %p189, %p190
      %p192 = scmp.ne.s32.totalorder %s183, %s184
      %p193 = scmp.eq.s32.totalorder %s26, 0
      %p194 = por %p192, %p193
      %p195 = scmp.ne.s32.totalorder %s183, %s184
      %p196 = scmp.eq.s32.totalorder %s27, 1
      %p197 = por %p195, %p196
      %p199 = scmp.ne.s32.totalorder %s184, %s198
      %p200 = scmp.eq.s32.totalorder %s27, 0
      %p201 = por %p199, %p200
      %s203 = sadd.s32 %s202, 1
      %p206 = scmp.eq.s32.totalorder %s21, 1
      %p207 = scmp.ne.s32.totalorder %s202, %s204
      %p208 = scmp.eq.s32.totalorder %s21, 0
      %p209 = por %p207, %p208
      %p210 = scmp.ne.s32.totalorder %s202, %s204
      %p211 = scmp.eq.s32.totalorder %s26, 1
      %p212 = por %p210, %p211
      %p213 = scmp.ne.s32.totalorder %s204, %s205
      %p214 = scmp.eq.s32.totalorder %s26, 0
      %p215 = por %p213, %p214
      %p216 = scmp.ne.s32.totalorder %s204, %s205
      %p217 = scmp.eq.s32.totalorder %s27, 1
      %p218 = por %p216, %p217
      %p220 = scmp.ne.s32.totalorder %s205, %s219
      %p221 = scmp.eq.s32.totalorder %s27, 0
      %p222 = por %p220, %p221
      %s224 = sadd.s32 %s223, 1
      %p227 = scmp.eq.s32.totalorder %s21, 1
      %p228 = scmp.ne.s32.totalorder %s223, %s225
      %p229 = scmp.eq.s32.totalorder %s21, 0
      %p230 = por %p228, %p229
      %p231 = scmp.ne.s32.totalorder %s223, %s225
      %p232 = scmp.eq.s32.totalorder %s26, 1
      %p233 = por %p231, %p232
      %p234 = scmp.ne.s32.totalorder %s225, %s226
      %p235 = scmp.eq.s32.totalorder %s26, 0
      %p236 = por %p234, %p235
      %p237 = scmp.ne.s32.totalorder %s225, %s226
      %p238 = scmp.eq.s32.totalorder %s27, 1
      %p239 = por %p237, %p238
      %p241 = scmp.ne.s32.totalorder %s226, %s240
      %p242 = scmp.eq.s32.totalorder %s27, 0
      %p243 = por %p241, %p242
      %s245 = sadd.s32 %s244, 1
      %p248 = scmp.eq.s32.totalorder %s21, 1
      %p249 = scmp.ne.s32.totalorder %s244, %s246
      %p250 = scmp.eq.s32.totalorder %s21, 0
      %p251 = por %p249, %p250
      %p252 = scmp.ne.s32.totalorder %s244, %s246
      %p253 = scmp.eq.s32.totalorder %s26, 1
      %p254 = por %p252, %p253
      %p255 = scmp.ne.s32.totalorder %s246, %s247
      %p256 = scmp.eq.s32.totalorder %s26, 0
      %p257 = por %p255, %p256
      %p258 = scmp.ne.s32.totalorder %s246, %s247
      %p259 = scmp.eq.s32.totalorder %s27, 1
      %p260 = por %p258, %p259
      %p262 = scmp.ne.s32.totalorder %s247, %s261
      %p263 = scmp.eq.s32.totalorder %s27, 0
      %p264 = por %p262, %p263
      %s266 = sadd.s32 %s265, 1
      %p269 = scmp.eq.s32.totalorder %s21, 1
      %p270 = scmp.ne.s32.totalorder %s265, %s267
      %p271 = scmp.eq.s32.totalorder %s21, 0
      %p272 = por %p270, %p271
      %p273 = scmp.ne.s32.totalorder %s265, %s267
      %p274 = scmp.eq.s32.totalorder %s26, 1
      %p275 = por %p273, %p274
      %p276 = scmp.ne.s32.totalorder %s267, %s268
      %p277 = scmp.eq.s32.totalorder %s26, 0
      %p278 = por %p276, %p277
      %p279 = scmp.ne.s32.totalorder %s267, %s268
      %p280 = scmp.eq.s32.totalorder %s27, 1
      %p281 = por %p279, %p280
      %p283 = scmp.ne.s32.totalorder %s268, %s282
      %p284 = scmp.eq.s32.totalorder %s27, 0
      %p285 = por %p283, %p284
      %s286 = ssub.s32 %s21, %s28
      %p287 = scmp.eq.s32.totalorder %s286, 0
      %s289 = sadd.s32 %s288, 1
      %s290 = scalar_select %p287, %s288, %s289
      %p293 = pneg %p287
      %p294 = scmp.eq.s32.totalorder %s21, 1
      %p295 = por %p293, %p294
      %p296 = scmp.ne.s32.totalorder %s288, %s291
      %p297 = scmp.eq.s32.totalorder %s21, 0
      %p298 = por %p296, %p297
      %p299 = scmp.ne.s32.totalorder %s288, %s291
      %p300 = scmp.eq.s32.totalorder %s26, 1
      %p301 = por %p299, %p300
      %p302 = scmp.ne.s32.totalorder %s291, %s292
      %p303 = scmp.eq.s32.totalorder %s26, 0
      %p304 = por %p302, %p303
      %p305 = scmp.ne.s32.totalorder %s291, %s292
      %p306 = scmp.eq.s32.totalorder %s27, 1
      %p307 = por %p305, %p306
      %p309 = scmp.ne.s32.totalorder %s292, %s308
      %p310 = scmp.eq.s32.totalorder %s27, 0
      %p311 = por %p309, %p310
      %p312 = scmp.le.s32.totalorder 1, %s21
      %p313 = scmp.lt.s32.totalorder %s21, 3
      %p314 = pnand %p312, %p313
      %p315 = pneg %p314
      // Predicated region
      $region9: #{tpu_custom_call.1} parent=5 // pred_check
        _
      $region10: #{tpu_custom_call.1} parent=5 // pred_check_branch
        %317 = sbr.rel (%p314) target = $region12
      $region11: #{tpu_custom_call.1} parent=5 // pred_region
        %s318 = ssub.s32 %s21, 1
        // Predicated region
        $region13: #{tpu_custom_call.1} parent=11 // pred_check
          %p319 = pneg %p68
        $region14: #{tpu_custom_call.1} parent=11 // pred_check_branch
          %321 = sbr.rel (%p319) target = $region16
        $region15: #{tpu_custom_call.1} parent=11 // pred_region
          _
        $region16: #{tpu_custom_call.1} parent=11 // pred_fallthru
          _
        // Predicated region
        $region17: #{tpu_custom_call.1} parent=11 // pred_check
          %p322 = pneg %p89
        $region18: #{tpu_custom_call.1} parent=11 // pred_check_branch
          %324 = sbr.rel (%p322) target = $region20
        $region19: #{tpu_custom_call.1} parent=11 // pred_region
          _
        $region20: #{tpu_custom_call.1} parent=11 // pred_fallthru
          _
        // Predicated region
        $region21: #{tpu_custom_call.1} parent=11 // pred_check
          %p325 = pneg %p110
        $region22: #{tpu_custom_call.1} parent=11 // pred_check_branch
          %327 = sbr.rel (%p325) target = $region24
        $region23: #{tpu_custom_call.1} parent=11 // pred_region
          _
        $region24: #{tpu_custom_call.1} parent=11 // pred_fallthru
          _
        // Predicated region
        $region25: #{tpu_custom_call.1} parent=11 // pred_check
          %p328 = pneg %p131
        $region26: #{tpu_custom_call.1} parent=11 // pred_check_branch
          %330 = sbr.rel (%p328) target = $region28
        $region27: #{tpu_custom_call.1} parent=11 // pred_region
          _
        $region28: #{tpu_custom_call.1} parent=11 // pred_fallthru
          _
        // Predicated region
        $region29: #{tpu_custom_call.1} parent=11 // pred_check
          %p331 = pneg %p152
        $region30: #{tpu_custom_call.1} parent=11 // pred_check_branch
          %333 = sbr.rel (%p331) target = $region32
        $region31: #{tpu_custom_call.1} parent=11 // pred_region
          _
        $region32: #{tpu_custom_call.1} parent=11 // pred_fallthru
          _
        // Predicated region
        $region33: #{tpu_custom_call.1} parent=11 // pred_check
          %p334 = pneg %p173
        $region34: #{tpu_custom_call.1} parent=11 // pred_check_branch
          %336 = sbr.rel (%p334) target = $region36
        $region35: #{tpu_custom_call.1} parent=11 // pred_region
          _
        $region36: #{tpu_custom_call.1} parent=11 // pred_fallthru
          _
        // Predicated region
        $region37: #{tpu_custom_call.1} parent=11 // pred_check
          %p337 = pneg %p194
        $region38: #{tpu_custom_call.1} parent=11 // pred_check_branch
          %339 = sbr.rel (%p337) target = $region40
        $region39: #{tpu_custom_call.1} parent=11 // pred_region
          _
        $region40: #{tpu_custom_call.1} parent=11 // pred_fallthru
          _
        // Predicated region
        $region41: #{tpu_custom_call.1} parent=11 // pred_check
          %p340 = pneg %p215
        $region42: #{tpu_custom_call.1} parent=11 // pred_check_branch
          %342 = sbr.rel (%p340) target = $region44
        $region43: #{tpu_custom_call.1} parent=11 // pred_region
          _
        $region44: #{tpu_custom_call.1} parent=11 // pred_fallthru
          _
        // Predicated region
        $region45: #{tpu_custom_call.1} parent=11 // pred_check
          %p343 = pneg %p236
        $region46: #{tpu_custom_call.1} parent=11 // pred_check_branch
          %345 = sbr.rel (%p343) target = $region48
        $region47: #{tpu_custom_call.1} parent=11 // pred_region
          _
        $region48: #{tpu_custom_call.1} parent=11 // pred_fallthru
          _
        // Predicated region
        $region49: #{tpu_custom_call.1} parent=11 // pred_check
          %p346 = pneg %p257
        $region50: #{tpu_custom_call.1} parent=11 // pred_check_branch
          %348 = sbr.rel (%p346) target = $region52
        $region51: #{tpu_custom_call.1} parent=11 // pred_region
          _
        $region52: #{tpu_custom_call.1} parent=11 // pred_fallthru
          _
        // Predicated region
        $region53: #{tpu_custom_call.1} parent=11 // pred_check
          %p349 = pneg %p278
        $region54: #{tpu_custom_call.1} parent=11 // pred_check_branch
          %351 = sbr.rel (%p349) target = $region56
        $region55: #{tpu_custom_call.1} parent=11 // pred_region
          _
        $region56: #{tpu_custom_call.1} parent=11 // pred_fallthru
          _
      $region12: #{tpu_custom_call.1} parent=5 // pred_fallthru
        _
      %p352 = scmp.lt.s32.totalorder %s21, 2
      // Predicated region
      $region57: #{tpu_custom_call.1} parent=5 // pred_check
        %p353 = pneg %p352
      $region58: #{tpu_custom_call.1} parent=5 // pred_check_branch
        %355 = sbr.rel (%p353) target = $region60
      $region59: #{tpu_custom_call.1} parent=5 // pred_region
        // Predicated region
        $region61: #{tpu_custom_call.1} parent=59 // pred_check
          %p356 = pneg %p41
        $region62: #{tpu_custom_call.1} parent=59 // pred_check_branch
          %358 = sbr.rel (%p356) target = $region64
        $region63: #{tpu_custom_call.1} parent=59 // pred_region
          %p359 = scmp.lt.s32.totalorder %s21, 1
          %s360 = scalar_select %p359, %s21, 1
          %s361 = smul.addr %s360, 6
          %s362 = smul.addr %s361, 4
          %s363 = scalar_lea.vmem %s0, %s362
        $region64: #{tpu_custom_call.1} parent=59 // pred_fallthru
          _
      $region60: #{tpu_custom_call.1} parent=5 // pred_fallthru
        _
      %p364 = scmp.le.s32.totalorder 1, %s21
      %p365 = scmp.lt.s32.totalorder %s21, 3
      %p366 = pnand %p364, %p365
      %p367 = pneg %p366
      // Predicated region
      $region65: #{tpu_custom_call.1} parent=5 // pred_check
        _
      $region66: #{tpu_custom_call.1} parent=5 // pred_check_branch
        %369 = sbr.rel (%p366) target = $region68
      $region67: #{tpu_custom_call.1} parent=5 // pred_region
        %s370 = ssub.s32 %s21, 1
        %p371 = scmp.lt.s32.totalorder %s26, 1
        %s372 = scalar_select %p371, %s26, 1
        %s373 = smul.addr %s372, 6
        %s374 = smul.addr %s373, 4
        %s375 = scalar_lea.vmem %s0, %s374
        %p376 = pneg %p47
        %p377 = pneg %p44
        %p378 = pneg %p68
        %p379 = pneg %p65
        %p380 = pneg %p89
        %p381 = pneg %p86
        %p382 = pneg %p110
        %p383 = pneg %p107
        %p384 = pneg %p131
        %p385 = pneg %p128
        %p386 = pneg %p152
        %p387 = pneg %p149
        %p388 = pneg %p173
        %p389 = pneg %p170
        %p390 = pneg %p194
        %p391 = pneg %p191
        %p392 = pneg %p215
        %p393 = pneg %p212
        %p394 = pneg %p236
        %p395 = pneg %p233
        %p396 = pneg %p257
        %p397 = pneg %p254
        %p398 = pneg %p278
        %p399 = pneg %p275
        %p400 = pneg %p304
        %p401 = pneg %p301
        %s402 = sand.u32 %s291, 1
        %s403 = scalar_lea.sflag [#allocation7], %s402
        %s404 = sand.u32 %s291, 1
        %s405 = smul.addr %s404, 8
        %s406 = scalar_lea.vmem [#allocation6], %s405
        %p407 = scmp.lt.s32.totalorder %s26, 1
        %s408 = scalar_select %p407, %s26, 1
        %s409 = smul.addr %s408, 6
        %s410 = smul.addr %s409, 4
        %s411 = scalar_lea.vmem %s0, %s410
        %v413 = vlaneseq
        %vm414 = vcmp.ge.s32.totalorder %v413, 0
        %vm415 = vcmp.lt.s32.totalorder %v413, 136
        %vm416 = vmand %vm414, %vm415
        %s417 = scalar_lea.vmem [#allocation2], 32
        %418 = vst.msk [vmem:[%s417] ss:$8 sm:$0x3] %vm416, 0.0
        %419 = vst.msk [vmem:[%s417] ss:$8 sm:$0x0] %vm416, 0.0
        %vm420 = vcmask 64512
        %421 = vst.msk [vmem:[#allocation2 + $0x8] sm:$0xff] %vm420, 0.0
        %422 = vst.msk [vmem:[#allocation2 + $0x18] sm:$0xff] %vm420, 0.0
        %vm423 = vcmask 57344
        %424 = vst.msk [vmem:[#allocation2 + $0x28] sm:$0x1] %vm423, 0.0
        %vm425 = vcmask 516096
        %426 = vst.msk [vmem:[#allocation3 + $0x10] sm:$0x1] %vm425, 0.0
        %427 = vst [vmem:[#allocation4] sm:$0x1] 0.0
        %428 = vst [vmem:[#allocation5] sm:$0x1] 0.0
        %v429 = vld [vmem:[%s2] sm:$0x1]
        %v431 = vlaneseq
        %v432 = vshrl.u32 %v431, 7
        %v433 = vsub.s32 0, %v432
        %v434 = vrot.slane %v429, %v433
        %v436 = vld [vmem:[%s411] sm:$0xf]
        %v437 = vld [vmem:[%s411 + $0x4] sm:$0xf]
        %v438 = vld [vmem:[%s1] sm:$0xf]
        %v439 = vld [vmem:[%s1 + $0x4] sm:$0xf]
        %v440 = vld [vmem:[%s1 + $0x8] sm:$0xf]
        %v441 = vld [vmem:[%s1 + $0xc] sm:$0xf]
        %v442 = vld [vmem:[%s1 + $0x10] sm:$0xf]
        %v443 = vld [vmem:[%s1 + $0x14] sm:$0xf]
        %v444 = vld [vmem:[%s1 + $0x18] sm:$0xf]
        %v445 = vld [vmem:[%s1 + $0x1c] sm:$0xf]
        %v446 = vld [vmem:[%s1 + $0x20] sm:$0xf]
        %v447 = vld [vmem:[%s1 + $0x24] sm:$0xf]
        %v448 = vld [vmem:[%s1 + $0x28] sm:$0xf]
        %v449 = vld [vmem:[%s1 + $0x2c] sm:$0xf]
        %v452 = vunpack.c.l.b16 %v436
        %v453 = vunpack.c.l.b16 %v437
        %v454 = vpack.c.b16 %v453, %v452
        %v467 = vunpack.c.l.b16 %v438
        %v468 = vunpack.c.l.b16 %v439
        %v469 = vunpack.c.l.b16 %v440
        %v470 = vunpack.c.l.b16 %v441
        %v471 = vunpack.c.l.b16 %v442
        %v472 = vunpack.c.l.b16 %v443
        %v473 = vunpack.c.l.b16 %v444
        %v474 = vunpack.c.l.b16 %v445
        %v475 = vunpack.c.l.b16 %v446
        %v476 = vunpack.c.l.b16 %v447
        %v477 = vunpack.c.l.b16 %v448
        %v478 = vunpack.c.l.b16 %v449
        %v479 = vpack.c.b16 %v468, %v467
        %v480 = vpack.c.b16 %v470, %v469
        %v481 = vpack.c.b16 %v472, %v471
        %v482 = vpack.c.b16 %v474, %v473
        %v483 = vpack.c.b16 %v476, %v475
        %v484 = vpack.c.b16 %v478, %v477
        %vm491 = vcmask 785408
        %v493 = vsel %vm491, %v454, 0
        %495 = vmatprep.subr.bf16.mxu0 0
        %496 = vmatpush1.bf16.msra.mxu0 %v479
        %497 = vmatprep.subr.bf16.mxu0 0
        %498 = vmatpush1.bf16.msra.mxu0 %v480
        %499 = vmatprep.subr.bf16.mxu0 0
        %500 = vmatpush1.bf16.msra.mxu0 %v481
        %501 = vmatprep.subr.bf16.mxu0 0
        %502 = vmatpush1.bf16.msra.mxu0 %v482
        %503 = vmatprep.subr.bf16.mxu0 0
        %504 = vmatpush1.bf16.msra.mxu0 %v483
        %505 = vmatprep.subr.bf16.mxu0 0
        %506 = vmatpush1.bf16.msra.mxu0 %v484
        %507 = vmatprep.subr.bf16.mxu0 0
        %508 = vmatpush1.bf16.msra.mxu0 0
        %509 = vmatprep.subr.bf16.mxu0 0
        %510 = vmatpush1.bf16.msra.mxu0 0
        %511 = vmatprep.subr.bf16.mxu0 0
        %512 = vmatpush1.bf16.msra.mxu0 0
        %513 = vmatprep.subr.bf16.mxu0 0
        %514 = vmatpush1.bf16.msra.mxu0 0
        %515 = vmatprep.subr.bf16.mxu0 0
        %516 = vmatpush1.bf16.msra.mxu0 0
        %517 = vmatprep.subr.bf16.mxu0 0
        %518 = vmatpush1.bf16.msra.mxu0 0
        %519 = vmatprep.subr.bf16.mxu0 0
        %520 = vmatpush1.bf16.msra.mxu0 0
        %521 = vmatprep.subr.bf16.mxu0 0
        %522 = vmatpush1.bf16.msra.mxu0 0
        %523 = vmatprep.subr.bf16.mxu0 0
        %524 = vmatpush1.bf16.msra.mxu0 0
        %525 = vmatprep.subr.bf16.mxu0 0
        %526 = vmatpush1.bf16.msra.mxu0 0
        %527 = vmatprep.mubr.bf16.mxu0 0
        %528 = vmatmul.mubr.bf16.gmra.mrb[0].mxu0 %v493
        %v529 = vpop.f32.mrb[0].mxu0
        %v530 = vadd.f32 0.0, %v529
        %v531 = vpop.f32.mrb[0].mxu0
        %v532 = vpop.f32.mrb[0].mxu0
        %v533 = vadd.f32 0.0, %v532
        %v534 = vpop.f32.mrb[0].mxu0
        %535 = vdwg.mxu0
        %v536 = vadd.f32 %v434, %v530
        %v537 = vadd.f32 %v434, %v533
        %s538 = scalar_lea.vmem %s411, 8
        %v539 = vld [vmem:[%s538] sm:$0xf]
        %v540 = vld [vmem:[%s538 + $0x4] sm:$0xf]
        %s541 = scalar_lea.vmem %s1, 48
        %v542 = vld [vmem:[%s541] sm:$0xf]
        %v543 = vld [vmem:[%s541 + $0x4] sm:$0xf]
        %v544 = vld [vmem:[%s541 + $0x8] sm:$0xf]
        %v545 = vld [vmem:[%s541 + $0xc] sm:$0xf]
        %v546 = vld [vmem:[%s541 + $0x10] sm:$0xf]
        %v547 = vld [vmem:[%s541 + $0x14] sm:$0xf]
        %v548 = vld [vmem:[%s541 + $0x18] sm:$0xf]
        %v549 = vld [vmem:[%s541 + $0x1c] sm:$0xf]
        %v550 = vld [vmem:[%s541 + $0x20] sm:$0xf]
        %v551 = vld [vmem:[%s541 + $0x24] sm:$0xf]
        %v552 = vld [vmem:[%s541 + $0x28] sm:$0xf]
        %v553 = vld [vmem:[%s541 + $0x2c] sm:$0xf]
        %v556 = vunpack.c.l.b16 %v539
        %v557 = vunpack.c.l.b16 %v540
        %v558 = vpack.c.b16 %v557, %v556
        %v571 = vunpack.c.l.b16 %v542
        %v572 = vunpack.c.l.b16 %v543
        %v573 = vunpack.c.l.b16 %v544
        %v574 = vunpack.c.l.b16 %v545
        %v575 = vunpack.c.l.b16 %v546
        %v576 = vunpack.c.l.b16 %v547
        %v577 = vunpack.c.l.b16 %v548
        %v578 = vunpack.c.l.b16 %v549
        %v579 = vunpack.c.l.b16 %v550
        %v580 = vunpack.c.l.b16 %v551
        %v581 = vunpack.c.l.b16 %v552
        %v582 = vunpack.c.l.b16 %v553
        %v583 = vpack.c.b16 %v572, %v571
        %v584 = vpack.c.b16 %v574, %v573
        %v585 = vpack.c.b16 %v576, %v575
        %v586 = vpack.c.b16 %v578, %v577
        %v587 = vpack.c.b16 %v580, %v579
        %v588 = vpack.c.b16 %v582, %v581
        %v596 = vsel %vm491, %v558, 0
        %598 = vmatprep.subr.bf16.mxu0 0
        %599 = vmatpush1.bf16.msra.mxu0 %v583
        %600 = vmatprep.subr.bf16.mxu0 0
        %601 = vmatpush1.bf16.msra.mxu0 %v584
        %602 = vmatprep.subr.bf16.mxu0 0
        %603 = vmatpush1.bf16.msra.mxu0 %v585
        %604 = vmatprep.subr.bf16.mxu0 0
        %605 = vmatpush1.bf16.msra.mxu0 %v586
        %606 = vmatprep.subr.bf16.mxu0 0
        %607 = vmatpush1.bf16.msra.mxu0 %v587
        %608 = vmatprep.subr.bf16.mxu0 0
        %609 = vmatpush1.bf16.msra.mxu0 %v588
        %610 = vmatprep.subr.bf16.mxu0 0
        %611 = vmatpush1.bf16.msra.mxu0 0
        %612 = vmatprep.subr.bf16.mxu0 0
        %613 = vmatpush1.bf16.msra.mxu0 0
        %614 = vmatprep.subr.bf16.mxu0 0
        %615 = vmatpush1.bf16.msra.mxu0 0
        %616 = vmatprep.subr.bf16.mxu0 0
        %617 = vmatpush1.bf16.msra.mxu0 0
        %618 = vmatprep.subr.bf16.mxu0 0
        %619 = vmatpush1.bf16.msra.mxu0 0
        %620 = vmatprep.subr.bf16.mxu0 0
        %621 = vmatpush1.bf16.msra.mxu0 0
        %622 = vmatprep.subr.bf16.mxu0 0
        %623 = vmatpush1.bf16.msra.mxu0 0
        %624 = vmatprep.subr.bf16.mxu0 0
        %625 = vmatpush1.bf16.msra.mxu0 0
        %626 = vmatprep.subr.bf16.mxu0 0
        %627 = vmatpush1.bf16.msra.mxu0 0
        %628 = vmatprep.subr.bf16.mxu0 0
        %629 = vmatpush1.bf16.msra.mxu0 0
        %630 = vmatprep.mubr.bf16.mxu0 0
        %631 = vmatmul.mubr.bf16.gmra.mrb[0].mxu0 %v596
        %v632 = vpop.f32.mrb[0].mxu0
        %v633 = vadd.f32 0.0, %v632
        %v634 = vpop.f32.mrb[0].mxu0
        %v635 = vpop.f32.mrb[0].mxu0
        %v636 = vadd.f32 0.0, %v635
        %v637 = vpop.f32.mrb[0].mxu0
        %638 = vdwg.mxu0
        %v639 = vadd.f32 %v536, %v633
        %v640 = vadd.f32 %v537, %v636
        %s641 = scalar_lea.vmem %s411, 16
        %v642 = vld [vmem:[%s641] sm:$0xf]
        %v643 = vld [vmem:[%s641 + $0x4] sm:$0xf]
        %s644 = scalar_lea.vmem %s1, 96
        %v645 = vld [vmem:[%s644] sm:$0xf]
        %v646 = vld [vmem:[%s644 + $0x4] sm:$0xf]
        %v647 = vld [vmem:[%s644 + $0x8] sm:$0xf]
        %v648 = vld [vmem:[%s644 + $0xc] sm:$0xf]
        %v649 = vld [vmem:[%s644 + $0x10] sm:$0xf]
        %v650 = vld [vmem:[%s644 + $0x14] sm:$0xf]
        %v651 = vld [vmem:[%s644 + $0x18] sm:$0xf]
        %v652 = vld [vmem:[%s644 + $0x1c] sm:$0xf]
        %v653 = vld [vmem:[%s644 + $0x20] sm:$0xf]
        %v654 = vld [vmem:[%s644 + $0x24] sm:$0xf]
        %v655 = vld [vmem:[%s644 + $0x28] sm:$0xf]
        %v656 = vld [vmem:[%s644 + $0x2c] sm:$0xf]
        %v659 = vunpack.c.l.b16 %v642
        %v660 = vunpack.c.l.b16 %v643
        %v661 = vpack.c.b16 %v660, %v659
        %v674 = vunpack.c.l.b16 %v645
        %v675 = vunpack.c.l.b16 %v646
        %v676 = vunpack.c.l.b16 %v647
        %v677 = vunpack.c.l.b16 %v648
        %v678 = vunpack.c.l.b16 %v649
        %v679 = vunpack.c.l.b16 %v650
        %v680 = vunpack.c.l.b16 %v651
        %v681 = vunpack.c.l.b16 %v652
        %v682 = vunpack.c.l.b16 %v653
        %v683 = vunpack.c.l.b16 %v654
        %v684 = vunpack.c.l.b16 %v655
        %v685 = vunpack.c.l.b16 %v656
        %v686 = vpack.c.b16 %v675, %v674
        %v687 = vpack.c.b16 %v677, %v676
        %v688 = vpack.c.b16 %v679, %v678
        %v689 = vpack.c.b16 %v681, %v680
        %v690 = vpack.c.b16 %v683, %v682
        %v691 = vpack.c.b16 %v685, %v684
        %v699 = vsel %vm491, %v661, 0
        %701 = vmatprep.subr.bf16.mxu0 0
        %702 = vmatpush1.bf16.msra.mxu0 %v686
        %703 = vmatprep.subr.bf16.mxu0 0
        %704 = vmatpush1.bf16.msra.mxu0 %v687
        %705 = vmatprep.subr.bf16.mxu0 0
        %706 = vmatpush1.bf16.msra.mxu0 %v688
        %707 = vmatprep.subr.bf16.mxu0 0
        %708 = vmatpush1.bf16.msra.mxu0 %v689
        %709 = vmatprep.subr.bf16.mxu0 0
        %710 = vmatpush1.bf16.msra.mxu0 %v690
        %711 = vmatprep.subr.bf16.mxu0 0
        %712 = vmatpush1.bf16.msra.mxu0 %v691
        %713 = vmatprep.subr.bf16.mxu0 0
        %714 = vmatpush1.bf16.msra.mxu0 0
        %715 = vmatprep.subr.bf16.mxu0 0
        %716 = vmatpush1.bf16.msra.mxu0 0
        %717 = vmatprep.subr.bf16.mxu0 0
        %718 = vmatpush1.bf16.msra.mxu0 0
        %719 = vmatprep.subr.bf16.mxu0 0
        %720 = vmatpush1.bf16.msra.mxu0 0
        %721 = vmatprep.subr.bf16.mxu0 0
        %722 = vmatpush1.bf16.msra.mxu0 0
        %723 = vmatprep.subr.bf16.mxu0 0
        %724 = vmatpush1.bf16.msra.mxu0 0
        %725 = vmatprep.subr.bf16.mxu0 0
        %726 = vmatpush1.bf16.msra.mxu0 0
        %727 = vmatprep.subr.bf16.mxu0 0
        %728 = vmatpush1.bf16.msra.mxu0 0
        %729 = vmatprep.subr.bf16.mxu0 0
        %730 = vmatpush1.bf16.msra.mxu0 0
        %731 = vmatprep.subr.bf16.mxu0 0
        %732 = vmatpush1.bf16.msra.mxu0 0
        %733 = vmatprep.mubr.bf16.mxu0 0
        %734 = vmatmul.mubr.bf16.gmra.mrb[0].mxu0 %v699
        %v735 = vpop.f32.mrb[0].mxu0
        %v736 = vadd.f32 0.0, %v735
        %v737 = vpop.f32.mrb[0].mxu0
        %v738 = vpop.f32.mrb[0].mxu0
        %v739 = vadd.f32 0.0, %v738
        %v740 = vpop.f32.mrb[0].mxu0
        %741 = vdwg.mxu0
        %v742 = vadd.f32 %v639, %v736
        %v743 = vadd.f32 %v640, %v739
        %v744 = vmax.f32 %v742, 0.0
        %v745 = vmax.f32 %v743, 0.0
        %746 = vst [vmem:[#allocation2] sm:$0xff] %v744
        %747 = vst [vmem:[#allocation2 + $0x10] sm:$0xff] %v745
        %v748 = vld [vmem:[%s4] sm:$0x1]
        %v750 = vlaneseq
        %v751 = vshrl.u32 %v750, 7
        %v752 = vsub.s32 0, %v751
        %v753 = vrot.slane %v748, %v752
        %v755 = vld [vmem:[#allocation2] sm:$0xff]
        %v756 = vld [vmem:[#allocation2 + $0x10] sm:$0xff]
        %v757 = vpack.c.bf16 %v756, %v755
        %v758 = vld [vmem:[%s3] sm:$0xf]
        %v759 = vld [vmem:[%s3 + $0x4] sm:$0xf]
        %v760 = vld [vmem:[%s3 + $0x8] sm:$0xf]
        %v761 = vld [vmem:[%s3 + $0xc] sm:$0xf]
        %v762 = vld [vmem:[%s3 + $0x10] sm:$0xf]
        %v763 = vld [vmem:[%s3 + $0x14] sm:$0xf]
        %v764 = vld [vmem:[%s3 + $0x18] sm:$0xf]
        %v765 = vld [vmem:[%s3 + $0x1c] sm:$0xf]
        %v766 = vld [vmem:[%s3 + $0x20] sm:$0xf]
        %v767 = vld [vmem:[%s3 + $0x24] sm:$0xf]
        %v768 = vld [vmem:[%s3 + $0x28] sm:$0xf]
        %v769 = vld [vmem:[%s3 + $0x2c] sm:$0xf]
        %v770 = vld [vmem:[%s3 + $0x30] sm:$0xf]
        %v771 = vld [vmem:[%s3 + $0x34] sm:$0xf]
        %v772 = vld [vmem:[%s3 + $0x38] sm:$0xf]
        %v773 = vld [vmem:[%s3 + $0x3c] sm:$0xf]
        %v790 = vunpack.c.l.b16 %v758
        %v791 = vunpack.c.l.b16 %v759
        %v792 = vunpack.c.l.b16 %v760
        %v793 = vunpack.c.l.b16 %v761
        %v794 = vunpack.c.l.b16 %v762
        %v795 = vunpack.c.l.b16 %v763
        %v796 = vunpack.c.l.b16 %v764
        %v797 = vunpack.c.l.b16 %v765
        %v798 = vunpack.c.l.b16 %v766
        %v799 = vunpack.c.l.b16 %v767
        %v800 = vunpack.c.l.b16 %v768
        %v801 = vunpack.c.l.b16 %v769
        %v802 = vunpack.c.l.b16 %v770
        %v803 = vunpack.c.l.b16 %v771
        %v804 = vunpack.c.l.b16 %v772
        %v805 = vunpack.c.l.b16 %v773
        %v806 = vpack.c.b16 %v791, %v790
        %v807 = vpack.c.b16 %v793, %v792
        %v808 = vpack.c.b16 %v795, %v794
        %v809 = vpack.c.b16 %v797, %v796
        %v810 = vpack.c.b16 %v799, %v798
        %v811 = vpack.c.b16 %v801, %v800
        %v812 = vpack.c.b16 %v803, %v802
        %v813 = vpack.c.b16 %v805, %v804
        %822 = vmatprep.subr.bf16.mxu0 0
        %823 = vmatpush1.bf16.msra.mxu0 %v806
        %824 = vmatprep.subr.bf16.mxu0 0
        %825 = vmatpush1.bf16.msra.mxu0 %v807
        %826 = vmatprep.subr.bf16.mxu0 0
        %827 = vmatpush1.bf16.msra.mxu0 %v808
        %828 = vmatprep.subr.bf16.mxu0 0
        %829 = vmatpush1.bf16.msra.mxu0 %v809
        %830 = vmatprep.subr.bf16.mxu0 0
        %831 = vmatpush1.bf16.msra.mxu0 %v810
        %832 = vmatprep.subr.bf16.mxu0 0
        %833 = vmatpush1.bf16.msra.mxu0 %v811
        %834 = vmatprep.subr.bf16.mxu0 0
        %835 = vmatpush1.bf16.msra.mxu0 %v812
        %836 = vmatprep.subr.bf16.mxu0 0
        %837 = vmatpush1.bf16.msra.mxu0 %v813
        %838 = vmatprep.subr.bf16.mxu0 0
        %839 = vmatpush1.bf16.msra.mxu0 0
        %840 = vmatprep.subr.bf16.mxu0 0
        %841 = vmatpush1.bf16.msra.mxu0 0
        %842 = vmatprep.subr.bf16.mxu0 0
        %843 = vmatpush1.bf16.msra.mxu0 0
        %844 = vmatprep.subr.bf16.mxu0 0
        %845 = vmatpush1.bf16.msra.mxu0 0
        %846 = vmatprep.subr.bf16.mxu0 0
        %847 = vmatpush1.bf16.msra.mxu0 0
        %848 = vmatprep.subr.bf16.mxu0 0
        %849 = vmatpush1.bf16.msra.mxu0 0
        %850 = vmatprep.subr.bf16.mxu0 0
        %851 = vmatpush1.bf16.msra.mxu0 0
        %852 = vmatprep.subr.bf16.mxu0 0
        %853 = vmatpush1.bf16.msra.mxu0 0
        %854 = vmatprep.mubr.bf16.mxu0 0
        %855 = vmatmul.mubr.bf16.gmra.mrb[0].mxu0 %v757
        %v856 = vpop.f32.mrb[0].mxu0
        %v857 = vadd.f32 0.0, %v856
        %v858 = vpop.f32.mrb[0].mxu0
        %v859 = vpop.f32.mrb[0].mxu0
        %v860 = vadd.f32 0.0, %v859
        %v861 = vpop.f32.mrb[0].mxu0
        %862 = vdwg.mxu0
        %v863 = vadd.f32 %v753, %v857
        %v864 = vadd.f32 %v753, %v860
        %v865 = vld [vmem:[#allocation2] sm:$0xfe]
        %v866 = vld [vmem:[#allocation2 + $0x10] sm:$0xff]
        %v867 = vld [vmem:[#allocation2 + $0x20] sm:$0x1]
        %v868 = vpack.c.bf16 %v866, %v865
        %v869 = vpack.c.bf16 %v867, %v867
        %s870 = scalar_lea.vmem %s3, 64
        %v871 = vld [vmem:[%s870] sm:$0xf]
        %v872 = vld [vmem:[%s870 + $0x4] sm:$0xf]
        %v873 = vld [vmem:[%s870 + $0x8] sm:$0xf]
        %v874 = vld [vmem:[%s870 + $0xc] sm:$0xf]
        %v875 = vld [vmem:[%s870 + $0x10] sm:$0xf]
        %v876 = vld [vmem:[%s870 + $0x14] sm:$0xf]
        %v877 = vld [vmem:[%s870 + $0x18] sm:$0xf]
        %v878 = vld [vmem:[%s870 + $0x1c] sm:$0xf]
        %v879 = vld [vmem:[%s870 + $0x20] sm:$0xf]
        %v880 = vld [vmem:[%s870 + $0x24] sm:$0xf]
        %v881 = vld [vmem:[%s870 + $0x28] sm:$0xf]
        %v882 = vld [vmem:[%s870 + $0x2c] sm:$0xf]
        %v883 = vld [vmem:[%s870 + $0x30] sm:$0xf]
        %v884 = vld [vmem:[%s870 + $0x34] sm:$0xf]
        %v885 = vld [vmem:[%s870 + $0x38] sm:$0xf]
        %v886 = vld [vmem:[%s870 + $0x3c] sm:$0xf]
        %vm887 = vsmask.f32 7424
        %v889 = vshrl.u32 %v868, 16
        %v891 = vshll.u32 %v868, 16
        %v893 = vrot.slane %v891, 1
        %v894 = vor.u32 %v889, %v893
        %v896 = vshll.u32 %v869, 16
        %v898 = vrot.slane %v896, 1
        %v899 = vsel %vm887, %v894, %v898
        %v917 = vunpack.c.l.b16 %v871
        %v918 = vunpack.c.l.b16 %v872
        %v919 = vunpack.c.l.b16 %v873
        %v920 = vunpack.c.l.b16 %v874
        %v921 = vunpack.c.l.b16 %v875
        %v922 = vunpack.c.l.b16 %v876
        %v923 = vunpack.c.l.b16 %v877
        %v924 = vunpack.c.l.b16 %v878
        %v925 = vunpack.c.l.b16 %v879
        %v926 = vunpack.c.l.b16 %v880
        %v927 = vunpack.c.l.b16 %v881
        %v928 = vunpack.c.l.b16 %v882
        %v929 = vunpack.c.l.b16 %v883
        %v930 = vunpack.c.l.b16 %v884
        %v931 = vunpack.c.l.b16 %v885
        %v932 = vunpack.c.l.b16 %v886
        %v933 = vpack.c.b16 %v918, %v917
        %v934 = vpack.c.b16 %v920, %v919
        %v935 = vpack.c.b16 %v922, %v921
        %v936 = vpack.c.b16 %v924, %v923
        %v937 = vpack.c.b16 %v926, %v925
        %v938 = vpack.c.b16 %v928, %v927
        %v939 = vpack.c.b16 %v930, %v929
        %v940 = vpack.c.b16 %v932, %v931
        %949 = vmatprep.subr.bf16.mxu0 0
        %950 = vmatpush1.bf16.msra.mxu0 %v933
        %951 = vmatprep.subr.bf16.mxu0 0
        %952 = vmatpush1.bf16.msra.mxu0 %v934
        %953 = vmatprep.subr.bf16.mxu0 0
        %954 = vmatpush1.bf16.msra.mxu0 %v935
        %955 = vmatprep.subr.bf16.mxu0 0
        %956 = vmatpush1.bf16.msra.mxu0 %v936
        %957 = vmatprep.subr.bf16.mxu0 0
        %958 = vmatpush1.bf16.msra.mxu0 %v937
        %959 = vmatprep.subr.bf16.mxu0 0
        %960 = vmatpush1.bf16.msra.mxu0 %v938
        %961 = vmatprep.subr.bf16.mxu0 0
        %962 = vmatpush1.bf16.msra.mxu0 %v939
        %963 = vmatprep.subr.bf16.mxu0 0
        %964 = vmatpush1.bf16.msra.mxu0 %v940
        %965 = vmatprep.subr.bf16.mxu0 0
        %966 = vmatpush1.bf16.msra.mxu0 0
        %967 = vmatprep.subr.bf16.mxu0 0
        %968 = vmatpush1.bf16.msra.mxu0 0
        %969 = vmatprep.subr.bf16.mxu0 0
        %970 = vmatpush1.bf16.msra.mxu0 0
        %971 = vmatprep.subr.bf16.mxu0 0
        %972 = vmatpush1.bf16.msra.mxu0 0
        %973 = vmatprep.subr.bf16.mxu0 0
        %974 = vmatpush1.bf16.msra.mxu0 0
        %975 = vmatprep.subr.bf16.mxu0 0
        %976 = vmatpush1.bf16.msra.mxu0 0
        %977 = vmatprep.subr.bf16.mxu0 0
        %978 = vmatpush1.bf16.msra.mxu0 0
        %979 = vmatprep.subr.bf16.mxu0 0
        %980 = vmatpush1.bf16.msra.mxu0 0
        %981 = vmatprep.mubr.bf16.mxu0 0
        %982 = vmatmul.mubr.bf16.gmra.mrb[0].mxu0 %v899
        %v983 = vpop.f32.mrb[0].mxu0
        %v984 = vadd.f32 0.0, %v983
        %v985 = vpop.f32.mrb[0].mxu0
        %v986 = vpop.f32.mrb[0].mxu0
        %v987 = vadd.f32 0.0, %v986
        %v988 = vpop.f32.mrb[0].mxu0
        %989 = vdwg.mxu0
        %v990 = vadd.f32 %v863, %v984
        %v991 = vadd.f32 %v864, %v987
        %v992 = vmax.f32 %v990, 0.0
        %v993 = vmax.f32 %v991, 0.0
        %vm994 = vcmask 523264
        %995 = vst.msk [vmem:[#allocation3] sm:$0xff] %vm994, %v992
        %996 = vst.msk [vmem:[#allocation3 + $0x8] sm:$0xff] %vm994, %v993
        %v997 = vld [vmem:[%s6] sm:$0x1]
        %v999 = vlaneseq
        %v1000 = vshrl.u32 %v999, 7
        %v1001 = vsub.s32 0, %v1000
        %v1002 = vrot.slane %v997, %v1001
        %v1004 = vld [vmem:[#allocation3] sm:$0xff]
        %v1005 = vld [vmem:[#allocation3 + $0x8] sm:$0xff]
        %v1006 = vpack.c.bf16 %v1005, %v1004
        %v1007 = vld [vmem:[%s5] sm:$0xf]
        %v1008 = vld [vmem:[%s5 + $0x4] sm:$0xf]
        %v1009 = vld [vmem:[%s5 + $0x8] sm:$0xf]
        %v1010 = vld [vmem:[%s5 + $0xc] sm:$0xf]
        %v1011 = vld [vmem:[%s5 + $0x10] sm:$0xf]
        %v1012 = vld [vmem:[%s5 + $0x14] sm:$0xf]
        %v1013 = vld [vmem:[%s5 + $0x18] sm:$0xf]
        %v1014 = vld [vmem:[%s5 + $0x1c] sm:$0xf]
        %v1023 = vunpack.c.l.b16 %v1007
        %v1024 = vunpack.c.l.b16 %v1008
        %v1025 = vunpack.c.l.b16 %v1009
        %v1026 = vunpack.c.l.b16 %v1010
        %v1027 = vunpack.c.l.b16 %v1011
        %v1028 = vunpack.c.l.b16 %v1012
        %v1029 = vunpack.c.l.b16 %v1013
        %v1030 = vunpack.c.l.b16 %v1014
        %v1031 = vpack.c.b16 %v1024, %v1023
        %v1032 = vpack.c.b16 %v1026, %v1025
        %v1033 = vpack.c.b16 %v1028, %v1027
        %v1034 = vpack.c.b16 %v1030, %v1029
        %v1040 = vsel %vm994, %v1006, 0
        %1042 = vmatprep.subr.bf16.mxu0 0
        %1043 = vmatpush1.bf16.msra.mxu0 %v1031
        %1044 = vmatprep.subr.bf16.mxu0 0
        %1045 = vmatpush1.bf16.msra.mxu0 %v1032
        %1046 = vmatprep.subr.bf16.mxu0 0
        %1047 = vmatpush1.bf16.msra.mxu0 %v1033
        %1048 = vmatprep.subr.bf16.mxu0 0
        %1049 = vmatpush1.bf16.msra.mxu0 %v1034
        %1050 = vmatprep.subr.bf16.mxu0 0
        %1051 = vmatpush1.bf16.msra.mxu0 0
        %1052 = vmatprep.subr.bf16.mxu0 0
        %1053 = vmatpush1.bf16.msra.mxu0 0
        %1054 = vmatprep.subr.bf16.mxu0 0
        %1055 = vmatpush1.bf16.msra.mxu0 0
        %1056 = vmatprep.subr.bf16.mxu0 0
        %1057 = vmatpush1.bf16.msra.mxu0 0
        %1058 = vmatprep.subr.bf16.mxu0 0
        %1059 = vmatpush1.bf16.msra.mxu0 0
        %1060 = vmatprep.subr.bf16.mxu0 0
        %1061 = vmatpush1.bf16.msra.mxu0 0
        %1062 = vmatprep.subr.bf16.mxu0 0
        %1063 = vmatpush1.bf16.msra.mxu0 0
        %1064 = vmatprep.subr.bf16.mxu0 0
        %1065 = vmatpush1.bf16.msra.mxu0 0
        %1066 = vmatprep.subr.bf16.mxu0 0
        %1067 = vmatpush1.bf16.msra.mxu0 0
        %1068 = vmatprep.subr.bf16.mxu0 0
        %1069 = vmatpush1.bf16.msra.mxu0 0
        %1070 = vmatprep.subr.bf16.mxu0 0
        %1071 = vmatpush1.bf16.msra.mxu0 0
        %1072 = vmatprep.subr.bf16.mxu0 0
        %1073 = vmatpush1.bf16.msra.mxu0 0
        %1074 = vmatprep.mubr.bf16.mxu0 0
        %1075 = vmatmul.mubr.bf16.gmra.mrb[0].mxu0 %v1040
        %v1076 = vpop.f32.mrb[0].mxu0
        %v1077 = vadd.f32 0.0, %v1076
        %v1078 = vpop.f32.mrb[0].mxu0
        %v1079 = vpop.f32.mrb[0].mxu0
        %v1080 = vadd.f32 0.0, %v1079
        %v1081 = vpop.f32.mrb[0].mxu0
        %1082 = vdwg.mxu0
        %v1083 = vadd.f32 %v1002, %v1077
        %v1084 = vadd.f32 %v1002, %v1080
        %v1085 = vld [vmem:[#allocation3 + $0x1] sm:$0xff]
        %v1086 = vld [vmem:[#allocation3 + $0x9] sm:$0xff]
        %v1087 = vpack.c.bf16 %v1086, %v1085
        %s1088 = scalar_lea.vmem %s5, 32
        %v1089 = vld [vmem:[%s1088] sm:$0xf]
        %v1090 = vld [vmem:[%s1088 + $0x4] sm:$0xf]
        %v1091 = vld [vmem:[%s1088 + $0x8] sm:$0xf]
        %v1092 = vld [vmem:[%s1088 + $0xc] sm:$0xf]
        %v1093 = vld [vmem:[%s1088 + $0x10] sm:$0xf]
        %v1094 = vld [vmem:[%s1088 + $0x14] sm:$0xf]
        %v1095 = vld [vmem:[%s1088 + $0x18] sm:$0xf]
        %v1096 = vld [vmem:[%s1088 + $0x1c] sm:$0xf]
        %v1105 = vunpack.c.l.b16 %v1089
        %v1106 = vunpack.c.l.b16 %v1090
        %v1107 = vunpack.c.l.b16 %v1091
        %v1108 = vunpack.c.l.b16 %v1092
        %v1109 = vunpack.c.l.b16 %v1093
        %v1110 = vunpack.c.l.b16 %v1094
        %v1111 = vunpack.c.l.b16 %v1095
        %v1112 = vunpack.c.l.b16 %v1096
        %v1113 = vpack.c.b16 %v1106, %v1105
        %v1114 = vpack.c.b16 %v1108, %v1107
        %v1115 = vpack.c.b16 %v1110, %v1109
        %v1116 = vpack.c.b16 %v1112, %v1111
        %v1122 = vsel %vm994, %v1087, 0
        %1124 = vmatprep.subr.bf16.mxu0 0
        %1125 = vmatpush1.bf16.msra.mxu0 %v1113
        %1126 = vmatprep.subr.bf16.mxu0 0
        %1127 = vmatpush1.bf16.msra.mxu0 %v1114
        %1128 = vmatprep.subr.bf16.mxu0 0
        %1129 = vmatpush1.bf16.msra.mxu0 %v1115
        %1130 = vmatprep.subr.bf16.mxu0 0
        %1131 = vmatpush1.bf16.msra.mxu0 %v1116
        %1132 = vmatprep.subr.bf16.mxu0 0
        %1133 = vmatpush1.bf16.msra.mxu0 0
        %1134 = vmatprep.subr.bf16.mxu0 0
        %1135 = vmatpush1.bf16.msra.mxu0 0
        %1136 = vmatprep.subr.bf16.mxu0 0
        %1137 = vmatpush1.bf16.msra.mxu0 0
        %1138 = vmatprep.subr.bf16.mxu0 0
        %1139 = vmatpush1.bf16.msra.mxu0 0
        %1140 = vmatprep.subr.bf16.mxu0 0
        %1141 = vmatpush1.bf16.msra.mxu0 0
        %1142 = vmatprep.subr.bf16.mxu0 0
        %1143 = vmatpush1.bf16.msra.mxu0 0
        %1144 = vmatprep.subr.bf16.mxu0 0
        %1145 = vmatpush1.bf16.msra.mxu0 0
        %1146 = vmatprep.subr.bf16.mxu0 0
        %1147 = vmatpush1.bf16.msra.mxu0 0
        %1148 = vmatprep.subr.bf16.mxu0 0
        %1149 = vmatpush1.bf16.msra.mxu0 0
        %1150 = vmatprep.subr.bf16.mxu0 0
        %1151 = vmatpush1.bf16.msra.mxu0 0
        %1152 = vmatprep.subr.bf16.mxu0 0
        %1153 = vmatpush1.bf16.msra.mxu0 0
        %1154 = vmatprep.subr.bf16.mxu0 0
        %1155 = vmatpush1.bf16.msra.mxu0 0
        %1156 = vmatprep.mubr.bf16.mxu0 0
        %1157 = vmatmul.mubr.bf16.gmra.mrb[0].mxu0 %v1122
        %v1158 = vpop.f32.mrb[0].mxu0
        %v1159 = vadd.f32 0.0, %v1158
        %v1160 = vpop.f32.mrb[0].mxu0
        %v1161 = vpop.f32.mrb[0].mxu0
        %v1162 = vadd.f32 0.0, %v1161
        %v1163 = vpop.f32.mrb[0].mxu0
        %1164 = vdwg.mxu0
        %v1165 = vadd.f32 %v1083, %v1159
        %v1166 = vadd.f32 %v1084, %v1162
        %v1167 = vmax.f32 %v1165, 0.0
        %v1168 = vmax.f32 %v1166, 0.0
        %1169 = vst [vmem:[#allocation5 + $0x1] sm:$0xff] %v1167
        %1170 = vst [vmem:[#allocation5 + $0x9] sm:$0xff] %v1168
        %v1171 = vld [vmem:[#allocation2] sm:$0xff]
        %v1172 = vld [vmem:[#allocation2 + $0x10] sm:$0xff]
        %v1173 = vld [vmem:[#allocation2 + $0x8] sm:$0xff]
        %v1174 = vld [vmem:[#allocation2 + $0x18] sm:$0xff]
        %1179 = vrot.lane.b32.xlu0 %v1171, 120
        %v1180 = vpop.permute.xlu0 %1179
        %1181 = vrot.lane.b32.xlu0 %v1173, 120
        %v1182 = vpop.permute.xlu0 %1181
        %1183 = vrot.lane.b32.xlu0 %v1172, 120
        %v1184 = vpop.permute.xlu0 %1183
        %1185 = vrot.lane.b32.xlu0 %v1174, 120
        %v1186 = vpop.permute.xlu0 %1185
        %vm1187 = vcmask 982016
        %v1188 = vsel %vm1187, %v1180, %v1182
        %v1189 = vsel %vm1187, %v1184, %v1186
        %v1192 = vmax.f32 %v1171, %v1188
        %v1193 = vmax.f32 %v1172, %v1189
        %v1194 = vld [vmem:[#allocation2] sm:$0xfe]
        %v1195 = vld [vmem:[#allocation2 + $0x20] sm:$0x1]
        %v1196 = vld [vmem:[#allocation2 + $0x8] sm:$0xfe]
        %v1197 = vld [vmem:[#allocation2 + $0x28] sm:$0x1]
        %1202 = vrot.lane.b32.xlu0 %v1194, 120
        %v1203 = vpop.permute.xlu0 %1202
        %1204 = vrot.lane.b32.xlu0 %v1196, 120
        %v1205 = vpop.permute.xlu0 %1204
        %1206 = vrot.lane.b32.xlu0 %v1195, 120
        %v1207 = vpop.permute.xlu0 %1206
        %1208 = vrot.lane.b32.xlu0 %v1197, 120
        %v1209 = vpop.permute.xlu0 %1208
        %v1210 = vsel %vm1187, %v1203, %v1205
        %v1211 = vsel %vm1187, %v1207, %v1209
        %v1214 = vmax.f32 %v1194, %v1210
        %v1215 = vmax.f32 %v1195, %v1211
        %vm1219 = vcmask 1046528
        %v1220 = vrot.slane %v1214, 1
        %v1221 = vrot.slane %v1193, 1
        %v1222 = vsel %vm1219, %v1220, %v1221
        %v1223 = vrot.slane %v1215, 1
        %v1224 = vsel %vm1219, %v1221, %v1223
        %v1227 = vmax.f32 %v1192, %v1222
        %v1228 = vmax.f32 %v1193, %v1224
        %1229 = vst [vmem:[#allocation4 + $0x1] sm:$0xff] %v1227
        %1230 = vst [vmem:[#allocation4 + $0x9] sm:$0xff] %v1228
        %v1231 = vld [vmem:[%s9] sm:$0x1]
        %v1233 = vlaneseq
        %v1234 = vshrl.u32 %v1233, 7
        %v1235 = vsub.s32 0, %v1234
        %v1236 = vrot.slane %v1231, %v1235
        %v1238 = vld [vmem:[#allocation4] ss:$2 sm:$0xff]
        %v1239 = vpack.c.bf16 %v1238, %v1238
        %v1240 = vld [vmem:[%s7] sm:$0xf]
        %v1241 = vld [vmem:[%s7 + $0x4] sm:$0xf]
        %v1242 = vld [vmem:[%s7 + $0x8] sm:$0xf]
        %v1243 = vld [vmem:[%s7 + $0xc] sm:$0xf]
        %v1244 = vld [vmem:[%s7 + $0x10] sm:$0xf]
        %v1245 = vld [vmem:[%s7 + $0x14] sm:$0xf]
        %v1246 = vld [vmem:[%s7 + $0x18] sm:$0xf]
        %v1247 = vld [vmem:[%s7 + $0x1c] sm:$0xf]
        %v1248 = vld [vmem:[%s7 + $0x20] sm:$0xf]
        %v1249 = vld [vmem:[%s7 + $0x24] sm:$0xf]
        %v1250 = vld [vmem:[%s7 + $0x28] sm:$0xf]
        %v1251 = vld [vmem:[%s7 + $0x2c] sm:$0xf]
        %v1252 = vld [vmem:[%s7 + $0x30] sm:$0xf]
        %v1253 = vld [vmem:[%s7 + $0x34] sm:$0xf]
        %v1254 = vld [vmem:[%s7 + $0x38] sm:$0xf]
        %v1255 = vld [vmem:[%s7 + $0x3c] sm:$0xf]
        %v1272 = vunpack.c.l.b16 %v1240
        %v1273 = vunpack.c.l.b16 %v1241
        %v1274 = vunpack.c.l.b16 %v1242
        %v1275 = vunpack.c.l.b16 %v1243
        %v1276 = vunpack.c.l.b16 %v1244
        %v1277 = vunpack.c.l.b16 %v1245
        %v1278 = vunpack.c.l.b16 %v1246
        %v1279 = vunpack.c.l.b16 %v1247
        %v1280 = vunpack.c.l.b16 %v1248
        %v1281 = vunpack.c.l.b16 %v1249
        %v1282 = vunpack.c.l.b16 %v1250
        %v1283 = vunpack.c.l.b16 %v1251
        %v1284 = vunpack.c.l.b16 %v1252
        %v1285 = vunpack.c.l.b16 %v1253
        %v1286 = vunpack.c.l.b16 %v1254
        %v1287 = vunpack.c.l.b16 %v1255
        %v1288 = vpack.c.b16 %v1273, %v1272
        %v1289 = vpack.c.b16 %v1275, %v1274
        %v1290 = vpack.c.b16 %v1277, %v1276
        %v1291 = vpack.c.b16 %v1279, %v1278
        %v1292 = vpack.c.b16 %v1281, %v1280
        %v1293 = vpack.c.b16 %v1283, %v1282
        %v1294 = vpack.c.b16 %v1285, %v1284
        %v1295 = vpack.c.b16 %v1287, %v1286
        %1304 = vmatprep.subr.bf16.mxu0 0
        %1305 = vmatpush1.bf16.msra.mxu0 %v1288
        %1306 = vmatprep.subr.bf16.mxu0 0
        %1307 = vmatpush1.bf16.msra.mxu0 %v1289
        %1308 = vmatprep.subr.bf16.mxu0 0
        %1309 = vmatpush1.bf16.msra.mxu0 %v1290
        %1310 = vmatprep.subr.bf16.mxu0 0
        %1311 = vmatpush1.bf16.msra.mxu0 %v1291
        %1312 = vmatprep.subr.bf16.mxu0 0
        %1313 = vmatpush1.bf16.msra.mxu0 %v1292
        %1314 = vmatprep.subr.bf16.mxu0 0
        %1315 = vmatpush1.bf16.msra.mxu0 %v1293
        %1316 = vmatprep.subr.bf16.mxu0 0
        %1317 = vmatpush1.bf16.msra.mxu0 %v1294
        %1318 = vmatprep.subr.bf16.mxu0 0
        %1319 = vmatpush1.bf16.msra.mxu0 %v1295
        %1320 = vmatprep.subr.bf16.mxu0 0
        %1321 = vmatpush1.bf16.msra.mxu0 0
        %1322 = vmatprep.subr.bf16.mxu0 0
        %1323 = vmatpush1.bf16.msra.mxu0 0
        %1324 = vmatprep.subr.bf16.mxu0 0
        %1325 = vmatpush1.bf16.msra.mxu0 0
        %1326 = vmatprep.subr.bf16.mxu0 0
        %1327 = vmatpush1.bf16.msra.mxu0 0
        %1328 = vmatprep.subr.bf16.mxu0 0
        %1329 = vmatpush1.bf16.msra.mxu0 0
        %1330 = vmatprep.subr.bf16.mxu0 0
        %1331 = vmatpush1.bf16.msra.mxu0 0
        %1332 = vmatprep.subr.bf16.mxu0 0
        %1333 = vmatpush1.bf16.msra.mxu0 0
        %1334 = vmatprep.subr.bf16.mxu0 0
        %1335 = vmatpush1.bf16.msra.mxu0 0
        %1336 = vmatprep.mubr.bf16.mxu0 0
        %1337 = vmatmul.mubr.bf16.gmra.mrb[0].mxu0 %v1239
        %v1338 = vpop.f32.mrb[0].mxu0
        %v1339 = vadd.f32 0.0, %v1338
        %v1340 = vpop.f32.mrb[0].mxu0
        %v1341 = vpop.f32.mrb[0].mxu0
        %v1342 = vpop.f32.mrb[0].mxu0
        %1343 = vdwg.mxu0
        %v1344 = vadd.f32 %v1236, %v1339
        %v1345 = vld [vmem:[#allocation5] ss:$2 sm:$0xff]
        %v1346 = vpack.c.bf16 %v1345, %v1345
        %v1347 = vld [vmem:[%s8] sm:$0xf]
        %v1348 = vld [vmem:[%s8 + $0x4] sm:$0xf]
        %v1349 = vld [vmem:[%s8 + $0x8] sm:$0xf]
        %v1350 = vld [vmem:[%s8 + $0xc] sm:$0xf]
        %v1351 = vld [vmem:[%s8 + $0x10] sm:$0xf]
        %v1352 = vld [vmem:[%s8 + $0x14] sm:$0xf]
        %v1353 = vld [vmem:[%s8 + $0x18] sm:$0xf]
        %v1354 = vld [vmem:[%s8 + $0x1c] sm:$0xf]
        %v1355 = vld [vmem:[%s8 + $0x20] sm:$0xf]
        %v1356 = vld [vmem:[%s8 + $0x24] sm:$0xf]
        %v1357 = vld [vmem:[%s8 + $0x28] sm:$0xf]
        %v1358 = vld [vmem:[%s8 + $0x2c] sm:$0xf]
        %v1359 = vld [vmem:[%s8 + $0x30] sm:$0xf]
        %v1360 = vld [vmem:[%s8 + $0x34] sm:$0xf]
        %v1361 = vld [vmem:[%s8 + $0x38] sm:$0xf]
        %v1362 = vld [vmem:[%s8 + $0x3c] sm:$0xf]
        %v1379 = vunpack.c.l.b16 %v1347
        %v1380 = vunpack.c.l.b16 %v1348
        %v1381 = vunpack.c.l.b16 %v1349
        %v1382 = vunpack.c.l.b16 %v1350
        %v1383 = vunpack.c.l.b16 %v1351
        %v1384 = vunpack.c.l.b16 %v1352
        %v1385 = vunpack.c.l.b16 %v1353
        %v1386 = vunpack.c.l.b16 %v1354
        %v1387 = vunpack.c.l.b16 %v1355
        %v1388 = vunpack.c.l.b16 %v1356
        %v1389 = vunpack.c.l.b16 %v1357
        %v1390 = vunpack.c.l.b16 %v1358
        %v1391 = vunpack.c.l.b16 %v1359
        %v1392 = vunpack.c.l.b16 %v1360
        %v1393 = vunpack.c.l.b16 %v1361
        %v1394 = vunpack.c.l.b16 %v1362
        %v1395 = vpack.c.b16 %v1380, %v1379
        %v1396 = vpack.c.b16 %v1382, %v1381
        %v1397 = vpack.c.b16 %v1384, %v1383
        %v1398 = vpack.c.b16 %v1386, %v1385
        %v1399 = vpack.c.b16 %v1388, %v1387
        %v1400 = vpack.c.b16 %v1390, %v1389
        %v1401 = vpack.c.b16 %v1392, %v1391
        %v1402 = vpack.c.b16 %v1394, %v1393
        %1411 = vmatprep.subr.bf16.mxu0 0
        %1412 = vmatpush1.bf16.msra.mxu0 %v1395
        %1413 = vmatprep.subr.bf16.mxu0 0
        %1414 = vmatpush1.bf16.msra.mxu0 %v1396
        %1415 = vmatprep.subr.bf16.mxu0 0
        %1416 = vmatpush1.bf16.msra.mxu0 %v1397
        %1417 = vmatprep.subr.bf16.mxu0 0
        %1418 = vmatpush1.bf16.msra.mxu0 %v1398
        %1419 = vmatprep.subr.bf16.mxu0 0
        %1420 = vmatpush1.bf16.msra.mxu0 %v1399
        %1421 = vmatprep.subr.bf16.mxu0 0
        %1422 = vmatpush1.bf16.msra.mxu0 %v1400
        %1423 = vmatprep.subr.bf16.mxu0 0
        %1424 = vmatpush1.bf16.msra.mxu0 %v1401
        %1425 = vmatprep.subr.bf16.mxu0 0
        %1426 = vmatpush1.bf16.msra.mxu0 %v1402
        %1427 = vmatprep.subr.bf16.mxu0 0
        %1428 = vmatpush1.bf16.msra.mxu0 0
        %1429 = vmatprep.subr.bf16.mxu0 0
        %1430 = vmatpush1.bf16.msra.mxu0 0
        %1431 = vmatprep.subr.bf16.mxu0 0
        %1432 = vmatpush1.bf16.msra.mxu0 0
        %1433 = vmatprep.subr.bf16.mxu0 0
        %1434 = vmatpush1.bf16.msra.mxu0 0
        %1435 = vmatprep.subr.bf16.mxu0 0
        %1436 = vmatpush1.bf16.msra.mxu0 0
        %1437 = vmatprep.subr.bf16.mxu0 0
        %1438 = vmatpush1.bf16.msra.mxu0 0
        %1439 = vmatprep.subr.bf16.mxu0 0
        %1440 = vmatpush1.bf16.msra.mxu0 0
        %1441 = vmatprep.subr.bf16.mxu0 0
        %1442 = vmatpush1.bf16.msra.mxu0 0
        %1443 = vmatprep.mubr.bf16.mxu0 0
        %1444 = vmatmul.mubr.bf16.gmra.mrb[0].mxu0 %v1346
        %v1445 = vpop.f32.mrb[0].mxu0
        %v1446 = vadd.f32 0.0, %v1445
        %v1447 = vpop.f32.mrb[0].mxu0
        %v1448 = vpop.f32.mrb[0].mxu0
        %v1449 = vpop.f32.mrb[0].mxu0
        %1450 = vdwg.mxu0
        %v1451 = vadd.f32 %v1344, %v1446
        %s1452 = scalar_lea.vmem [#allocation4], 1
        %v1453 = vld [vmem:[%s1452] ss:$2 sm:$0xff]
        %v1454 = vpack.c.bf16 %v1453, %v1453
        %s1455 = scalar_lea.vmem %s7, 64
        %v1456 = vld [vmem:[%s1455] sm:$0xf]
        %v1457 = vld [vmem:[%s1455 + $0x4] sm:$0xf]
        %v1458 = vld [vmem:[%s1455 + $0x8] sm:$0xf]
        %v1459 = vld [vmem:[%s1455 + $0xc] sm:$0xf]
        %v1460 = vld [vmem:[%s1455 + $0x10] sm:$0xf]
        %v1461 = vld [vmem:[%s1455 + $0x14] sm:$0xf]
        %v1462 = vld [vmem:[%s1455 + $0x18] sm:$0xf]
        %v1463 = vld [vmem:[%s1455 + $0x1c] sm:$0xf]
        %v1464 = vld [vmem:[%s1455 + $0x20] sm:$0xf]
        %v1465 = vld [vmem:[%s1455 + $0x24] sm:$0xf]
        %v1466 = vld [vmem:[%s1455 + $0x28] sm:$0xf]
        %v1467 = vld [vmem:[%s1455 + $0x2c] sm:$0xf]
        %v1468 = vld [vmem:[%s1455 + $0x30] sm:$0xf]
        %v1469 = vld [vmem:[%s1455 + $0x34] sm:$0xf]
        %v1470 = vld [vmem:[%s1455 + $0x38] sm:$0xf]
        %v1471 = vld [vmem:[%s1455 + $0x3c] sm:$0xf]
        %v1488 = vunpack.c.l.b16 %v1456
        %v1489 = vunpack.c.l.b16 %v1457
        %v1490 = vunpack.c.l.b16 %v1458
        %v1491 = vunpack.c.l.b16 %v1459
        %v1492 = vunpack.c.l.b16 %v1460
        %v1493 = vunpack.c.l.b16 %v1461
        %v1494 = vunpack.c.l.b16 %v1462
        %v1495 = vunpack.c.l.b16 %v1463
        %v1496 = vunpack.c.l.b16 %v1464
        %v1497 = vunpack.c.l.b16 %v1465
        %v1498 = vunpack.c.l.b16 %v1466
        %v1499 = vunpack.c.l.b16 %v1467
        %v1500 = vunpack.c.l.b16 %v1468
        %v1501 = vunpack.c.l.b16 %v1469
        %v1502 = vunpack.c.l.b16 %v1470
        %v1503 = vunpack.c.l.b16 %v1471
        %v1504 = vpack.c.b16 %v1489, %v1488
        %v1505 = vpack.c.b16 %v1491, %v1490
        %v1506 = vpack.c.b16 %v1493, %v1492
        %v1507 = vpack.c.b16 %v1495, %v1494
        %v1508 = vpack.c.b16 %v1497, %v1496
        %v1509 = vpack.c.b16 %v1499, %v1498
        %v1510 = vpack.c.b16 %v1501, %v1500
        %v1511 = vpack.c.b16 %v1503, %v1502
        %1520 = vmatprep.subr.bf16.mxu0 0
        %1521 = vmatpush1.bf16.msra.mxu0 %v1504
        %1522 = vmatprep.subr.bf16.mxu0 0
        %1523 = vmatpush1.bf16.msra.mxu0 %v1505
        %1524 = vmatprep.subr.bf16.mxu0 0
        %1525 = vmatpush1.bf16.msra.mxu0 %v1506
        %1526 = vmatprep.subr.bf16.mxu0 0
        %1527 = vmatpush1.bf16.msra.mxu0 %v1507
        %1528 = vmatprep.subr.bf16.mxu0 0
        %1529 = vmatpush1.bf16.msra.mxu0 %v1508
        %1530 = vmatprep.subr.bf16.mxu0 0
        %1531 = vmatpush1.bf16.msra.mxu0 %v1509
        %1532 = vmatprep.subr.bf16.mxu0 0
        %1533 = vmatpush1.bf16.msra.mxu0 %v1510
        %1534 = vmatprep.subr.bf16.mxu0 0
        %1535 = vmatpush1.bf16.msra.mxu0 %v1511
        %1536 = vmatprep.subr.bf16.mxu0 0
        %1537 = vmatpush1.bf16.msra.mxu0 0
        %1538 = vmatprep.subr.bf16.mxu0 0
        %1539 = vmatpush1.bf16.msra.mxu0 0
        %1540 = vmatprep.subr.bf16.mxu0 0
        %1541 = vmatpush1.bf16.msra.mxu0 0
        %1542 = vmatprep.subr.bf16.mxu0 0
        %1543 = vmatpush1.bf16.msra.mxu0 0
        %1544 = vmatprep.subr.bf16.mxu0 0
        %1545 = vmatpush1.bf16.msra.mxu0 0
        %1546 = vmatprep.subr.bf16.mxu0 0
        %1547 = vmatpush1.bf16.msra.mxu0 0
        %1548 = vmatprep.subr.bf16.mxu0 0
        %1549 = vmatpush1.bf16.msra.mxu0 0
        %1550 = vmatprep.subr.bf16.mxu0 0
        %1551 = vmatpush1.bf16.msra.mxu0 0
        %1552 = vmatprep.mubr.bf16.mxu0 0
        %1553 = vmatmul.mubr.bf16.gmra.mrb[0].mxu0 %v1454
        %v1554 = vpop.f32.mrb[0].mxu0
        %v1555 = vadd.f32 0.0, %v1554
        %v1556 = vpop.f32.mrb[0].mxu0
        %v1557 = vpop.f32.mrb[0].mxu0
        %v1558 = vpop.f32.mrb[0].mxu0
        %1559 = vdwg.mxu0
        %v1560 = vadd.f32 %v1451, %v1555
        %s1561 = scalar_lea.vmem [#allocation5], 1
        %v1562 = vld [vmem:[%s1561] ss:$2 sm:$0xff]
        %v1563 = vpack.c.bf16 %v1562, %v1562
        %s1564 = scalar_lea.vmem %s8, 64
        %v1565 = vld [vmem:[%s1564] sm:$0xf]
        %v1566 = vld [vmem:[%s1564 + $0x4] sm:$0xf]
        %v1567 = vld [vmem:[%s1564 + $0x8] sm:$0xf]
        %v1568 = vld [vmem:[%s1564 + $0xc] sm:$0xf]
        %v1569 = vld [vmem:[%s1564 + $0x10] sm:$0xf]
        %v1570 = vld [vmem:[%s1564 + $0x14] sm:$0xf]
        %v1571 = vld [vmem:[%s1564 + $0x18] sm:$0xf]
        %v1572 = vld [vmem:[%s1564 + $0x1c] sm:$0xf]
        %v1573 = vld [vmem:[%s1564 + $0x20] sm:$0xf]
        %v1574 = vld [vmem:[%s1564 + $0x24] sm:$0xf]
        %v1575 = vld [vmem:[%s1564 + $0x28] sm:$0xf]
        %v1576 = vld [vmem:[%s1564 + $0x2c] sm:$0xf]
        %v1577 = vld [vmem:[%s1564 + $0x30] sm:$0xf]
        %v1578 = vld [vmem:[%s1564 + $0x34] sm:$0xf]
        %v1579 = vld [vmem:[%s1564 + $0x38] sm:$0xf]
        %v1580 = vld [vmem:[%s1564 + $0x3c] sm:$0xf]
        %v1597 = vunpack.c.l.b16 %v1565
        %v1598 = vunpack.c.l.b16 %v1566
        %v1599 = vunpack.c.l.b16 %v1567
        %v1600 = vunpack.c.l.b16 %v1568
        %v1601 = vunpack.c.l.b16 %v1569
        %v1602 = vunpack.c.l.b16 %v1570
        %v1603 = vunpack.c.l.b16 %v1571
        %v1604 = vunpack.c.l.b16 %v1572
        %v1605 = vunpack.c.l.b16 %v1573
        %v1606 = vunpack.c.l.b16 %v1574
        %v1607 = vunpack.c.l.b16 %v1575
        %v1608 = vunpack.c.l.b16 %v1576
        %v1609 = vunpack.c.l.b16 %v1577
        %v1610 = vunpack.c.l.b16 %v1578
        %v1611 = vunpack.c.l.b16 %v1579
        %v1612 = vunpack.c.l.b16 %v1580
        %v1613 = vpack.c.b16 %v1598, %v1597
        %v1614 = vpack.c.b16 %v1600, %v1599
        %v1615 = vpack.c.b16 %v1602, %v1601
        %v1616 = vpack.c.b16 %v1604, %v1603
        %v1617 = vpack.c.b16 %v1606, %v1605
        %v1618 = vpack.c.b16 %v1608, %v1607
        %v1619 = vpack.c.b16 %v1610, %v1609
        %v1620 = vpack.c.b16 %v1612, %v1611
        %1629 = vmatprep.subr.bf16.mxu0 0
        %1630 = vmatpush1.bf16.msra.mxu0 %v1613
        %1631 = vmatprep.subr.bf16.mxu0 0
        %1632 = vmatpush1.bf16.msra.mxu0 %v1614
        %1633 = vmatprep.subr.bf16.mxu0 0
        %1634 = vmatpush1.bf16.msra.mxu0 %v1615
        %1635 = vmatprep.subr.bf16.mxu0 0
        %1636 = vmatpush1.bf16.msra.mxu0 %v1616
        %1637 = vmatprep.subr.bf16.mxu0 0
        %1638 = vmatpush1.bf16.msra.mxu0 %v1617
        %1639 = vmatprep.subr.bf16.mxu0 0
        %1640 = vmatpush1.bf16.msra.mxu0 %v1618
        %1641 = vmatprep.subr.bf16.mxu0 0
        %1642 = vmatpush1.bf16.msra.mxu0 %v1619
        %1643 = vmatprep.subr.bf16.mxu0 0
        %1644 = vmatpush1.bf16.msra.mxu0 %v1620
        %1645 = vmatprep.subr.bf16.mxu0 0
        %1646 = vmatpush1.bf16.msra.mxu0 0
        %1647 = vmatprep.subr.bf16.mxu0 0
        %1648 = vmatpush1.bf16.msra.mxu0 0
        %1649 = vmatprep.subr.bf16.mxu0 0
        %1650 = vmatpush1.bf16.msra.mxu0 0
        %1651 = vmatprep.subr.bf16.mxu0 0
        %1652 = vmatpush1.bf16.msra.mxu0 0
        %1653 = vmatprep.subr.bf16.mxu0 0
        %1654 = vmatpush1.bf16.msra.mxu0 0
        %1655 = vmatprep.subr.bf16.mxu0 0
        %1656 = vmatpush1.bf16.msra.mxu0 0
        %1657 = vmatprep.subr.bf16.mxu0 0
        %1658 = vmatpush1.bf16.msra.mxu0 0
        %1659 = vmatprep.subr.bf16.mxu0 0
        %1660 = vmatpush1.bf16.msra.mxu0 0
        %1661 = vmatprep.mubr.bf16.mxu0 0
        %1662 = vmatmul.mubr.bf16.gmra.mrb[0].mxu0 %v1563
        %v1663 = vpop.f32.mrb[0].mxu0
        %v1664 = vadd.f32 0.0, %v1663
        %v1665 = vpop.f32.mrb[0].mxu0
        %v1666 = vpop.f32.mrb[0].mxu0
        %v1667 = vpop.f32.mrb[0].mxu0
        %1668 = vdwg.mxu0
        %v1669 = vadd.f32 %v1560, %v1664
        %s1670 = scalar_lea.vmem [#allocation4], 2
        %v1671 = vld [vmem:[%s1670] ss:$2 sm:$0xff]
        %v1672 = vpack.c.bf16 %v1671, %v1671
        %s1673 = scalar_lea.vmem %s7, 128
        %v1674 = vld [vmem:[%s1673] sm:$0xf]
        %v1675 = vld [vmem:[%s1673 + $0x4] sm:$0xf]
        %v1676 = vld [vmem:[%s1673 + $0x8] sm:$0xf]
        %v1677 = vld [vmem:[%s1673 + $0xc] sm:$0xf]
        %v1678 = vld [vmem:[%s1673 + $0x10] sm:$0xf]
        %v1679 = vld [vmem:[%s1673 + $0x14] sm:$0xf]
        %v1680 = vld [vmem:[%s1673 + $0x18] sm:$0xf]
        %v1681 = vld [vmem:[%s1673 + $0x1c] sm:$0xf]
        %v1682 = vld [vmem:[%s1673 + $0x20] sm:$0xf]
        %v1683 = vld [vmem:[%s1673 + $0x24] sm:$0xf]
        %v1684 = vld [vmem:[%s1673 + $0x28] sm:$0xf]
        %v1685 = vld [vmem:[%s1673 + $0x2c] sm:$0xf]
        %v1686 = vld [vmem:[%s1673 + $0x30] sm:$0xf]
        %v1687 = vld [vmem:[%s1673 + $0x34] sm:$0xf]
        %v1688 = vld [vmem:[%s1673 + $0x38] sm:$0xf]
        %v1689 = vld [vmem:[%s1673 + $0x3c] sm:$0xf]
        %v1706 = vunpack.c.l.b16 %v1674
        %v1707 = vunpack.c.l.b16 %v1675
        %v1708 = vunpack.c.l.b16 %v1676
        %v1709 = vunpack.c.l.b16 %v1677
        %v1710 = vunpack.c.l.b16 %v1678
        %v1711 = vunpack.c.l.b16 %v1679
        %v1712 = vunpack.c.l.b16 %v1680
        %v1713 = vunpack.c.l.b16 %v1681
        %v1714 = vunpack.c.l.b16 %v1682
        %v1715 = vunpack.c.l.b16 %v1683
        %v1716 = vunpack.c.l.b16 %v1684
        %v1717 = vunpack.c.l.b16 %v1685
        %v1718 = vunpack.c.l.b16 %v1686
        %v1719 = vunpack.c.l.b16 %v1687
        %v1720 = vunpack.c.l.b16 %v1688
        %v1721 = vunpack.c.l.b16 %v1689
        %v1722 = vpack.c.b16 %v1707, %v1706
        %v1723 = vpack.c.b16 %v1709, %v1708
        %v1724 = vpack.c.b16 %v1711, %v1710
        %v1725 = vpack.c.b16 %v1713, %v1712
        %v1726 = vpack.c.b16 %v1715, %v1714
        %v1727 = vpack.c.b16 %v1717, %v1716
        %v1728 = vpack.c.b16 %v1719, %v1718
        %v1729 = vpack.c.b16 %v1721, %v1720
        %1738 = vmatprep.subr.bf16.mxu0 0
        %1739 = vmatpush1.bf16.msra.mxu0 %v1722
        %1740 = vmatprep.subr.bf16.mxu0 0
        %1741 = vmatpush1.bf16.msra.mxu0 %v1723
        %1742 = vmatprep.subr.bf16.mxu0 0
        %1743 = vmatpush1.bf16.msra.mxu0 %v1724
        %1744 = vmatprep.subr.bf16.mxu0 0
        %1745 = vmatpush1.bf16.msra.mxu0 %v1725
        %1746 = vmatprep.subr.bf16.mxu0 0
        %1747 = vmatpush1.bf16.msra.mxu0 %v1726
        %1748 = vmatprep.subr.bf16.mxu0 0
        %1749 = vmatpush1.bf16.msra.mxu0 %v1727
        %1750 = vmatprep.subr.bf16.mxu0 0
        %1751 = vmatpush1.bf16.msra.mxu0 %v1728
        %1752 = vmatprep.subr.bf16.mxu0 0
        %1753 = vmatpush1.bf16.msra.mxu0 %v1729
        %1754 = vmatprep.subr.bf16.mxu0 0
        %1755 = vmatpush1.bf16.msra.mxu0 0
        %1756 = vmatprep.subr.bf16.mxu0 0
        %1757 = vmatpush1.bf16.msra.mxu0 0
        %1758 = vmatprep.subr.bf16.mxu0 0
        %1759 = vmatpush1.bf16.msra.mxu0 0
        %1760 = vmatprep.subr.bf16.mxu0 0
        %1761 = vmatpush1.bf16.msra.mxu0 0
        %1762 = vmatprep.subr.bf16.mxu0 0
        %1763 = vmatpush1.bf16.msra.mxu0 0
        %1764 = vmatprep.subr.bf16.mxu0 0
        %1765 = vmatpush1.bf16.msra.mxu0 0
        %1766 = vmatprep.subr.bf16.mxu0 0
        %1767 = vmatpush1.bf16.msra.mxu0 0
        %1768 = vmatprep.subr.bf16.mxu0 0
        %1769 = vmatpush1.bf16.msra.mxu0 0
        %1770 = vmatprep.mubr.bf16.mxu0 0
        %1771 = vmatmul.mubr.bf16.gmra.mrb[0].mxu0 %v1672
        %v1772 = vpop.f32.mrb[0].mxu0
        %v1773 = vadd.f32 0.0, %v1772
        %v1774 = vpop.f32.mrb[0].mxu0
        %v1775 = vpop.f32.mrb[0].mxu0
        %v1776 = vpop.f32.mrb[0].mxu0
        %1777 = vdwg.mxu0
        %v1778 = vadd.f32 %v1669, %v1773
        %s1779 = scalar_lea.vmem [#allocation5], 2
        %v1780 = vld [vmem:[%s1779] ss:$2 sm:$0xff]
        %v1781 = vpack.c.bf16 %v1780, %v1780
        %s1782 = scalar_lea.vmem %s8, 128
        %v1783 = vld [vmem:[%s1782] sm:$0xf]
        %v1784 = vld [vmem:[%s1782 + $0x4] sm:$0xf]
        %v1785 = vld [vmem:[%s1782 + $0x8] sm:$0xf]
        %v1786 = vld [vmem:[%s1782 + $0xc] sm:$0xf]
        %v1787 = vld [vmem:[%s1782 + $0x10] sm:$0xf]
        %v1788 = vld [vmem:[%s1782 + $0x14] sm:$0xf]
        %v1789 = vld [vmem:[%s1782 + $0x18] sm:$0xf]
        %v1790 = vld [vmem:[%s1782 + $0x1c] sm:$0xf]
        %v1791 = vld [vmem:[%s1782 + $0x20] sm:$0xf]
        %v1792 = vld [vmem:[%s1782 + $0x24] sm:$0xf]
        %v1793 = vld [vmem:[%s1782 + $0x28] sm:$0xf]
        %v1794 = vld [vmem:[%s1782 + $0x2c] sm:$0xf]
        %v1795 = vld [vmem:[%s1782 + $0x30] sm:$0xf]
        %v1796 = vld [vmem:[%s1782 + $0x34] sm:$0xf]
        %v1797 = vld [vmem:[%s1782 + $0x38] sm:$0xf]
        %v1798 = vld [vmem:[%s1782 + $0x3c] sm:$0xf]
        %v1815 = vunpack.c.l.b16 %v1783
        %v1816 = vunpack.c.l.b16 %v1784
        %v1817 = vunpack.c.l.b16 %v1785
        %v1818 = vunpack.c.l.b16 %v1786
        %v1819 = vunpack.c.l.b16 %v1787
        %v1820 = vunpack.c.l.b16 %v1788
        %v1821 = vunpack.c.l.b16 %v1789
        %v1822 = vunpack.c.l.b16 %v1790
        %v1823 = vunpack.c.l.b16 %v1791
        %v1824 = vunpack.c.l.b16 %v1792
        %v1825 = vunpack.c.l.b16 %v1793
        %v1826 = vunpack.c.l.b16 %v1794
        %v1827 = vunpack.c.l.b16 %v1795
        %v1828 = vunpack.c.l.b16 %v1796
        %v1829 = vunpack.c.l.b16 %v1797
        %v1830 = vunpack.c.l.b16 %v1798
        %v1831 = vpack.c.b16 %v1816, %v1815
        %v1832 = vpack.c.b16 %v1818, %v1817
        %v1833 = vpack.c.b16 %v1820, %v1819
        %v1834 = vpack.c.b16 %v1822, %v1821
        %v1835 = vpack.c.b16 %v1824, %v1823
        %v1836 = vpack.c.b16 %v1826, %v1825
        %v1837 = vpack.c.b16 %v1828, %v1827
        %v1838 = vpack.c.b16 %v1830, %v1829
        %1847 = vmatprep.subr.bf16.mxu0 0
        %1848 = vmatpush1.bf16.msra.mxu0 %v1831
        %1849 = vmatprep.subr.bf16.mxu0 0
        %1850 = vmatpush1.bf16.msra.mxu0 %v1832
        %1851 = vmatprep.subr.bf16.mxu0 0
        %1852 = vmatpush1.bf16.msra.mxu0 %v1833
        %1853 = vmatprep.subr.bf16.mxu0 0
        %1854 = vmatpush1.bf16.msra.mxu0 %v1834
        %1855 = vmatprep.subr.bf16.mxu0 0
        %1856 = vmatpush1.bf16.msra.mxu0 %v1835
        %1857 = vmatprep.subr.bf16.mxu0 0
        %1858 = vmatpush1.bf16.msra.mxu0 %v1836
        %1859 = vmatprep.subr.bf16.mxu0 0
        %1860 = vmatpush1.bf16.msra.mxu0 %v1837
        %1861 = vmatprep.subr.bf16.mxu0 0
        %1862 = vmatpush1.bf16.msra.mxu0 %v1838
        %1863 = vmatprep.subr.bf16.mxu0 0
        %1864 = vmatpush1.bf16.msra.mxu0 0
        %1865 = vmatprep.subr.bf16.mxu0 0
        %1866 = vmatpush1.bf16.msra.mxu0 0
        %1867 = vmatprep.subr.bf16.mxu0 0
        %1868 = vmatpush1.bf16.msra.mxu0 0
        %1869 = vmatprep.subr.bf16.mxu0 0
        %1870 = vmatpush1.bf16.msra.mxu0 0
        %1871 = vmatprep.subr.bf16.mxu0 0
        %1872 = vmatpush1.bf16.msra.mxu0 0
        %1873 = vmatprep.subr.bf16.mxu0 0
        %1874 = vmatpush1.bf16.msra.mxu0 0
        %1875 = vmatprep.subr.bf16.mxu0 0
        %1876 = vmatpush1.bf16.msra.mxu0 0
        %1877 = vmatprep.subr.bf16.mxu0 0
        %1878 = vmatpush1.bf16.msra.mxu0 0
        %1879 = vmatprep.mubr.bf16.mxu0 0
        %1880 = vmatmul.mubr.bf16.gmra.mrb[0].mxu0 %v1781
        %v1881 = vpop.f32.mrb[0].mxu0
        %v1882 = vadd.f32 0.0, %v1881
        %v1883 = vpop.f32.mrb[0].mxu0
        %v1884 = vpop.f32.mrb[0].mxu0
        %v1885 = vpop.f32.mrb[0].mxu0
        %1886 = vdwg.mxu0
        %v1887 = vadd.f32 %v1778, %v1882
        %v1888 = vmax.f32 %v1887, 0.0
        %v1889 = vpack.c.bf16 %v1888, %v1888
        %v1890 = vld [vmem:[%s10] sm:$0xf]
        %v1891 = vld [vmem:[%s10 + $0x4] sm:$0xf]
        %v1892 = vld [vmem:[%s10 + $0x8] sm:$0xf]
        %v1893 = vld [vmem:[%s10 + $0xc] sm:$0xf]
        %v1894 = vld [vmem:[%s10 + $0x10] sm:$0xf]
        %v1895 = vld [vmem:[%s10 + $0x14] sm:$0xf]
        %v1896 = vld [vmem:[%s10 + $0x18] sm:$0xf]
        %v1897 = vld [vmem:[%s10 + $0x1c] sm:$0xf]
        %v1898 = vld [vmem:[%s11] sm:$0x1]
        %v1900 = vlaneseq
        %v1901 = vshrl.u32 %v1900, 7
        %v1902 = vsub.s32 0, %v1901
        %v1903 = vrot.slane %v1898, %v1902
        %v1913 = vunpack.c.l.b16 %v1890
        %v1914 = vunpack.c.l.b16 %v1891
        %v1915 = vunpack.c.l.b16 %v1892
        %v1916 = vunpack.c.l.b16 %v1893
        %v1917 = vunpack.c.l.b16 %v1894
        %v1918 = vunpack.c.l.b16 %v1895
        %v1919 = vunpack.c.l.b16 %v1896
        %v1920 = vunpack.c.l.b16 %v1897
        %v1921 = vpack.c.b16 %v1914, %v1913
        %v1922 = vpack.c.b16 %v1916, %v1915
        %v1923 = vpack.c.b16 %v1918, %v1917
        %v1924 = vpack.c.b16 %v1920, %v1919
        %v1930 = vsel %vm994, %v1889, 0
        %1932 = vmatprep.subr.bf16.mxu0 0
        %1933 = vmatpush1.bf16.msra.mxu0 %v1921
        %1934 = vmatprep.subr.bf16.mxu0 0
        %1935 = vmatpush1.bf16.msra.mxu0 %v1922
        %1936 = vmatprep.subr.bf16.mxu0 0
        %1937 = vmatpush1.bf16.msra.mxu0 %v1923
        %1938 = vmatprep.subr.bf16.mxu0 0
        %1939 = vmatpush1.bf16.msra.mxu0 %v1924
        %1940 = vmatprep.subr.bf16.mxu0 0
        %1941 = vmatpush1.bf16.msra.mxu0 0
        %1942 = vmatprep.subr.bf16.mxu0 0
        %1943 = vmatpush1.bf16.msra.mxu0 0
        %1944 = vmatprep.subr.bf16.mxu0 0
        %1945 = vmatpush1.bf16.msra.mxu0 0
        %1946 = vmatprep.subr.bf16.mxu0 0
        %1947 = vmatpush1.bf16.msra.mxu0 0
        %1948 = vmatprep.subr.bf16.mxu0 0
        %1949 = vmatpush1.bf16.msra.mxu0 0
        %1950 = vmatprep.subr.bf16.mxu0 0
        %1951 = vmatpush1.bf16.msra.mxu0 0
        %1952 = vmatprep.subr.bf16.mxu0 0
        %1953 = vmatpush1.bf16.msra.mxu0 0
        %1954 = vmatprep.subr.bf16.mxu0 0
        %1955 = vmatpush1.bf16.msra.mxu0 0
        %1956 = vmatprep.subr.bf16.mxu0 0
        %1957 = vmatpush1.bf16.msra.mxu0 0
        %1958 = vmatprep.subr.bf16.mxu0 0
        %1959 = vmatpush1.bf16.msra.mxu0 0
        %1960 = vmatprep.subr.bf16.mxu0 0
        %1961 = vmatpush1.bf16.msra.mxu0 0
        %1962 = vmatprep.subr.bf16.mxu0 0
        %1963 = vmatpush1.bf16.msra.mxu0 0
        %1964 = vmatprep.mubr.bf16.mxu0 0
        %1965 = vmatmul.mubr.bf16.gmra.mrb[0].mxu0 %v1930
        %v1966 = vpop.f32.mrb[0].mxu0
        %v1967 = vadd.f32 %v1903, %v1966
        %v1968 = vpop.f32.mrb[0].mxu0
        %v1969 = vpop.f32.mrb[0].mxu0
        %v1970 = vpop.f32.mrb[0].mxu0
        %1971 = vdwg.mxu0
        %v1972 = vmax.f32 %v1967, 0.0
        %1973 = vst [vmem:[%s406] sm:$0xff] %v1972
        %s1974 = sand.u32 %s291, 1
        %s1975 = scalar_lea.sflag [#allocation7], %s1974
        %s1976 = sand.u32 %s291, 1
        %s1977 = smul.addr %s1976, 8
        %s1978 = scalar_lea.vmem [#allocation6], %s1977
        // Predicated region
        $region69: #{tpu_custom_call.1} parent=67 // pred_check
          %p1979 = pneg %p301
        $region70: #{tpu_custom_call.1} parent=67 // pred_check_branch
          %1981 = sbr.rel (%p1979) target = $region72
        $region71: #{tpu_custom_call.1} parent=67 // pred_region
          %s1983 = ssub.s32 128, 128
          %1984 = vsyncadd %s1975, %s1983
          %s1985 = smul.addr %s26, 128
          %s1986 = scalar_lea.hbm %s12, %s1985
          %s1988 = sshll.u32 %s1978, 4
          %s1989 = int_to_ptr.vmem [resolvable:$true] %s1988
          %1991 = dma.vmem_to_hbm [thread:$0]  %s1989, 128, %s1986, %s1975
        $region72: #{tpu_custom_call.1} parent=67 // pred_fallthru
          _
      $region68: #{tpu_custom_call.1} parent=5 // pred_fallthru
        _
      %p1992 = scmp.le.s32.totalorder 2, %s21
      // Predicated region
      $region73: #{tpu_custom_call.1} parent=5 // pred_check
        %p1993 = pneg %p1992
      $region74: #{tpu_custom_call.1} parent=5 // pred_check_branch
        %1995 = sbr.rel (%p1993) target = $region76
      $region75: #{tpu_custom_call.1} parent=5 // pred_region
        %s1996 = ssub.s32 %s21, 2
        // Predicated region
        $region77: #{tpu_custom_call.1} parent=75 // pred_check
          %p1997 = pneg %p307
        $region78: #{tpu_custom_call.1} parent=75 // pred_check_branch
          %1999 = sbr.rel (%p1997) target = $region80
        $region79: #{tpu_custom_call.1} parent=75 // pred_region
          %s2000 = sand.u32 %s292, 1
          %s2001 = scalar_lea.sflag [#allocation7], %s2000
          %s2002 = sand.u32 %s292, 1
          %s2003 = smul.addr %s2002, 8
          %s2004 = scalar_lea.vmem [#allocation6], %s2003
          %2005 = dma.done %s2001, 128
        $region80: #{tpu_custom_call.1} parent=75 // pred_fallthru
          _
      $region76: #{tpu_custom_call.1} parent=5 // pred_fallthru
        _
    $region6: #{tpu_custom_call.1} parent=1 // loop_footer
      %s25 = sadd.s32 1, %s21
    $region7: #{tpu_custom_call.1} parent=1 // loop_footer_branch
      %20 = sbr.rel target = $region3
    $region8: #{tpu_custom_call.1} parent=1 // loop_exit
      _
    %2006 = vsyncpa [#allocation7], 1
    %s2007 = scalar_lea.sflag [#allocation7], 1
    %2008 = vsyncpa %s2007, 1

// kernel: tpu_custom_call.1
$region0: #{tpu_custom_call.1}
  #allocation0 [shape = 'u32[]', space=smem, size = 0x4, offset = 0x4, fixed_abs, tag = 'smem constant byte address 0x4 - core index']
  #allocation1 [shape = 'u32[144,128]{1,0:T(1,128)}', space=vmem, size = 0x12000, scoped, tag = 'internal scratch']
  #allocation2 [shape = 'f32[17,136]{1,0:T(8,128)}', space=vmem, size = 0x6000, scoped, tag = 'scratch operand']
  #allocation3 [shape = 'f32[17,64]{1,0:T(8,128)}', space=vmem, size = 0x3000, scoped, tag = 'scratch operand']
  #allocation4 [shape = 'f32[17,128]{1,0:T(8,128)}', space=vmem, size = 0x3000, scoped, tag = 'scratch operand']
  #allocation5 [shape = 'f32[17,128]{1,0:T(8,128)}', space=vmem, size = 0x3000, scoped, tag = 'scratch operand']
  %s0 = inlined_call_operand.vmem [shape: bf16[2,3,16,96], index: 0, kind: input, shape index: {}]
  %s1 = inlined_call_operand.vmem [shape: bf16[3,96,128], index: 1, kind: input, shape index: {}]
  %s2 = inlined_call_operand.vmem [shape: f32[1,128], index: 2, kind: input, shape index: {}]
  %s3 = inlined_call_operand.vmem [shape: bf16[2,128,64], index: 3, kind: input, shape index: {}]
  %s4 = inlined_call_operand.vmem [shape: f32[1,64], index: 4, kind: input, shape index: {}]
  %s5 = inlined_call_operand.vmem [shape: bf16[2,64,128], index: 5, kind: input, shape index: {}]
  %s6 = inlined_call_operand.vmem [shape: f32[1,128], index: 6, kind: input, shape index: {}]
  %s7 = inlined_call_operand.vmem [shape: bf16[3,128,64], index: 7, kind: input, shape index: {}]
  %s8 = inlined_call_operand.vmem [shape: bf16[3,128,64], index: 8, kind: input, shape index: {}]
  %s9 = inlined_call_operand.vmem [shape: f32[1,64], index: 9, kind: input, shape index: {}]
  %s10 = inlined_call_operand.vmem [shape: bf16[64,128], index: 10, kind: input, shape index: {}]
  %s11 = inlined_call_operand.vmem [shape: f32[1,128], index: 11, kind: input, shape index: {}]
  %s12 = inlined_call_operand.hbm [shape: f32[2,8,128], index: 12, kind: output, shape index: {}]
  %s13 = sld [smem:[#allocation0]]
  $region81: #{tpu_custom_call.1} parent=0
    _
  %s15 = ssub.s32 1, %s13
  %s16 = scalar_select 0, %s15, %s13
  $region1: #{tpu_custom_call.1} parent=0
    #allocation6 [shape = 'u8[8192]{0}', space=vmem, size = 0x2000, scoped, tag = 'output window, operand 0']
    #allocation7 [shape = 's32[2]{0}', space=sflag, size = 0x8, scoped, tag = 'scoped memory for tpu_custom_call.1']
    %17 = vsyncpa [#allocation7], 0
    %s18 = scalar_lea.sflag [#allocation7], 1
    %19 = vsyncpa %s18, 0
    loop: start=0, step=1, limit=4
    $region2: #{tpu_custom_call.1} parent=1 // loop_pre_header
      _
    $region3: #{tpu_custom_call.1} parent=1 // loop_header
      %s21 = sphi 0, %s25
      %p22 = scmp.ge.s32.totalorder %s21, 4
      %s31 = sphi 0, %s33
      %s34 = sphi 0, %s31
      %s35 = sphi 0, %s34
      %s51 = sphi 0, %s35
      %s55 = sphi 0, %s55
      %s57 = sphi 0, %s55
      %s58 = sphi 0, %s57
      %s72 = sphi 0, %s58
      %s76 = sphi 0, %s76
      %s78 = sphi 0, %s76
      %s79 = sphi 0, %s78
      %s93 = sphi 0, %s79
      %s97 = sphi 0, %s97
      %s99 = sphi 0, %s97
      %s100 = sphi 0, %s99
      %s114 = sphi 0, %s100
      %s118 = sphi 0, %s118
      %s120 = sphi 0, %s118
      %s121 = sphi 0, %s120
      %s135 = sphi 0, %s121
      %s139 = sphi 0, %s139
      %s141 = sphi 0, %s139
      %s142 = sphi 0, %s141
      %s156 = sphi 0, %s142
      %s160 = sphi 0, %s160
      %s162 = sphi 0, %s160
      %s163 = sphi 0, %s162
      %s177 = sphi 0, %s163
      %s181 = sphi 0, %s181
      %s183 = sphi 0, %s181
      %s184 = sphi 0, %s183
      %s198 = sphi 0, %s184
      %s202 = sphi 0, %s202
      %s204 = sphi 0, %s202
      %s205 = sphi 0, %s204
      %s219 = sphi 0, %s205
      %s223 = sphi 0, %s223
      %s225 = sphi 0, %s223
      %s226 = sphi 0, %s225
      %s240 = sphi 0, %s226
      %s244 = sphi 0, %s244
      %s246 = sphi 0, %s244
      %s247 = sphi 0, %s246
      %s261 = sphi 0, %s247
      %s265 = sphi 0, %s265
      %s267 = sphi 0, %s265
      %s268 = sphi 0, %s267
      %s282 = sphi 0, %s268
      %s288 = sphi 0, %s290
      %s291 = sphi 0, %s288
      %s292 = sphi 0, %s291
      %s308 = sphi 0, %s292
    $region4: #{tpu_custom_call.1} parent=1 // loop_header_branch
      %24 = sbr.rel (%p22) target = $region8
    $region5: #{tpu_custom_call.1} parent=1 // loop_body
      %s26 = ssub.s32 %s21, 1
      %s27 = ssub.s32 %s21, 2
      %s28 = sadd.s32 %s21, 1
      %s29 = ssub.s32 %s21, %s28
      %p30 = scmp.eq.s32.totalorder %s29, 0
      %s32 = sadd.s32 %s31, 1
      %s33 = scalar_select %p30, %s31, %s32
      %p36 = pneg %p30
      %p37 = scmp.eq.s32.totalorder %s21, 1
      %p38 = por %p36, %p37
      %p39 = scmp.ne.s32.totalorder %s31, %s34
      %p40 = scmp.eq.s32.totalorder %s21, 0
      %p41 = por %p39, %p40
      %p42 = scmp.ne.s32.totalorder %s31, %s34
      %p43 = scmp.eq.s32.totalorder %s26, 1
      %p44 = por %p42, %p43
      %p45 = scmp.ne.s32.totalorder %s34, %s35
      %p46 = scmp.eq.s32.totalorder %s26, 0
      %p47 = por %p45, %p46
      %p48 = scmp.ne.s32.totalorder %s34, %s35
      %p49 = scmp.eq.s32.totalorder %s27, 1
      %p50 = por %p48, %p49
      %p52 = scmp.ne.s32.totalorder %s35, %s51
      %p53 = scmp.eq.s32.totalorder %s27, 0
      %p54 = por %p52, %p53
      %s56 = sadd.s32 %s55, 1
      %p59 = scmp.eq.s32.totalorder %s21, 1
      %p60 = scmp.ne.s32.totalorder %s55, %s57
      %p61 = scmp.eq.s32.totalorder %s21, 0
      %p62 = por %p60, %p61
      %p63 = scmp.ne.s32.totalorder %s55, %s57
      %p64 = scmp.eq.s32.totalorder %s26, 1
      %p65 = por %p63, %p64
      %p66 = scmp.ne.s32.totalorder %s57, %s58
      %p67 = scmp.eq.s32.totalorder %s26, 0
      %p68 = por %p66, %p67
      %p69 = scmp.ne.s32.totalorder %s57, %s58
      %p70 = scmp.eq.s32.totalorder %s27, 1
      %p71 = por %p69, %p70
      %p73 = scmp.ne.s32.totalorder %s58, %s72
      %p74 = scmp.eq.s32.totalorder %s27, 0
      %p75 = por %p73, %p74
      %s77 = sadd.s32 %s76, 1
      %p80 = scmp.eq.s32.totalorder %s21, 1
      %p81 = scmp.ne.s32.totalorder %s76, %s78
      %p82 = scmp.eq.s32.totalorder %s21, 0
      %p83 = por %p81, %p82
      %p84 = scmp.ne.s32.totalorder %s76, %s78
      %p85 = scmp.eq.s32.totalorder %s26, 1
      %p86 = por %p84, %p85
      %p87 = scmp.ne.s32.totalorder %s78, %s79
      %p88 = scmp.eq.s32.totalorder %s26, 0
      %p89 = por %p87, %p88
      %p90 = scmp.ne.s32.totalorder %s78, %s79
      %p91 = scmp.eq.s32.totalorder %s27, 1
      %p92 = por %p90, %p91
      %p94 = scmp.ne.s32.totalorder %s79, %s93
      %p95 = scmp.eq.s32.totalorder %s27, 0
      %p96 = por %p94, %p95
      %s98 = sadd.s32 %s97, 1
      %p101 = scmp.eq.s32.totalorder %s21, 1
      %p102 = scmp.ne.s32.totalorder %s97, %s99
      %p103 = scmp.eq.s32.totalorder %s21, 0
      %p104 = por %p102, %p103
      %p105 = scmp.ne.s32.totalorder %s97, %s99
      %p106 = scmp.eq.s32.totalorder %s26, 1
      %p107 = por %p105, %p106
      %p108 = scmp.ne.s32.totalorder %s99, %s100
      %p109 = scmp.eq.s32.totalorder %s26, 0
      %p110 = por %p108, %p109
      %p111 = scmp.ne.s32.totalorder %s99, %s100
      %p112 = scmp.eq.s32.totalorder %s27, 1
      %p113 = por %p111, %p112
      %p115 = scmp.ne.s32.totalorder %s100, %s114
      %p116 = scmp.eq.s32.totalorder %s27, 0
      %p117 = por %p115, %p116
      %s119 = sadd.s32 %s118, 1
      %p122 = scmp.eq.s32.totalorder %s21, 1
      %p123 = scmp.ne.s32.totalorder %s118, %s120
      %p124 = scmp.eq.s32.totalorder %s21, 0
      %p125 = por %p123, %p124
      %p126 = scmp.ne.s32.totalorder %s118, %s120
      %p127 = scmp.eq.s32.totalorder %s26, 1
      %p128 = por %p126, %p127
      %p129 = scmp.ne.s32.totalorder %s120, %s121
      %p130 = scmp.eq.s32.totalorder %s26, 0
      %p131 = por %p129, %p130
      %p132 = scmp.ne.s32.totalorder %s120, %s121
      %p133 = scmp.eq.s32.totalorder %s27, 1
      %p134 = por %p132, %p133
      %p136 = scmp.ne.s32.totalorder %s121, %s135
      %p137 = scmp.eq.s32.totalorder %s27, 0
      %p138 = por %p136, %p137
      %s140 = sadd.s32 %s139, 1
      %p143 = scmp.eq.s32.totalorder %s21, 1
      %p144 = scmp.ne.s32.totalorder %s139, %s141
      %p145 = scmp.eq.s32.totalorder %s21, 0
      %p146 = por %p144, %p145
      %p147 = scmp.ne.s32.totalorder %s139, %s141
      %p148 = scmp.eq.s32.totalorder %s26, 1
      %p149 = por %p147, %p148
      %p150 = scmp.ne.s32.totalorder %s141, %s142
      %p151 = scmp.eq.s32.totalorder %s26, 0
      %p152 = por %p150, %p151
      %p153 = scmp.ne.s32.totalorder %s141, %s142
      %p154 = scmp.eq.s32.totalorder %s27, 1
      %p155 = por %p153, %p154
      %p157 = scmp.ne.s32.totalorder %s142, %s156
      %p158 = scmp.eq.s32.totalorder %s27, 0
      %p159 = por %p157, %p158
      %s161 = sadd.s32 %s160, 1
      %p164 = scmp.eq.s32.totalorder %s21, 1
      %p165 = scmp.ne.s32.totalorder %s160, %s162
      %p166 = scmp.eq.s32.totalorder %s21, 0
      %p167 = por %p165, %p166
      %p168 = scmp.ne.s32.totalorder %s160, %s162
      %p169 = scmp.eq.s32.totalorder %s26, 1
      %p170 = por %p168, %p169
      %p171 = scmp.ne.s32.totalorder %s162, %s163
      %p172 = scmp.eq.s32.totalorder %s26, 0
      %p173 = por %p171, %p172
      %p174 = scmp.ne.s32.totalorder %s162, %s163
      %p175 = scmp.eq.s32.totalorder %s27, 1
      %p176 = por %p174, %p175
      %p178 = scmp.ne.s32.totalorder %s163, %s177
      %p179 = scmp.eq.s32.totalorder %s27, 0
      %p180 = por %p178, %p179
      %s182 = sadd.s32 %s181, 1
      %p185 = scmp.eq.s32.totalorder %s21, 1
      %p186 = scmp.ne.s32.totalorder %s181, %s183
      %p187 = scmp.eq.s32.totalorder %s21, 0
      %p188 = por %p186, %p187
      %p189 = scmp.ne.s32.totalorder %s181, %s183
      %p190 = scmp.eq.s32.totalorder %s26, 1
      %p191 = por %p189, %p190
      %p192 = scmp.ne.s32.totalorder %s183, %s184
      %p193 = scmp.eq.s32.totalorder %s26, 0
      %p194 = por %p192, %p193
      %p195 = scmp.ne.s32.totalorder %s183, %s184
      %p196 = scmp.eq.s32.totalorder %s27, 1
      %p197 = por %p195, %p196
      %p199 = scmp.ne.s32.totalorder %s184, %s198
      %p200 = scmp.eq.s32.totalorder %s27, 0
      %p201 = por %p199, %p200
      %s203 = sadd.s32 %s202, 1
      %p206 = scmp.eq.s32.totalorder %s21, 1
      %p207 = scmp.ne.s32.totalorder %s202, %s204
      %p208 = scmp.eq.s32.totalorder %s21, 0
      %p209 = por %p207, %p208
      %p210 = scmp.ne.s32.totalorder %s202, %s204
      %p211 = scmp.eq.s32.totalorder %s26, 1
      %p212 = por %p210, %p211
      %p213 = scmp.ne.s32.totalorder %s204, %s205
      %p214 = scmp.eq.s32.totalorder %s26, 0
      %p215 = por %p213, %p214
      %p216 = scmp.ne.s32.totalorder %s204, %s205
      %p217 = scmp.eq.s32.totalorder %s27, 1
      %p218 = por %p216, %p217
      %p220 = scmp.ne.s32.totalorder %s205, %s219
      %p221 = scmp.eq.s32.totalorder %s27, 0
      %p222 = por %p220, %p221
      %s224 = sadd.s32 %s223, 1
      %p227 = scmp.eq.s32.totalorder %s21, 1
      %p228 = scmp.ne.s32.totalorder %s223, %s225
      %p229 = scmp.eq.s32.totalorder %s21, 0
      %p230 = por %p228, %p229
      %p231 = scmp.ne.s32.totalorder %s223, %s225
      %p232 = scmp.eq.s32.totalorder %s26, 1
      %p233 = por %p231, %p232
      %p234 = scmp.ne.s32.totalorder %s225, %s226
      %p235 = scmp.eq.s32.totalorder %s26, 0
      %p236 = por %p234, %p235
      %p237 = scmp.ne.s32.totalorder %s225, %s226
      %p238 = scmp.eq.s32.totalorder %s27, 1
      %p239 = por %p237, %p238
      %p241 = scmp.ne.s32.totalorder %s226, %s240
      %p242 = scmp.eq.s32.totalorder %s27, 0
      %p243 = por %p241, %p242
      %s245 = sadd.s32 %s244, 1
      %p248 = scmp.eq.s32.totalorder %s21, 1
      %p249 = scmp.ne.s32.totalorder %s244, %s246
      %p250 = scmp.eq.s32.totalorder %s21, 0
      %p251 = por %p249, %p250
      %p252 = scmp.ne.s32.totalorder %s244, %s246
      %p253 = scmp.eq.s32.totalorder %s26, 1
      %p254 = por %p252, %p253
      %p255 = scmp.ne.s32.totalorder %s246, %s247
      %p256 = scmp.eq.s32.totalorder %s26, 0
      %p257 = por %p255, %p256
      %p258 = scmp.ne.s32.totalorder %s246, %s247
      %p259 = scmp.eq.s32.totalorder %s27, 1
      %p260 = por %p258, %p259
      %p262 = scmp.ne.s32.totalorder %s247, %s261
      %p263 = scmp.eq.s32.totalorder %s27, 0
      %p264 = por %p262, %p263
      %s266 = sadd.s32 %s265, 1
      %p269 = scmp.eq.s32.totalorder %s21, 1
      %p270 = scmp.ne.s32.totalorder %s265, %s267
      %p271 = scmp.eq.s32.totalorder %s21, 0
      %p272 = por %p270, %p271
      %p273 = scmp.ne.s32.totalorder %s265, %s267
      %p274 = scmp.eq.s32.totalorder %s26, 1
      %p275 = por %p273, %p274
      %p276 = scmp.ne.s32.totalorder %s267, %s268
      %p277 = scmp.eq.s32.totalorder %s26, 0
      %p278 = por %p276, %p277
      %p279 = scmp.ne.s32.totalorder %s267, %s268
      %p280 = scmp.eq.s32.totalorder %s27, 1
      %p281 = por %p279, %p280
      %p283 = scmp.ne.s32.totalorder %s268, %s282
      %p284 = scmp.eq.s32.totalorder %s27, 0
      %p285 = por %p283, %p284
      %s286 = ssub.s32 %s21, %s28
      %p287 = scmp.eq.s32.totalorder %s286, 0
      %s289 = sadd.s32 %s288, 1
      %s290 = scalar_select %p287, %s288, %s289
      %p293 = pneg %p287
      %p294 = scmp.eq.s32.totalorder %s21, 1
      %p295 = por %p293, %p294
      %p296 = scmp.ne.s32.totalorder %s288, %s291
      %p297 = scmp.eq.s32.totalorder %s21, 0
      %p298 = por %p296, %p297
      %p299 = scmp.ne.s32.totalorder %s288, %s291
      %p300 = scmp.eq.s32.totalorder %s26, 1
      %p301 = por %p299, %p300
      %p302 = scmp.ne.s32.totalorder %s291, %s292
      %p303 = scmp.eq.s32.totalorder %s26, 0
      %p304 = por %p302, %p303
      %p305 = scmp.ne.s32.totalorder %s291, %s292
      %p306 = scmp.eq.s32.totalorder %s27, 1
      %p307 = por %p305, %p306
      %p309 = scmp.ne.s32.totalorder %s292, %s308
      %p310 = scmp.eq.s32.totalorder %s27, 0
      %p311 = por %p309, %p310
      %p312 = scmp.le.s32.totalorder 1, %s21
      %p313 = scmp.lt.s32.totalorder %s21, 3
      %p314 = pnand %p312, %p313
      %p315 = pneg %p314
      // Predicated region
      $region9: #{tpu_custom_call.1} parent=5 // pred_check
        _
      $region10: #{tpu_custom_call.1} parent=5 // pred_check_branch
        %317 = sbr.rel (%p314) target = $region12
      $region11: #{tpu_custom_call.1} parent=5 // pred_region
        %s318 = ssub.s32 %s21, 1
        // Predicated region
        $region13: #{tpu_custom_call.1} parent=11 // pred_check
          %p319 = pneg %p68
        $region14: #{tpu_custom_call.1} parent=11 // pred_check_branch
          %321 = sbr.rel (%p319) target = $region16
        $region15: #{tpu_custom_call.1} parent=11 // pred_region
          _
        $region16: #{tpu_custom_call.1} parent=11 // pred_fallthru
          _
        // Predicated region
        $region17: #{tpu_custom_call.1} parent=11 // pred_check
          %p322 = pneg %p89
        $region18: #{tpu_custom_call.1} parent=11 // pred_check_branch
          %324 = sbr.rel (%p322) target = $region20
        $region19: #{tpu_custom_call.1} parent=11 // pred_region
          _
        $region20: #{tpu_custom_call.1} parent=11 // pred_fallthru
          _
        // Predicated region
        $region21: #{tpu_custom_call.1} parent=11 // pred_check
          %p325 = pneg %p110
        $region22: #{tpu_custom_call.1} parent=11 // pred_check_branch
          %327 = sbr.rel (%p325) target = $region24
        $region23: #{tpu_custom_call.1} parent=11 // pred_region
          _
        $region24: #{tpu_custom_call.1} parent=11 // pred_fallthru
          _
        // Predicated region
        $region25: #{tpu_custom_call.1} parent=11 // pred_check
          %p328 = pneg %p131
        $region26: #{tpu_custom_call.1} parent=11 // pred_check_branch
          %330 = sbr.rel (%p328) target = $region28
        $region27: #{tpu_custom_call.1} parent=11 // pred_region
          _
        $region28: #{tpu_custom_call.1} parent=11 // pred_fallthru
          _
        // Predicated region
        $region29: #{tpu_custom_call.1} parent=11 // pred_check
          %p331 = pneg %p152
        $region30: #{tpu_custom_call.1} parent=11 // pred_check_branch
          %333 = sbr.rel (%p331) target = $region32
        $region31: #{tpu_custom_call.1} parent=11 // pred_region
          _
        $region32: #{tpu_custom_call.1} parent=11 // pred_fallthru
          _
        // Predicated region
        $region33: #{tpu_custom_call.1} parent=11 // pred_check
          %p334 = pneg %p173
        $region34: #{tpu_custom_call.1} parent=11 // pred_check_branch
          %336 = sbr.rel (%p334) target = $region36
        $region35: #{tpu_custom_call.1} parent=11 // pred_region
          _
        $region36: #{tpu_custom_call.1} parent=11 // pred_fallthru
          _
        // Predicated region
        $region37: #{tpu_custom_call.1} parent=11 // pred_check
          %p337 = pneg %p194
        $region38: #{tpu_custom_call.1} parent=11 // pred_check_branch
          %339 = sbr.rel (%p337) target = $region40
        $region39: #{tpu_custom_call.1} parent=11 // pred_region
          _
        $region40: #{tpu_custom_call.1} parent=11 // pred_fallthru
          _
        // Predicated region
        $region41: #{tpu_custom_call.1} parent=11 // pred_check
          %p340 = pneg %p215
        $region42: #{tpu_custom_call.1} parent=11 // pred_check_branch
          %342 = sbr.rel (%p340) target = $region44
        $region43: #{tpu_custom_call.1} parent=11 // pred_region
          _
        $region44: #{tpu_custom_call.1} parent=11 // pred_fallthru
          _
        // Predicated region
        $region45: #{tpu_custom_call.1} parent=11 // pred_check
          %p343 = pneg %p236
        $region46: #{tpu_custom_call.1} parent=11 // pred_check_branch
          %345 = sbr.rel (%p343) target = $region48
        $region47: #{tpu_custom_call.1} parent=11 // pred_region
          _
        $region48: #{tpu_custom_call.1} parent=11 // pred_fallthru
          _
        // Predicated region
        $region49: #{tpu_custom_call.1} parent=11 // pred_check
          %p346 = pneg %p257
        $region50: #{tpu_custom_call.1} parent=11 // pred_check_branch
          %348 = sbr.rel (%p346) target = $region52
        $region51: #{tpu_custom_call.1} parent=11 // pred_region
          _
        $region52: #{tpu_custom_call.1} parent=11 // pred_fallthru
          _
        // Predicated region
        $region53: #{tpu_custom_call.1} parent=11 // pred_check
          %p349 = pneg %p278
        $region54: #{tpu_custom_call.1} parent=11 // pred_check_branch
          %351 = sbr.rel (%p349) target = $region56
        $region55: #{tpu_custom_call.1} parent=11 // pred_region
          _
        $region56: #{tpu_custom_call.1} parent=11 // pred_fallthru
          _
      $region12: #{tpu_custom_call.1} parent=5 // pred_fallthru
        _
      %p352 = scmp.lt.s32.totalorder %s21, 2
      // Predicated region
      $region57: #{tpu_custom_call.1} parent=5 // pred_check
        %p353 = pneg %p352
      $region58: #{tpu_custom_call.1} parent=5 // pred_check_branch
        %355 = sbr.rel (%p353) target = $region60
      $region59: #{tpu_custom_call.1} parent=5 // pred_region
        // Predicated region
        $region61: #{tpu_custom_call.1} parent=59 // pred_check
          %p356 = pneg %p41
        $region62: #{tpu_custom_call.1} parent=59 // pred_check_branch
          %358 = sbr.rel (%p356) target = $region64
        $region63: #{tpu_custom_call.1} parent=59 // pred_region
          %p359 = scmp.lt.s32.totalorder %s21, 1
          %s360 = scalar_select %p359, %s21, 1
          %s361 = smul.addr %s360, 6
          %s362 = smul.addr %s361, 4
          %s363 = scalar_lea.vmem %s0, %s362
        $region64: #{tpu_custom_call.1} parent=59 // pred_fallthru
          _
      $region60: #{tpu_custom_call.1} parent=5 // pred_fallthru
        _
      %p364 = scmp.le.s32.totalorder 1, %s21
      %p365 = scmp.lt.s32.totalorder %s21, 3
      %p366 = pnand %p364, %p365
      %p367 = pneg %p366
      // Predicated region
      $region65: #{tpu_custom_call.1} parent=5 // pred_check
        _
      $region66: #{tpu_custom_call.1} parent=5 // pred_check_branch
        %369 = sbr.rel (%p366) target = $region68
      $region67: #{tpu_custom_call.1} parent=5 // pred_region
        %s370 = ssub.s32 %s21, 1
        %p371 = scmp.lt.s32.totalorder %s26, 1
        %s372 = scalar_select %p371, %s26, 1
        %s373 = smul.addr %s372, 6
        %s374 = smul.addr %s373, 4
        %s375 = scalar_lea.vmem %s0, %s374
        %p376 = pneg %p47
        %p377 = pneg %p44
        %p378 = pneg %p68
        %p379 = pneg %p65
        %p380 = pneg %p89
        %p381 = pneg %p86
        %p382 = pneg %p110
        %p383 = pneg %p107
        %p384 = pneg %p131
        %p385 = pneg %p128
        %p386 = pneg %p152
        %p387 = pneg %p149
        %p388 = pneg %p173
        %p389 = pneg %p170
        %p390 = pneg %p194
        %p391 = pneg %p191
        %p392 = pneg %p215
        %p393 = pneg %p212
        %p394 = pneg %p236
        %p395 = pneg %p233
        %p396 = pneg %p257
        %p397 = pneg %p254
        %p398 = pneg %p278
        %p399 = pneg %p275
        %p400 = pneg %p304
        %p401 = pneg %p301
        %s402 = sand.u32 %s291, 1
        %s403 = scalar_lea.sflag [#allocation7], %s402
        %s404 = sand.u32 %s291, 1
        %s405 = smul.addr %s404, 8
        %s406 = scalar_lea.vmem [#allocation6], %s405
        %p407 = scmp.lt.s32.totalorder %s26, 1
        %s408 = scalar_select %p407, %s26, 1
        %s409 = smul.addr %s408, 6
        %s410 = smul.addr %s409, 4
        %s411 = scalar_lea.vmem %s0, %s410
        %v413 = vlaneseq
        %vm414 = vcmp.ge.s32.totalorder %v413, 0
        %vm415 = vcmp.lt.s32.totalorder %v413, 136
        %vm416 = vmand %vm414, %vm415
        %s417 = scalar_lea.vmem [#allocation2], 32
        %418 = vst.msk [vmem:[%s417] ss:$8 sm:$0x3] %vm416, 0.0
        %419 = vst.msk [vmem:[%s417] ss:$8 sm:$0x0] %vm416, 0.0
        %vm420 = vcmask 64512
        %421 = vst.msk [vmem:[#allocation2 + $0x8] sm:$0xff] %vm420, 0.0
        %422 = vst.msk [vmem:[#allocation2 + $0x18] sm:$0xff] %vm420, 0.0
        %vm423 = vcmask 57344
        %424 = vst.msk [vmem:[#allocation2 + $0x28] sm:$0x1] %vm423, 0.0
        %vm425 = vcmask 516096
        %426 = vst.msk [vmem:[#allocation3 + $0x10] sm:$0x1] %vm425, 0.0
        %427 = vst [vmem:[#allocation4] sm:$0x1] 0.0
        %428 = vst [vmem:[#allocation5] sm:$0x1] 0.0
        %v429 = vld [vmem:[%s2] sm:$0x1]
        %v431 = vlaneseq
        %v432 = vshrl.u32 %v431, 7
        %v433 = vsub.s32 0, %v432
        %v434 = vrot.slane %v429, %v433
        %v436 = vld [vmem:[%s411] sm:$0xf]
        %v437 = vld [vmem:[%s411 + $0x4] sm:$0xf]
        %v438 = vld [vmem:[%s1] sm:$0xf]
        %v439 = vld [vmem:[%s1 + $0x4] sm:$0xf]
        %v440 = vld [vmem:[%s1 + $0x8] sm:$0xf]
        %v441 = vld [vmem:[%s1 + $0xc] sm:$0xf]
        %v442 = vld [vmem:[%s1 + $0x10] sm:$0xf]
        %v443 = vld [vmem:[%s1 + $0x14] sm:$0xf]
        %v444 = vld [vmem:[%s1 + $0x18] sm:$0xf]
        %v445 = vld [vmem:[%s1 + $0x1c] sm:$0xf]
        %v446 = vld [vmem:[%s1 + $0x20] sm:$0xf]
        %v447 = vld [vmem:[%s1 + $0x24] sm:$0xf]
        %v448 = vld [vmem:[%s1 + $0x28] sm:$0xf]
        %v449 = vld [vmem:[%s1 + $0x2c] sm:$0xf]
        %v452 = vunpack.c.l.b16 %v436
        %v453 = vunpack.c.l.b16 %v437
        %v454 = vpack.c.b16 %v453, %v452
        %v467 = vunpack.c.l.b16 %v438
        %v468 = vunpack.c.l.b16 %v439
        %v469 = vunpack.c.l.b16 %v440
        %v470 = vunpack.c.l.b16 %v441
        %v471 = vunpack.c.l.b16 %v442
        %v472 = vunpack.c.l.b16 %v443
        %v473 = vunpack.c.l.b16 %v444
        %v474 = vunpack.c.l.b16 %v445
        %v475 = vunpack.c.l.b16 %v446
        %v476 = vunpack.c.l.b16 %v447
        %v477 = vunpack.c.l.b16 %v448
        %v478 = vunpack.c.l.b16 %v449
        %v479 = vpack.c.b16 %v468, %v467
        %v480 = vpack.c.b16 %v470, %v469
        %v481 = vpack.c.b16 %v472, %v471
        %v482 = vpack.c.b16 %v474, %v473
        %v483 = vpack.c.b16 %v476, %v475
        %v484 = vpack.c.b16 %v478, %v477
        %vm491 = vcmask 785408
        %v493 = vsel %vm491, %v454, 0
        %495 = vmatprep.subr.bf16.mxu0 0
        %496 = vmatpush1.bf16.msra.mxu0 %v479
        %497 = vmatprep.subr.bf16.mxu0 0
        %498 = vmatpush1.bf16.msra.mxu0 %v480
        %499 = vmatprep.subr.bf16.mxu0 0
        %500 = vmatpush1.bf16.msra.mxu0 %v481
        %501 = vmatprep.subr.bf16.mxu0 0
        %502 = vmatpush1.bf16.msra.mxu0 %v482
        %503 = vmatprep.subr.bf16.mxu0 0
        %504 = vmatpush1.bf16.msra.mxu0 %v483
        %505 = vmatprep.subr.bf16.mxu0 0
        %506 = vmatpush1.bf16.msra.mxu0 %v484
        %507 = vmatprep.subr.bf16.mxu0 0
        %508 = vmatpush1.bf16.msra.mxu0 0
        %509 = vmatprep.subr.bf16.mxu0 0
        %510 = vmatpush1.bf16.msra.mxu0 0
        %511 = vmatprep.subr.bf16.mxu0 0
        %512 = vmatpush1.bf16.msra.mxu0 0
        %513 = vmatprep.subr.bf16.mxu0 0
        %514 = vmatpush1.bf16.msra.mxu0 0
        %515 = vmatprep.subr.bf16.mxu0 0
        %516 = vmatpush1.bf16.msra.mxu0 0
        %517 = vmatprep.subr.bf16.mxu0 0
        %518 = vmatpush1.bf16.msra.mxu0 0
        %519 = vmatprep.subr.bf16.mxu0 0
        %520 = vmatpush1.bf16.msra.mxu0 0
        %521 = vmatprep.subr.bf16.mxu0 0
        %522 = vmatpush1.bf16.msra.mxu0 0
        %523 = vmatprep.subr.bf16.mxu0 0
        %524 = vmatpush1.bf16.msra.mxu0 0
        %525 = vmatprep.subr.bf16.mxu0 0
        %526 = vmatpush1.bf16.msra.mxu0 0
        %527 = vmatprep.mubr.bf16.mxu0 0
        %528 = vmatmul.mubr.bf16.gmra.mrb[0].mxu0 %v493
        %v529 = vpop.f32.mrb[0].mxu0
        %v530 = vadd.f32 0.0, %v529
        %v531 = vpop.f32.mrb[0].mxu0
        %v532 = vpop.f32.mrb[0].mxu0
        %v533 = vadd.f32 0.0, %v532
        %v534 = vpop.f32.mrb[0].mxu0
        %535 = vdwg.mxu0
        %v536 = vadd.f32 %v434, %v530
        %v537 = vadd.f32 %v434, %v533
        %s538 = scalar_lea.vmem %s411, 8
        %v539 = vld [vmem:[%s538] sm:$0xf]
        %v540 = vld [vmem:[%s538 + $0x4] sm:$0xf]
        %s541 = scalar_lea.vmem %s1, 48
        %v542 = vld [vmem:[%s541] sm:$0xf]
        %v543 = vld [vmem:[%s541 + $0x4] sm:$0xf]
        %v544 = vld [vmem:[%s541 + $0x8] sm:$0xf]
        %v545 = vld [vmem:[%s541 + $0xc] sm:$0xf]
        %v546 = vld [vmem:[%s541 + $0x10] sm:$0xf]
        %v547 = vld [vmem:[%s541 + $0x14] sm:$0xf]
        %v548 = vld [vmem:[%s541 + $0x18] sm:$0xf]
        %v549 = vld [vmem:[%s541 + $0x1c] sm:$0xf]
        %v550 = vld [vmem:[%s541 + $0x20] sm:$0xf]
        %v551 = vld [vmem:[%s541 + $0x24] sm:$0xf]
        %v552 = vld [vmem:[%s541 + $0x28] sm:$0xf]
        %v553 = vld [vmem:[%s541 + $0x2c] sm:$0xf]
        %v556 = vunpack.c.l.b16 %v539
        %v557 = vunpack.c.l.b16 %v540
        %v558 = vpack.c.b16 %v557, %v556
        %v571 = vunpack.c.l.b16 %v542
        %v572 = vunpack.c.l.b16 %v543
        %v573 = vunpack.c.l.b16 %v544
        %v574 = vunpack.c.l.b16 %v545
        %v575 = vunpack.c.l.b16 %v546
        %v576 = vunpack.c.l.b16 %v547
        %v577 = vunpack.c.l.b16 %v548
        %v578 = vunpack.c.l.b16 %v549
        %v579 = vunpack.c.l.b16 %v550
        %v580 = vunpack.c.l.b16 %v551
        %v581 = vunpack.c.l.b16 %v552
        %v582 = vunpack.c.l.b16 %v553
        %v583 = vpack.c.b16 %v572, %v571
        %v584 = vpack.c.b16 %v574, %v573
        %v585 = vpack.c.b16 %v576, %v575
        %v586 = vpack.c.b16 %v578, %v577
        %v587 = vpack.c.b16 %v580, %v579
        %v588 = vpack.c.b16 %v582, %v581
        %v596 = vsel %vm491, %v558, 0
        %598 = vmatprep.subr.bf16.mxu0 0
        %599 = vmatpush1.bf16.msra.mxu0 %v583
        %600 = vmatprep.subr.bf16.mxu0 0
        %601 = vmatpush1.bf16.msra.mxu0 %v584
        %602 = vmatprep.subr.bf16.mxu0 0
        %603 = vmatpush1.bf16.msra.mxu0 %v585
        %604 = vmatprep.subr.bf16.mxu0 0
        %605 = vmatpush1.bf16.msra.mxu0 %v586
        %606 = vmatprep.subr.bf16.mxu0 0
        %607 = vmatpush1.bf16.msra.mxu0 %v587
        %608 = vmatprep.subr.bf16.mxu0 0
        %609 = vmatpush1.bf16.msra.mxu0 %v588
        %610 = vmatprep.subr.bf16.mxu0 0
        %611 = vmatpush1.bf16.msra.mxu0 0
        %612 = vmatprep.subr.bf16.mxu0 0
        %613 = vmatpush1.bf16.msra.mxu0 0
        %614 = vmatprep.subr.bf16.mxu0 0
        %615 = vmatpush1.bf16.msra.mxu0 0
        %616 = vmatprep.subr.bf16.mxu0 0
        %617 = vmatpush1.bf16.msra.mxu0 0
        %618 = vmatprep.subr.bf16.mxu0 0
        %619 = vmatpush1.bf16.msra.mxu0 0
        %620 = vmatprep.subr.bf16.mxu0 0
        %621 = vmatpush1.bf16.msra.mxu0 0
        %622 = vmatprep.subr.bf16.mxu0 0
        %623 = vmatpush1.bf16.msra.mxu0 0
        %624 = vmatprep.subr.bf16.mxu0 0
        %625 = vmatpush1.bf16.msra.mxu0 0
        %626 = vmatprep.subr.bf16.mxu0 0
        %627 = vmatpush1.bf16.msra.mxu0 0
        %628 = vmatprep.subr.bf16.mxu0 0
        %629 = vmatpush1.bf16.msra.mxu0 0
        %630 = vmatprep.mubr.bf16.mxu0 0
        %631 = vmatmul.mubr.bf16.gmra.mrb[0].mxu0 %v596
        %v632 = vpop.f32.mrb[0].mxu0
        %v633 = vadd.f32 0.0, %v632
        %v634 = vpop.f32.mrb[0].mxu0
        %v635 = vpop.f32.mrb[0].mxu0
        %v636 = vadd.f32 0.0, %v635
        %v637 = vpop.f32.mrb[0].mxu0
        %638 = vdwg.mxu0
        %v639 = vadd.f32 %v536, %v633
        %v640 = vadd.f32 %v537, %v636
        %s641 = scalar_lea.vmem %s411, 16
        %v642 = vld [vmem:[%s641] sm:$0xf]
        %v643 = vld [vmem:[%s641 + $0x4] sm:$0xf]
        %s644 = scalar_lea.vmem %s1, 96
        %v645 = vld [vmem:[%s644] sm:$0xf]
        %v646 = vld [vmem:[%s644 + $0x4] sm:$0xf]
        %v647 = vld [vmem:[%s644 + $0x8] sm:$0xf]
        %v648 = vld [vmem:[%s644 + $0xc] sm:$0xf]
        %v649 = vld [vmem:[%s644 + $0x10] sm:$0xf]
        %v650 = vld [vmem:[%s644 + $0x14] sm:$0xf]
        %v651 = vld [vmem:[%s644 + $0x18] sm:$0xf]
        %v652 = vld [vmem:[%s644 + $0x1c] sm:$0xf]
        %v653 = vld [vmem:[%s644 + $0x20] sm:$0xf]
        %v654 = vld [vmem:[%s644 + $0x24] sm:$0xf]
        %v655 = vld [vmem:[%s644 + $0x28] sm:$0xf]
        %v656 = vld [vmem:[%s644 + $0x2c] sm:$0xf]
        %v659 = vunpack.c.l.b16 %v642
        %v660 = vunpack.c.l.b16 %v643
        %v661 = vpack.c.b16 %v660, %v659
        %v674 = vunpack.c.l.b16 %v645
        %v675 = vunpack.c.l.b16 %v646
        %v676 = vunpack.c.l.b16 %v647
        %v677 = vunpack.c.l.b16 %v648
        %v678 = vunpack.c.l.b16 %v649
        %v679 = vunpack.c.l.b16 %v650
        %v680 = vunpack.c.l.b16 %v651
        %v681 = vunpack.c.l.b16 %v652
        %v682 = vunpack.c.l.b16 %v653
        %v683 = vunpack.c.l.b16 %v654
        %v684 = vunpack.c.l.b16 %v655
        %v685 = vunpack.c.l.b16 %v656
        %v686 = vpack.c.b16 %v675, %v674
        %v687 = vpack.c.b16 %v677, %v676
        %v688 = vpack.c.b16 %v679, %v678
        %v689 = vpack.c.b16 %v681, %v680
        %v690 = vpack.c.b16 %v683, %v682
        %v691 = vpack.c.b16 %v685, %v684
        %v699 = vsel %vm491, %v661, 0
        %701 = vmatprep.subr.bf16.mxu0 0
        %702 = vmatpush1.bf16.msra.mxu0 %v686
        %703 = vmatprep.subr.bf16.mxu0 0
        %704 = vmatpush1.bf16.msra.mxu0 %v687
        %705 = vmatprep.subr.bf16.mxu0 0
        %706 = vmatpush1.bf16.msra.mxu0 %v688
        %707 = vmatprep.subr.bf16.mxu0 0
        %708 = vmatpush1.bf16.msra.mxu0 %v689
        %709 = vmatprep.subr.bf16.mxu0 0
        %710 = vmatpush1.bf16.msra.mxu0 %v690
        %711 = vmatprep.subr.bf16.mxu0 0
        %712 = vmatpush1.bf16.msra.mxu0 %v691
        %713 = vmatprep.subr.bf16.mxu0 0
        %714 = vmatpush1.bf16.msra.mxu0 0
        %715 = vmatprep.subr.bf16.mxu0 0
        %716 = vmatpush1.bf16.msra.mxu0 0
        %717 = vmatprep.subr.bf16.mxu0 0
        %718 = vmatpush1.bf16.msra.mxu0 0
        %719 = vmatprep.subr.bf16.mxu0 0
        %720 = vmatpush1.bf16.msra.mxu0 0
        %721 = vmatprep.subr.bf16.mxu0 0
        %722 = vmatpush1.bf16.msra.mxu0 0
        %723 = vmatprep.subr.bf16.mxu0 0
        %724 = vmatpush1.bf16.msra.mxu0 0
        %725 = vmatprep.subr.bf16.mxu0 0
        %726 = vmatpush1.bf16.msra.mxu0 0
        %727 = vmatprep.subr.bf16.mxu0 0
        %728 = vmatpush1.bf16.msra.mxu0 0
        %729 = vmatprep.subr.bf16.mxu0 0
        %730 = vmatpush1.bf16.msra.mxu0 0
        %731 = vmatprep.subr.bf16.mxu0 0
        %732 = vmatpush1.bf16.msra.mxu0 0
        %733 = vmatprep.mubr.bf16.mxu0 0
        %734 = vmatmul.mubr.bf16.gmra.mrb[0].mxu0 %v699
        %v735 = vpop.f32.mrb[0].mxu0
        %v736 = vadd.f32 0.0, %v735
        %v737 = vpop.f32.mrb[0].mxu0
        %v738 = vpop.f32.mrb[0].mxu0
        %v739 = vadd.f32 0.0, %v738
        %v740 = vpop.f32.mrb[0].mxu0
        %741 = vdwg.mxu0
        %v742 = vadd.f32 %v639, %v736
        %v743 = vadd.f32 %v640, %v739
        %v744 = vmax.f32 %v742, 0.0
        %v745 = vmax.f32 %v743, 0.0
        %746 = vst [vmem:[#allocation2] sm:$0xff] %v744
        %747 = vst [vmem:[#allocation2 + $0x10] sm:$0xff] %v745
        %v748 = vld [vmem:[%s4] sm:$0x1]
        %v750 = vlaneseq
        %v751 = vshrl.u32 %v750, 7
        %v752 = vsub.s32 0, %v751
        %v753 = vrot.slane %v748, %v752
        %v755 = vld [vmem:[#allocation2] sm:$0xff]
        %v756 = vld [vmem:[#allocation2 + $0x10] sm:$0xff]
        %v757 = vpack.c.bf16 %v756, %v755
        %v758 = vld [vmem:[%s3] sm:$0xf]
        %v759 = vld [vmem:[%s3 + $0x4] sm:$0xf]
        %v760 = vld [vmem:[%s3 + $0x8] sm:$0xf]
        %v761 = vld [vmem:[%s3 + $0xc] sm:$0xf]
        %v762 = vld [vmem:[%s3 + $0x10] sm:$0xf]
        %v763 = vld [vmem:[%s3 + $0x14] sm:$0xf]
        %v764 = vld [vmem:[%s3 + $0x18] sm:$0xf]
        %v765 = vld [vmem:[%s3 + $0x1c] sm:$0xf]
        %v766 = vld [vmem:[%s3 + $0x20] sm:$0xf]
        %v767 = vld [vmem:[%s3 + $0x24] sm:$0xf]
        %v768 = vld [vmem:[%s3 + $0x28] sm:$0xf]
        %v769 = vld [vmem:[%s3 + $0x2c] sm:$0xf]
        %v770 = vld [vmem:[%s3 + $0x30] sm:$0xf]
        %v771 = vld [vmem:[%s3 + $0x34] sm:$0xf]
        %v772 = vld [vmem:[%s3 + $0x38] sm:$0xf]
        %v773 = vld [vmem:[%s3 + $0x3c] sm:$0xf]
        %v790 = vunpack.c.l.b16 %v758
        %v791 = vunpack.c.l.b16 %v759
        %v792 = vunpack.c.l.b16 %v760
        %v793 = vunpack.c.l.b16 %v761
        %v794 = vunpack.c.l.b16 %v762
        %v795 = vunpack.c.l.b16 %v763
        %v796 = vunpack.c.l.b16 %v764
        %v797 = vunpack.c.l.b16 %v765
        %v798 = vunpack.c.l.b16 %v766
        %v799 = vunpack.c.l.b16 %v767
        %v800 = vunpack.c.l.b16 %v768
        %v801 = vunpack.c.l.b16 %v769
        %v802 = vunpack.c.l.b16 %v770
        %v803 = vunpack.c.l.b16 %v771
        %v804 = vunpack.c.l.b16 %v772
        %v805 = vunpack.c.l.b16 %v773
        %v806 = vpack.c.b16 %v791, %v790
        %v807 = vpack.c.b16 %v793, %v792
        %v808 = vpack.c.b16 %v795, %v794
        %v809 = vpack.c.b16 %v797, %v796
        %v810 = vpack.c.b16 %v799, %v798
        %v811 = vpack.c.b16 %v801, %v800
        %v812 = vpack.c.b16 %v803, %v802
        %v813 = vpack.c.b16 %v805, %v804
        %822 = vmatprep.subr.bf16.mxu0 0
        %823 = vmatpush1.bf16.msra.mxu0 %v806
        %824 = vmatprep.subr.bf16.mxu0 0
        %825 = vmatpush1.bf16.msra.mxu0 %v807
        %826 = vmatprep.subr.bf16.mxu0 0
        %827 = vmatpush1.bf16.msra.mxu0 %v808
        %828 = vmatprep.subr.bf16.mxu0 0
        %829 = vmatpush1.bf16.msra.mxu0 %v809
        %830 = vmatprep.subr.bf16.mxu0 0
        %831 = vmatpush1.bf16.msra.mxu0 %v810
        %832 = vmatprep.subr.bf16.mxu0 0
        %833 = vmatpush1.bf16.msra.mxu0 %v811
        %834 = vmatprep.subr.bf16.mxu0 0
        %835 = vmatpush1.bf16.msra.mxu0 %v812
        %836 = vmatprep.subr.bf16.mxu0 0
        %837 = vmatpush1.bf16.msra.mxu0 %v813
        %838 = vmatprep.subr.bf16.mxu0 0
        %839 = vmatpush1.bf16.msra.mxu0 0
        %840 = vmatprep.subr.bf16.mxu0 0
        %841 = vmatpush1.bf16.msra.mxu0 0
        %842 = vmatprep.subr.bf16.mxu0 0
        %843 = vmatpush1.bf16.msra.mxu0 0
        %844 = vmatprep.subr.bf16.mxu0 0
        %845 = vmatpush1.bf16.msra.mxu0 0
        %846 = vmatprep.subr.bf16.mxu0 0
        %847 = vmatpush1.bf16.msra.mxu0 0
        %848 = vmatprep.subr.bf16.mxu0 0
        %849 = vmatpush1.bf16.msra.mxu0 0
        %850 = vmatprep.subr.bf16.mxu0 0
        %851 = vmatpush1.bf16.msra.mxu0 0
        %852 = vmatprep.subr.bf16.mxu0 0
        %853 = vmatpush1.bf16.msra.mxu0 0
        %854 = vmatprep.mubr.bf16.mxu0 0
        %855 = vmatmul.mubr.bf16.gmra.mrb[0].mxu0 %v757
        %v856 = vpop.f32.mrb[0].mxu0
        %v857 = vadd.f32 0.0, %v856
        %v858 = vpop.f32.mrb[0].mxu0
        %v859 = vpop.f32.mrb[0].mxu0
        %v860 = vadd.f32 0.0, %v859
        %v861 = vpop.f32.mrb[0].mxu0
        %862 = vdwg.mxu0
        %v863 = vadd.f32 %v753, %v857
        %v864 = vadd.f32 %v753, %v860
        %v865 = vld [vmem:[#allocation2] sm:$0xfe]
        %v866 = vld [vmem:[#allocation2 + $0x10] sm:$0xff]
        %v867 = vld [vmem:[#allocation2 + $0x20] sm:$0x1]
        %v868 = vpack.c.bf16 %v866, %v865
        %v869 = vpack.c.bf16 %v867, %v867
        %s870 = scalar_lea.vmem %s3, 64
        %v871 = vld [vmem:[%s870] sm:$0xf]
        %v872 = vld [vmem:[%s870 + $0x4] sm:$0xf]
        %v873 = vld [vmem:[%s870 + $0x8] sm:$0xf]
        %v874 = vld [vmem:[%s870 + $0xc] sm:$0xf]
        %v875 = vld [vmem:[%s870 + $0x10] sm:$0xf]
        %v876 = vld [vmem:[%s870 + $0x14] sm:$0xf]
        %v877 = vld [vmem:[%s870 + $0x18] sm:$0xf]
        %v878 = vld [vmem:[%s870 + $0x1c] sm:$0xf]
        %v879 = vld [vmem:[%s870 + $0x20] sm:$0xf]
        %v880 = vld [vmem:[%s870 + $0x24] sm:$0xf]
        %v881 = vld [vmem:[%s870 + $0x28] sm:$0xf]
        %v882 = vld [vmem:[%s870 + $0x2c] sm:$0xf]
        %v883 = vld [vmem:[%s870 + $0x30] sm:$0xf]
        %v884 = vld [vmem:[%s870 + $0x34] sm:$0xf]
        %v885 = vld [vmem:[%s870 + $0x38] sm:$0xf]
        %v886 = vld [vmem:[%s870 + $0x3c] sm:$0xf]
        %vm887 = vsmask.f32 7424
        %v889 = vshrl.u32 %v868, 16
        %v891 = vshll.u32 %v868, 16
        %v893 = vrot.slane %v891, 1
        %v894 = vor.u32 %v889, %v893
        %v896 = vshll.u32 %v869, 16
        %v898 = vrot.slane %v896, 1
        %v899 = vsel %vm887, %v894, %v898
        %v917 = vunpack.c.l.b16 %v871
        %v918 = vunpack.c.l.b16 %v872
        %v919 = vunpack.c.l.b16 %v873
        %v920 = vunpack.c.l.b16 %v874
        %v921 = vunpack.c.l.b16 %v875
        %v922 = vunpack.c.l.b16 %v876
        %v923 = vunpack.c.l.b16 %v877
        %v924 = vunpack.c.l.b16 %v878
        %v925 = vunpack.c.l.b16 %v879
        %v926 = vunpack.c.l.b16 %v880
        %v927 = vunpack.c.l.b16 %v881
        %v928 = vunpack.c.l.b16 %v882
        %v929 = vunpack.c.l.b16 %v883
        %v930 = vunpack.c.l.b16 %v884
        %v931 = vunpack.c.l.b16 %v885
        %v932 = vunpack.c.l.b16 %v886
        %v933 = vpack.c.b16 %v918, %v917
        %v934 = vpack.c.b16 %v920, %v919
        %v935 = vpack.c.b16 %v922, %v921
        %v936 = vpack.c.b16 %v924, %v923
        %v937 = vpack.c.b16 %v926, %v925
        %v938 = vpack.c.b16 %v928, %v927
        %v939 = vpack.c.b16 %v930, %v929
        %v940 = vpack.c.b16 %v932, %v931
        %949 = vmatprep.subr.bf16.mxu0 0
        %950 = vmatpush1.bf16.msra.mxu0 %v933
        %951 = vmatprep.subr.bf16.mxu0 0
        %952 = vmatpush1.bf16.msra.mxu0 %v934
        %953 = vmatprep.subr.bf16.mxu0 0
        %954 = vmatpush1.bf16.msra.mxu0 %v935
        %955 = vmatprep.subr.bf16.mxu0 0
        %956 = vmatpush1.bf16.msra.mxu0 %v936
        %957 = vmatprep.subr.bf16.mxu0 0
        %958 = vmatpush1.bf16.msra.mxu0 %v937
        %959 = vmatprep.subr.bf16.mxu0 0
        %960 = vmatpush1.bf16.msra.mxu0 %v938
        %961 = vmatprep.subr.bf16.mxu0 0
        %962 = vmatpush1.bf16.msra.mxu0 %v939
        %963 = vmatprep.subr.bf16.mxu0 0
        %964 = vmatpush1.bf16.msra.mxu0 %v940
        %965 = vmatprep.subr.bf16.mxu0 0
        %966 = vmatpush1.bf16.msra.mxu0 0
        %967 = vmatprep.subr.bf16.mxu0 0
        %968 = vmatpush1.bf16.msra.mxu0 0
        %969 = vmatprep.subr.bf16.mxu0 0
        %970 = vmatpush1.bf16.msra.mxu0 0
        %971 = vmatprep.subr.bf16.mxu0 0
        %972 = vmatpush1.bf16.msra.mxu0 0
        %973 = vmatprep.subr.bf16.mxu0 0
        %974 = vmatpush1.bf16.msra.mxu0 0
        %975 = vmatprep.subr.bf16.mxu0 0
        %976 = vmatpush1.bf16.msra.mxu0 0
        %977 = vmatprep.subr.bf16.mxu0 0
        %978 = vmatpush1.bf16.msra.mxu0 0
        %979 = vmatprep.subr.bf16.mxu0 0
        %980 = vmatpush1.bf16.msra.mxu0 0
        %981 = vmatprep.mubr.bf16.mxu0 0
        %982 = vmatmul.mubr.bf16.gmra.mrb[0].mxu0 %v899
        %v983 = vpop.f32.mrb[0].mxu0
        %v984 = vadd.f32 0.0, %v983
        %v985 = vpop.f32.mrb[0].mxu0
        %v986 = vpop.f32.mrb[0].mxu0
        %v987 = vadd.f32 0.0, %v986
        %v988 = vpop.f32.mrb[0].mxu0
        %989 = vdwg.mxu0
        %v990 = vadd.f32 %v863, %v984
        %v991 = vadd.f32 %v864, %v987
        %v992 = vmax.f32 %v990, 0.0
        %v993 = vmax.f32 %v991, 0.0
        %vm994 = vcmask 523264
        %995 = vst.msk [vmem:[#allocation3] sm:$0xff] %vm994, %v992
        %996 = vst.msk [vmem:[#allocation3 + $0x8] sm:$0xff] %vm994, %v993
        %v997 = vld [vmem:[%s6] sm:$0x1]
        %v999 = vlaneseq
        %v1000 = vshrl.u32 %v999, 7
        %v1001 = vsub.s32 0, %v1000
        %v1002 = vrot.slane %v997, %v1001
        %v1004 = vld [vmem:[#allocation3] sm:$0xff]
        %v1005 = vld [vmem:[#allocation3 + $0x8] sm:$0xff]
        %v1006 = vpack.c.bf16 %v1005, %v1004
        %v1007 = vld [vmem:[%s5] sm:$0xf]
        %v1008 = vld [vmem:[%s5 + $0x4] sm:$0xf]
        %v1009 = vld [vmem:[%s5 + $0x8] sm:$0xf]
        %v1010 = vld [vmem:[%s5 + $0xc] sm:$0xf]
        %v1011 = vld [vmem:[%s5 + $0x10] sm:$0xf]
        %v1012 = vld [vmem:[%s5 + $0x14] sm:$0xf]
        %v1013 = vld [vmem:[%s5 + $0x18] sm:$0xf]
        %v1014 = vld [vmem:[%s5 + $0x1c] sm:$0xf]
        %v1023 = vunpack.c.l.b16 %v1007
        %v1024 = vunpack.c.l.b16 %v1008
        %v1025 = vunpack.c.l.b16 %v1009
        %v1026 = vunpack.c.l.b16 %v1010
        %v1027 = vunpack.c.l.b16 %v1011
        %v1028 = vunpack.c.l.b16 %v1012
        %v1029 = vunpack.c.l.b16 %v1013
        %v1030 = vunpack.c.l.b16 %v1014
        %v1031 = vpack.c.b16 %v1024, %v1023
        %v1032 = vpack.c.b16 %v1026, %v1025
        %v1033 = vpack.c.b16 %v1028, %v1027
        %v1034 = vpack.c.b16 %v1030, %v1029
        %v1040 = vsel %vm994, %v1006, 0
        %1042 = vmatprep.subr.bf16.mxu0 0
        %1043 = vmatpush1.bf16.msra.mxu0 %v1031
        %1044 = vmatprep.subr.bf16.mxu0 0
        %1045 = vmatpush1.bf16.msra.mxu0 %v1032
        %1046 = vmatprep.subr.bf16.mxu0 0
        %1047 = vmatpush1.bf16.msra.mxu0 %v1033
        %1048 = vmatprep.subr.bf16.mxu0 0
        %1049 = vmatpush1.bf16.msra.mxu0 %v1034
        %1050 = vmatprep.subr.bf16.mxu0 0
        %1051 = vmatpush1.bf16.msra.mxu0 0
        %1052 = vmatprep.subr.bf16.mxu0 0
        %1053 = vmatpush1.bf16.msra.mxu0 0
        %1054 = vmatprep.subr.bf16.mxu0 0
        %1055 = vmatpush1.bf16.msra.mxu0 0
        %1056 = vmatprep.subr.bf16.mxu0 0
        %1057 = vmatpush1.bf16.msra.mxu0 0
        %1058 = vmatprep.subr.bf16.mxu0 0
        %1059 = vmatpush1.bf16.msra.mxu0 0
        %1060 = vmatprep.subr.bf16.mxu0 0
        %1061 = vmatpush1.bf16.msra.mxu0 0
        %1062 = vmatprep.subr.bf16.mxu0 0
        %1063 = vmatpush1.bf16.msra.mxu0 0
        %1064 = vmatprep.subr.bf16.mxu0 0
        %1065 = vmatpush1.bf16.msra.mxu0 0
        %1066 = vmatprep.subr.bf16.mxu0 0
        %1067 = vmatpush1.bf16.msra.mxu0 0
        %1068 = vmatprep.subr.bf16.mxu0 0
        %1069 = vmatpush1.bf16.msra.mxu0 0
        %1070 = vmatprep.subr.bf16.mxu0 0
        %1071 = vmatpush1.bf16.msra.mxu0 0
        %1072 = vmatprep.subr.bf16.mxu0 0
        %1073 = vmatpush1.bf16.msra.mxu0 0
        %1074 = vmatprep.mubr.bf16.mxu0 0
        %1075 = vmatmul.mubr.bf16.gmra.mrb[0].mxu0 %v1040
        %v1076 = vpop.f32.mrb[0].mxu0
        %v1077 = vadd.f32 0.0, %v1076
        %v1078 = vpop.f32.mrb[0].mxu0
        %v1079 = vpop.f32.mrb[0].mxu0
        %v1080 = vadd.f32 0.0, %v1079
        %v1081 = vpop.f32.mrb[0].mxu0
        %1082 = vdwg.mxu0
        %v1083 = vadd.f32 %v1002, %v1077
        %v1084 = vadd.f32 %v1002, %v1080
        %v1085 = vld [vmem:[#allocation3 + $0x1] sm:$0xff]
        %v1086 = vld [vmem:[#allocation3 + $0x9] sm:$0xff]
        %v1087 = vpack.c.bf16 %v1086, %v1085
        %s1088 = scalar_lea.vmem %s5, 32
        %v1089 = vld [vmem:[%s1088] sm:$0xf]
        %v1090 = vld [vmem:[%s1088 + $0x4] sm:$0xf]
        %v1091 = vld [vmem:[%s1088 + $0x8] sm:$0xf]
        %v1092 = vld [vmem:[%s1088 + $0xc] sm:$0xf]
        %v1093 = vld [vmem:[%s1088 + $0x10] sm:$0xf]
        %v1094 = vld [vmem:[%s1088 + $0x14] sm:$0xf]
        %v1095 = vld [vmem:[%s1088 + $0x18] sm:$0xf]
        %v1096 = vld [vmem:[%s1088 + $0x1c] sm:$0xf]
        %v1105 = vunpack.c.l.b16 %v1089
        %v1106 = vunpack.c.l.b16 %v1090
        %v1107 = vunpack.c.l.b16 %v1091
        %v1108 = vunpack.c.l.b16 %v1092
        %v1109 = vunpack.c.l.b16 %v1093
        %v1110 = vunpack.c.l.b16 %v1094
        %v1111 = vunpack.c.l.b16 %v1095
        %v1112 = vunpack.c.l.b16 %v1096
        %v1113 = vpack.c.b16 %v1106, %v1105
        %v1114 = vpack.c.b16 %v1108, %v1107
        %v1115 = vpack.c.b16 %v1110, %v1109
        %v1116 = vpack.c.b16 %v1112, %v1111
        %v1122 = vsel %vm994, %v1087, 0
        %1124 = vmatprep.subr.bf16.mxu0 0
        %1125 = vmatpush1.bf16.msra.mxu0 %v1113
        %1126 = vmatprep.subr.bf16.mxu0 0
        %1127 = vmatpush1.bf16.msra.mxu0 %v1114
        %1128 = vmatprep.subr.bf16.mxu0 0
        %1129 = vmatpush1.bf16.msra.mxu0 %v1115
        %1130 = vmatprep.subr.bf16.mxu0 0
        %1131 = vmatpush1.bf16.msra.mxu0 %v1116
        %1132 = vmatprep.subr.bf16.mxu0 0
        %1133 = vmatpush1.bf16.msra.mxu0 0
        %1134 = vmatprep.subr.bf16.mxu0 0
        %1135 = vmatpush1.bf16.msra.mxu0 0
        %1136 = vmatprep.subr.bf16.mxu0 0
        %1137 = vmatpush1.bf16.msra.mxu0 0
        %1138 = vmatprep.subr.bf16.mxu0 0
        %1139 = vmatpush1.bf16.msra.mxu0 0
        %1140 = vmatprep.subr.bf16.mxu0 0
        %1141 = vmatpush1.bf16.msra.mxu0 0
        %1142 = vmatprep.subr.bf16.mxu0 0
        %1143 = vmatpush1.bf16.msra.mxu0 0
        %1144 = vmatprep.subr.bf16.mxu0 0
        %1145 = vmatpush1.bf16.msra.mxu0 0
        %1146 = vmatprep.subr.bf16.mxu0 0
        %1147 = vmatpush1.bf16.msra.mxu0 0
        %1148 = vmatprep.subr.bf16.mxu0 0
        %1149 = vmatpush1.bf16.msra.mxu0 0
        %1150 = vmatprep.subr.bf16.mxu0 0
        %1151 = vmatpush1.bf16.msra.mxu0 0
        %1152 = vmatprep.subr.bf16.mxu0 0
        %1153 = vmatpush1.bf16.msra.mxu0 0
        %1154 = vmatprep.subr.bf16.mxu0 0
        %1155 = vmatpush1.bf16.msra.mxu0 0
        %1156 = vmatprep.mubr.bf16.mxu0 0
        %1157 = vmatmul.mubr.bf16.gmra.mrb[0].mxu0 %v1122
        %v1158 = vpop.f32.mrb[0].mxu0
        %v1159 = vadd.f32 0.0, %v1158
        %v1160 = vpop.f32.mrb[0].mxu0
        %v1161 = vpop.f32.mrb[0].mxu0
        %v1162 = vadd.f32 0.0, %v1161
        %v1163 = vpop.f32.mrb[0].mxu0
        %1164 = vdwg.mxu0
        %v1165 = vadd.f32 %v1083, %v1159
        %v1166 = vadd.f32 %v1084, %v1162
        %v1167 = vmax.f32 %v1165, 0.0
        %v1168 = vmax.f32 %v1166, 0.0
        %1169 = vst [vmem:[#allocation5 + $0x1] sm:$0xff] %v1167
        %1170 = vst [vmem:[#allocation5 + $0x9] sm:$0xff] %v1168
        %v1171 = vld [vmem:[#allocation2] sm:$0xff]
        %v1172 = vld [vmem:[#allocation2 + $0x10] sm:$0xff]
        %v1173 = vld [vmem:[#allocation2 + $0x8] sm:$0xff]
        %v1174 = vld [vmem:[#allocation2 + $0x18] sm:$0xff]
        %1179 = vrot.lane.b32.xlu0 %v1171, 120
        %v1180 = vpop.permute.xlu0 %1179
        %1181 = vrot.lane.b32.xlu0 %v1173, 120
        %v1182 = vpop.permute.xlu0 %1181
        %1183 = vrot.lane.b32.xlu0 %v1172, 120
        %v1184 = vpop.permute.xlu0 %1183
        %1185 = vrot.lane.b32.xlu0 %v1174, 120
        %v1186 = vpop.permute.xlu0 %1185
        %vm1187 = vcmask 982016
        %v1188 = vsel %vm1187, %v1180, %v1182
        %v1189 = vsel %vm1187, %v1184, %v1186
        %v1192 = vmax.f32 %v1171, %v1188
        %v1193 = vmax.f32 %v1172, %v1189
        %v1194 = vld [vmem:[#allocation2] sm:$0xfe]
        %v1195 = vld [vmem:[#allocation2 + $0x20] sm:$0x1]
        %v1196 = vld [vmem:[#allocation2 + $0x8] sm:$0xfe]
        %v1197 = vld [vmem:[#allocation2 + $0x28] sm:$0x1]
        %1202 = vrot.lane.b32.xlu0 %v1194, 120
        %v1203 = vpop.permute.xlu0 %1202
        %1204 = vrot.lane.b32.xlu0 %v1196, 120
        %v1205 = vpop.permute.xlu0 %1204
        %1206 = vrot.lane.b32.xlu0 %v1195, 120
        %v1207 = vpop.permute.xlu0 %1206
        %1208 = vrot.lane.b32.xlu0 %v1197, 120
        %v1209 = vpop.permute.xlu0 %1208
        %v1210 = vsel %vm1187, %v1203, %v1205
        %v1211 = vsel %vm1187, %v1207, %v1209
        %v1214 = vmax.f32 %v1194, %v1210
        %v1215 = vmax.f32 %v1195, %v1211
        %vm1219 = vcmask 1046528
        %v1220 = vrot.slane %v1214, 1
        %v1221 = vrot.slane %v1193, 1
        %v1222 = vsel %vm1219, %v1220, %v1221
        %v1223 = vrot.slane %v1215, 1
        %v1224 = vsel %vm1219, %v1221, %v1223
        %v1227 = vmax.f32 %v1192, %v1222
        %v1228 = vmax.f32 %v1193, %v1224
        %1229 = vst [vmem:[#allocation4 + $0x1] sm:$0xff] %v1227
        %1230 = vst [vmem:[#allocation4 + $0x9] sm:$0xff] %v1228
        %v1231 = vld [vmem:[%s9] sm:$0x1]
        %v1233 = vlaneseq
        %v1234 = vshrl.u32 %v1233, 7
        %v1235 = vsub.s32 0, %v1234
        %v1236 = vrot.slane %v1231, %v1235
        %v1238 = vld [vmem:[#allocation4] ss:$2 sm:$0xff]
        %v1239 = vpack.c.bf16 %v1238, %v1238
        %v1240 = vld [vmem:[%s7] sm:$0xf]
        %v1241 = vld [vmem:[%s7 + $0x4] sm:$0xf]
        %v1242 = vld [vmem:[%s7 + $0x8] sm:$0xf]
        %v1243 = vld [vmem:[%s7 + $0xc] sm:$0xf]
        %v1244 = vld [vmem:[%s7 + $0x10] sm:$0xf]
        %v1245 = vld [vmem:[%s7 + $0x14] sm:$0xf]
        %v1246 = vld [vmem:[%s7 + $0x18] sm:$0xf]
        %v1247 = vld [vmem:[%s7 + $0x1c] sm:$0xf]
        %v1248 = vld [vmem:[%s7 + $0x20] sm:$0xf]
        %v1249 = vld [vmem:[%s7 + $0x24] sm:$0xf]
        %v1250 = vld [vmem:[%s7 + $0x28] sm:$0xf]
        %v1251 = vld [vmem:[%s7 + $0x2c] sm:$0xf]
        %v1252 = vld [vmem:[%s7 + $0x30] sm:$0xf]
        %v1253 = vld [vmem:[%s7 + $0x34] sm:$0xf]
        %v1254 = vld [vmem:[%s7 + $0x38] sm:$0xf]
        %v1255 = vld [vmem:[%s7 + $0x3c] sm:$0xf]
        %v1272 = vunpack.c.l.b16 %v1240
        %v1273 = vunpack.c.l.b16 %v1241
        %v1274 = vunpack.c.l.b16 %v1242
        %v1275 = vunpack.c.l.b16 %v1243
        %v1276 = vunpack.c.l.b16 %v1244
        %v1277 = vunpack.c.l.b16 %v1245
        %v1278 = vunpack.c.l.b16 %v1246
        %v1279 = vunpack.c.l.b16 %v1247
        %v1280 = vunpack.c.l.b16 %v1248
        %v1281 = vunpack.c.l.b16 %v1249
        %v1282 = vunpack.c.l.b16 %v1250
        %v1283 = vunpack.c.l.b16 %v1251
        %v1284 = vunpack.c.l.b16 %v1252
        %v1285 = vunpack.c.l.b16 %v1253
        %v1286 = vunpack.c.l.b16 %v1254
        %v1287 = vunpack.c.l.b16 %v1255
        %v1288 = vpack.c.b16 %v1273, %v1272
        %v1289 = vpack.c.b16 %v1275, %v1274
        %v1290 = vpack.c.b16 %v1277, %v1276
        %v1291 = vpack.c.b16 %v1279, %v1278
        %v1292 = vpack.c.b16 %v1281, %v1280
        %v1293 = vpack.c.b16 %v1283, %v1282
        %v1294 = vpack.c.b16 %v1285, %v1284
        %v1295 = vpack.c.b16 %v1287, %v1286
        %1304 = vmatprep.subr.bf16.mxu0 0
        %1305 = vmatpush1.bf16.msra.mxu0 %v1288
        %1306 = vmatprep.subr.bf16.mxu0 0
        %1307 = vmatpush1.bf16.msra.mxu0 %v1289
        %1308 = vmatprep.subr.bf16.mxu0 0
        %1309 = vmatpush1.bf16.msra.mxu0 %v1290
        %1310 = vmatprep.subr.bf16.mxu0 0
        %1311 = vmatpush1.bf16.msra.mxu0 %v1291
        %1312 = vmatprep.subr.bf16.mxu0 0
        %1313 = vmatpush1.bf16.msra.mxu0 %v1292
        %1314 = vmatprep.subr.bf16.mxu0 0
        %1315 = vmatpush1.bf16.msra.mxu0 %v1293
        %1316 = vmatprep.subr.bf16.mxu0 0
        %1317 = vmatpush1.bf16.msra.mxu0 %v1294
        %1318 = vmatprep.subr.bf16.mxu0 0
        %1319 = vmatpush1.bf16.msra.mxu0 %v1295
        %1320 = vmatprep.subr.bf16.mxu0 0
        %1321 = vmatpush1.bf16.msra.mxu0 0
        %1322 = vmatprep.subr.bf16.mxu0 0
        %1323 = vmatpush1.bf16.msra.mxu0 0
        %1324 = vmatprep.subr.bf16.mxu0 0
        %1325 = vmatpush1.bf16.msra.mxu0 0
        %1326 = vmatprep.subr.bf16.mxu0 0
        %1327 = vmatpush1.bf16.msra.mxu0 0
        %1328 = vmatprep.subr.bf16.mxu0 0
        %1329 = vmatpush1.bf16.msra.mxu0 0
        %1330 = vmatprep.subr.bf16.mxu0 0
        %1331 = vmatpush1.bf16.msra.mxu0 0
        %1332 = vmatprep.subr.bf16.mxu0 0
        %1333 = vmatpush1.bf16.msra.mxu0 0
        %1334 = vmatprep.subr.bf16.mxu0 0
        %1335 = vmatpush1.bf16.msra.mxu0 0
        %1336 = vmatprep.mubr.bf16.mxu0 0
        %1337 = vmatmul.mubr.bf16.gmra.mrb[0].mxu0 %v1239
        %v1338 = vpop.f32.mrb[0].mxu0
        %v1339 = vadd.f32 0.0, %v1338
        %v1340 = vpop.f32.mrb[0].mxu0
        %v1341 = vpop.f32.mrb[0].mxu0
        %v1342 = vpop.f32.mrb[0].mxu0
        %1343 = vdwg.mxu0
        %v1344 = vadd.f32 %v1236, %v1339
        %v1345 = vld [vmem:[#allocation5] ss:$2 sm:$0xff]
        %v1346 = vpack.c.bf16 %v1345, %v1345
        %v1347 = vld [vmem:[%s8] sm:$0xf]
        %v1348 = vld [vmem:[%s8 + $0x4] sm:$0xf]
        %v1349 = vld [vmem:[%s8 + $0x8] sm:$0xf]
        %v1350 = vld [vmem:[%s8 + $0xc] sm:$0xf]
        %v1351 = vld [vmem:[%s8 + $0x10] sm:$0xf]
        %v1352 = vld [vmem:[%s8 + $0x14] sm:$0xf]
        %v1353 = vld [vmem:[%s8 + $0x18] sm:$0xf]
        %v1354 = vld [vmem:[%s8 + $0x1c] sm:$0xf]
        %v1355 = vld [vmem:[%s8 + $0x20] sm:$0xf]
        %v1356 = vld [vmem:[%s8 + $0x24] sm:$0xf]
        %v1357 = vld [vmem:[%s8 + $0x28] sm:$0xf]
        %v1358 = vld [vmem:[%s8 + $0x2c] sm:$0xf]
        %v1359 = vld [vmem:[%s8 + $0x30] sm:$0xf]
        %v1360 = vld [vmem:[%s8 + $0x34] sm:$0xf]
        %v1361 = vld [vmem:[%s8 + $0x38] sm:$0xf]
        %v1362 = vld [vmem:[%s8 + $0x3c] sm:$0xf]
        %v1379 = vunpack.c.l.b16 %v1347
        %v1380 = vunpack.c.l.b16 %v1348
        %v1381 = vunpack.c.l.b16 %v1349
        %v1382 = vunpack.c.l.b16 %v1350
        %v1383 = vunpack.c.l.b16 %v1351
        %v1384 = vunpack.c.l.b16 %v1352
        %v1385 = vunpack.c.l.b16 %v1353
        %v1386 = vunpack.c.l.b16 %v1354
        %v1387 = vunpack.c.l.b16 %v1355
        %v1388 = vunpack.c.l.b16 %v1356
        %v1389 = vunpack.c.l.b16 %v1357
        %v1390 = vunpack.c.l.b16 %v1358
        %v1391 = vunpack.c.l.b16 %v1359
        %v1392 = vunpack.c.l.b16 %v1360
        %v1393 = vunpack.c.l.b16 %v1361
        %v1394 = vunpack.c.l.b16 %v1362
        %v1395 = vpack.c.b16 %v1380, %v1379
        %v1396 = vpack.c.b16 %v1382, %v1381
        %v1397 = vpack.c.b16 %v1384, %v1383
        %v1398 = vpack.c.b16 %v1386, %v1385
        %v1399 = vpack.c.b16 %v1388, %v1387
        %v1400 = vpack.c.b16 %v1390, %v1389
        %v1401 = vpack.c.b16 %v1392, %v1391
        %v1402 = vpack.c.b16 %v1394, %v1393
        %1411 = vmatprep.subr.bf16.mxu0 0
        %1412 = vmatpush1.bf16.msra.mxu0 %v1395
        %1413 = vmatprep.subr.bf16.mxu0 0
        %1414 = vmatpush1.bf16.msra.mxu0 %v1396
        %1415 = vmatprep.subr.bf16.mxu0 0
        %1416 = vmatpush1.bf16.msra.mxu0 %v1397
        %1417 = vmatprep.subr.bf16.mxu0 0
        %1418 = vmatpush1.bf16.msra.mxu0 %v1398
        %1419 = vmatprep.subr.bf16.mxu0 0
        %1420 = vmatpush1.bf16.msra.mxu0 %v1399
        %1421 = vmatprep.subr.bf16.mxu0 0
        %1422 = vmatpush1.bf16.msra.mxu0 %v1400
        %1423 = vmatprep.subr.bf16.mxu0 0
        %1424 = vmatpush1.bf16.msra.mxu0 %v1401
        %1425 = vmatprep.subr.bf16.mxu0 0
        %1426 = vmatpush1.bf16.msra.mxu0 %v1402
        %1427 = vmatprep.subr.bf16.mxu0 0
        %1428 = vmatpush1.bf16.msra.mxu0 0
        %1429 = vmatprep.subr.bf16.mxu0 0
        %1430 = vmatpush1.bf16.msra.mxu0 0
        %1431 = vmatprep.subr.bf16.mxu0 0
        %1432 = vmatpush1.bf16.msra.mxu0 0
        %1433 = vmatprep.subr.bf16.mxu0 0
        %1434 = vmatpush1.bf16.msra.mxu0 0
        %1435 = vmatprep.subr.bf16.mxu0 0
        %1436 = vmatpush1.bf16.msra.mxu0 0
        %1437 = vmatprep.subr.bf16.mxu0 0
        %1438 = vmatpush1.bf16.msra.mxu0 0
        %1439 = vmatprep.subr.bf16.mxu0 0
        %1440 = vmatpush1.bf16.msra.mxu0 0
        %1441 = vmatprep.subr.bf16.mxu0 0
        %1442 = vmatpush1.bf16.msra.mxu0 0
        %1443 = vmatprep.mubr.bf16.mxu0 0
        %1444 = vmatmul.mubr.bf16.gmra.mrb[0].mxu0 %v1346
        %v1445 = vpop.f32.mrb[0].mxu0
        %v1446 = vadd.f32 0.0, %v1445
        %v1447 = vpop.f32.mrb[0].mxu0
        %v1448 = vpop.f32.mrb[0].mxu0
        %v1449 = vpop.f32.mrb[0].mxu0
        %1450 = vdwg.mxu0
        %v1451 = vadd.f32 %v1344, %v1446
        %s1452 = scalar_lea.vmem [#allocation4], 1
        %v1453 = vld [vmem:[%s1452] ss:$2 sm:$0xff]
        %v1454 = vpack.c.bf16 %v1453, %v1453
        %s1455 = scalar_lea.vmem %s7, 64
        %v1456 = vld [vmem:[%s1455] sm:$0xf]
        %v1457 = vld [vmem:[%s1455 + $0x4] sm:$0xf]
        %v1458 = vld [vmem:[%s1455 + $0x8] sm:$0xf]
        %v1459 = vld [vmem:[%s1455 + $0xc] sm:$0xf]
        %v1460 = vld [vmem:[%s1455 + $0x10] sm:$0xf]
        %v1461 = vld [vmem:[%s1455 + $0x14] sm:$0xf]
        %v1462 = vld [vmem:[%s1455 + $0x18] sm:$0xf]
        %v1463 = vld [vmem:[%s1455 + $0x1c] sm:$0xf]
        %v1464 = vld [vmem:[%s1455 + $0x20] sm:$0xf]
        %v1465 = vld [vmem:[%s1455 + $0x24] sm:$0xf]
        %v1466 = vld [vmem:[%s1455 + $0x28] sm:$0xf]
        %v1467 = vld [vmem:[%s1455 + $0x2c] sm:$0xf]
        %v1468 = vld [vmem:[%s1455 + $0x30] sm:$0xf]
        %v1469 = vld [vmem:[%s1455 + $0x34] sm:$0xf]
        %v1470 = vld [vmem:[%s1455 + $0x38] sm:$0xf]
        %v1471 = vld [vmem:[%s1455 + $0x3c] sm:$0xf]
        %v1488 = vunpack.c.l.b16 %v1456
        %v1489 = vunpack.c.l.b16 %v1457
        %v1490 = vunpack.c.l.b16 %v1458
        %v1491 = vunpack.c.l.b16 %v1459
        %v1492 = vunpack.c.l.b16 %v1460
        %v1493 = vunpack.c.l.b16 %v1461
        %v1494 = vunpack.c.l.b16 %v1462
        %v1495 = vunpack.c.l.b16 %v1463
        %v1496 = vunpack.c.l.b16 %v1464
        %v1497 = vunpack.c.l.b16 %v1465
        %v1498 = vunpack.c.l.b16 %v1466
        %v1499 = vunpack.c.l.b16 %v1467
        %v1500 = vunpack.c.l.b16 %v1468
        %v1501 = vunpack.c.l.b16 %v1469
        %v1502 = vunpack.c.l.b16 %v1470
        %v1503 = vunpack.c.l.b16 %v1471
        %v1504 = vpack.c.b16 %v1489, %v1488
        %v1505 = vpack.c.b16 %v1491, %v1490
        %v1506 = vpack.c.b16 %v1493, %v1492
        %v1507 = vpack.c.b16 %v1495, %v1494
        %v1508 = vpack.c.b16 %v1497, %v1496
        %v1509 = vpack.c.b16 %v1499, %v1498
        %v1510 = vpack.c.b16 %v1501, %v1500
        %v1511 = vpack.c.b16 %v1503, %v1502
        %1520 = vmatprep.subr.bf16.mxu0 0
        %1521 = vmatpush1.bf16.msra.mxu0 %v1504
        %1522 = vmatprep.subr.bf16.mxu0 0
        %1523 = vmatpush1.bf16.msra.mxu0 %v1505
        %1524 = vmatprep.subr.bf16.mxu0 0
        %1525 = vmatpush1.bf16.msra.mxu0 %v1506
        %1526 = vmatprep.subr.bf16.mxu0 0
        %1527 = vmatpush1.bf16.msra.mxu0 %v1507
        %1528 = vmatprep.subr.bf16.mxu0 0
        %1529 = vmatpush1.bf16.msra.mxu0 %v1508
        %1530 = vmatprep.subr.bf16.mxu0 0
        %1531 = vmatpush1.bf16.msra.mxu0 %v1509
        %1532 = vmatprep.subr.bf16.mxu0 0
        %1533 = vmatpush1.bf16.msra.mxu0 %v1510
        %1534 = vmatprep.subr.bf16.mxu0 0
        %1535 = vmatpush1.bf16.msra.mxu0 %v1511
        %1536 = vmatprep.subr.bf16.mxu0 0
        %1537 = vmatpush1.bf16.msra.mxu0 0
        %1538 = vmatprep.subr.bf16.mxu0 0
        %1539 = vmatpush1.bf16.msra.mxu0 0
        %1540 = vmatprep.subr.bf16.mxu0 0
        %1541 = vmatpush1.bf16.msra.mxu0 0
        %1542 = vmatprep.subr.bf16.mxu0 0
        %1543 = vmatpush1.bf16.msra.mxu0 0
        %1544 = vmatprep.subr.bf16.mxu0 0
        %1545 = vmatpush1.bf16.msra.mxu0 0
        %1546 = vmatprep.subr.bf16.mxu0 0
        %1547 = vmatpush1.bf16.msra.mxu0 0
        %1548 = vmatprep.subr.bf16.mxu0 0
        %1549 = vmatpush1.bf16.msra.mxu0 0
        %1550 = vmatprep.subr.bf16.mxu0 0
        %1551 = vmatpush1.bf16.msra.mxu0 0
        %1552 = vmatprep.mubr.bf16.mxu0 0
        %1553 = vmatmul.mubr.bf16.gmra.mrb[0].mxu0 %v1454
        %v1554 = vpop.f32.mrb[0].mxu0
        %v1555 = vadd.f32 0.0, %v1554
        %v1556 = vpop.f32.mrb[0].mxu0
        %v1557 = vpop.f32.mrb[0].mxu0
        %v1558 = vpop.f32.mrb[0].mxu0
        %1559 = vdwg.mxu0
        %v1560 = vadd.f32 %v1451, %v1555
        %s1561 = scalar_lea.vmem [#allocation5], 1
        %v1562 = vld [vmem:[%s1561] ss:$2 sm:$0xff]
        %v1563 = vpack.c.bf16 %v1562, %v1562
        %s1564 = scalar_lea.vmem %s8, 64
        %v1565 = vld [vmem:[%s1564] sm:$0xf]
        %v1566 = vld [vmem:[%s1564 + $0x4] sm:$0xf]
        %v1567 = vld [vmem:[%s1564 + $0x8] sm:$0xf]
        %v1568 = vld [vmem:[%s1564 + $0xc] sm:$0xf]
        %v1569 = vld [vmem:[%s1564 + $0x10] sm:$0xf]
        %v1570 = vld [vmem:[%s1564 + $0x14] sm:$0xf]
        %v1571 = vld [vmem:[%s1564 + $0x18] sm:$0xf]
        %v1572 = vld [vmem:[%s1564 + $0x1c] sm:$0xf]
        %v1573 = vld [vmem:[%s1564 + $0x20] sm:$0xf]
        %v1574 = vld [vmem:[%s1564 + $0x24] sm:$0xf]
        %v1575 = vld [vmem:[%s1564 + $0x28] sm:$0xf]
        %v1576 = vld [vmem:[%s1564 + $0x2c] sm:$0xf]
        %v1577 = vld [vmem:[%s1564 + $0x30] sm:$0xf]
        %v1578 = vld [vmem:[%s1564 + $0x34] sm:$0xf]
        %v1579 = vld [vmem:[%s1564 + $0x38] sm:$0xf]
        %v1580 = vld [vmem:[%s1564 + $0x3c] sm:$0xf]
        %v1597 = vunpack.c.l.b16 %v1565
        %v1598 = vunpack.c.l.b16 %v1566
        %v1599 = vunpack.c.l.b16 %v1567
        %v1600 = vunpack.c.l.b16 %v1568
        %v1601 = vunpack.c.l.b16 %v1569
        %v1602 = vunpack.c.l.b16 %v1570
        %v1603 = vunpack.c.l.b16 %v1571
        %v1604 = vunpack.c.l.b16 %v1572
        %v1605 = vunpack.c.l.b16 %v1573
        %v1606 = vunpack.c.l.b16 %v1574
        %v1607 = vunpack.c.l.b16 %v1575
        %v1608 = vunpack.c.l.b16 %v1576
        %v1609 = vunpack.c.l.b16 %v1577
        %v1610 = vunpack.c.l.b16 %v1578
        %v1611 = vunpack.c.l.b16 %v1579
        %v1612 = vunpack.c.l.b16 %v1580
        %v1613 = vpack.c.b16 %v1598, %v1597
        %v1614 = vpack.c.b16 %v1600, %v1599
        %v1615 = vpack.c.b16 %v1602, %v1601
        %v1616 = vpack.c.b16 %v1604, %v1603
        %v1617 = vpack.c.b16 %v1606, %v1605
        %v1618 = vpack.c.b16 %v1608, %v1607
        %v1619 = vpack.c.b16 %v1610, %v1609
        %v1620 = vpack.c.b16 %v1612, %v1611
        %1629 = vmatprep.subr.bf16.mxu0 0
        %1630 = vmatpush1.bf16.msra.mxu0 %v1613
        %1631 = vmatprep.subr.bf16.mxu0 0
        %1632 = vmatpush1.bf16.msra.mxu0 %v1614
        %1633 = vmatprep.subr.bf16.mxu0 0
        %1634 = vmatpush1.bf16.msra.mxu0 %v1615
        %1635 = vmatprep.subr.bf16.mxu0 0
        %1636 = vmatpush1.bf16.msra.mxu0 %v1616
        %1637 = vmatprep.subr.bf16.mxu0 0
        %1638 = vmatpush1.bf16.msra.mxu0 %v1617
        %1639 = vmatprep.subr.bf16.mxu0 0
        %1640 = vmatpush1.bf16.msra.mxu0 %v1618
        %1641 = vmatprep.subr.bf16.mxu0 0
        %1642 = vmatpush1.bf16.msra.mxu0 %v1619
        %1643 = vmatprep.subr.bf16.mxu0 0
        %1644 = vmatpush1.bf16.msra.mxu0 %v1620
        %1645 = vmatprep.subr.bf16.mxu0 0
        %1646 = vmatpush1.bf16.msra.mxu0 0
        %1647 = vmatprep.subr.bf16.mxu0 0
        %1648 = vmatpush1.bf16.msra.mxu0 0
        %1649 = vmatprep.subr.bf16.mxu0 0
        %1650 = vmatpush1.bf16.msra.mxu0 0
        %1651 = vmatprep.subr.bf16.mxu0 0
        %1652 = vmatpush1.bf16.msra.mxu0 0
        %1653 = vmatprep.subr.bf16.mxu0 0
        %1654 = vmatpush1.bf16.msra.mxu0 0
        %1655 = vmatprep.subr.bf16.mxu0 0
        %1656 = vmatpush1.bf16.msra.mxu0 0
        %1657 = vmatprep.subr.bf16.mxu0 0
        %1658 = vmatpush1.bf16.msra.mxu0 0
        %1659 = vmatprep.subr.bf16.mxu0 0
        %1660 = vmatpush1.bf16.msra.mxu0 0
        %1661 = vmatprep.mubr.bf16.mxu0 0
        %1662 = vmatmul.mubr.bf16.gmra.mrb[0].mxu0 %v1563
        %v1663 = vpop.f32.mrb[0].mxu0
        %v1664 = vadd.f32 0.0, %v1663
        %v1665 = vpop.f32.mrb[0].mxu0
        %v1666 = vpop.f32.mrb[0].mxu0
        %v1667 = vpop.f32.mrb[0].mxu0
        %1668 = vdwg.mxu0
        %v1669 = vadd.f32 %v1560, %v1664
        %s1670 = scalar_lea.vmem [#allocation4], 2
        %v1671 = vld [vmem:[%s1670] ss:$2 sm:$0xff]
        %v1672 = vpack.c.bf16 %v1671, %v1671
        %s1673 = scalar_lea.vmem %s7, 128
        %v1674 = vld [vmem:[%s1673] sm:$0xf]
        %v1675 = vld [vmem:[%s1673 + $0x4] sm:$0xf]
        %v1676 = vld [vmem:[%s1673 + $0x8] sm:$0xf]
        %v1677 = vld [vmem:[%s1673 + $0xc] sm:$0xf]
        %v1678 = vld [vmem:[%s1673 + $0x10] sm:$0xf]
        %v1679 = vld [vmem:[%s1673 + $0x14] sm:$0xf]
        %v1680 = vld [vmem:[%s1673 + $0x18] sm:$0xf]
        %v1681 = vld [vmem:[%s1673 + $0x1c] sm:$0xf]
        %v1682 = vld [vmem:[%s1673 + $0x20] sm:$0xf]
        %v1683 = vld [vmem:[%s1673 + $0x24] sm:$0xf]
        %v1684 = vld [vmem:[%s1673 + $0x28] sm:$0xf]
        %v1685 = vld [vmem:[%s1673 + $0x2c] sm:$0xf]
        %v1686 = vld [vmem:[%s1673 + $0x30] sm:$0xf]
        %v1687 = vld [vmem:[%s1673 + $0x34] sm:$0xf]
        %v1688 = vld [vmem:[%s1673 + $0x38] sm:$0xf]
        %v1689 = vld [vmem:[%s1673 + $0x3c] sm:$0xf]
        %v1706 = vunpack.c.l.b16 %v1674
        %v1707 = vunpack.c.l.b16 %v1675
        %v1708 = vunpack.c.l.b16 %v1676
        %v1709 = vunpack.c.l.b16 %v1677
        %v1710 = vunpack.c.l.b16 %v1678
        %v1711 = vunpack.c.l.b16 %v1679
        %v1712 = vunpack.c.l.b16 %v1680
        %v1713 = vunpack.c.l.b16 %v1681
        %v1714 = vunpack.c.l.b16 %v1682
        %v1715 = vunpack.c.l.b16 %v1683
        %v1716 = vunpack.c.l.b16 %v1684
        %v1717 = vunpack.c.l.b16 %v1685
        %v1718 = vunpack.c.l.b16 %v1686
        %v1719 = vunpack.c.l.b16 %v1687
        %v1720 = vunpack.c.l.b16 %v1688
        %v1721 = vunpack.c.l.b16 %v1689
        %v1722 = vpack.c.b16 %v1707, %v1706
        %v1723 = vpack.c.b16 %v1709, %v1708
        %v1724 = vpack.c.b16 %v1711, %v1710
        %v1725 = vpack.c.b16 %v1713, %v1712
        %v1726 = vpack.c.b16 %v1715, %v1714
        %v1727 = vpack.c.b16 %v1717, %v1716
        %v1728 = vpack.c.b16 %v1719, %v1718
        %v1729 = vpack.c.b16 %v1721, %v1720
        %1738 = vmatprep.subr.bf16.mxu0 0
        %1739 = vmatpush1.bf16.msra.mxu0 %v1722
        %1740 = vmatprep.subr.bf16.mxu0 0
        %1741 = vmatpush1.bf16.msra.mxu0 %v1723
        %1742 = vmatprep.subr.bf16.mxu0 0
        %1743 = vmatpush1.bf16.msra.mxu0 %v1724
        %1744 = vmatprep.subr.bf16.mxu0 0
        %1745 = vmatpush1.bf16.msra.mxu0 %v1725
        %1746 = vmatprep.subr.bf16.mxu0 0
        %1747 = vmatpush1.bf16.msra.mxu0 %v1726
        %1748 = vmatprep.subr.bf16.mxu0 0
        %1749 = vmatpush1.bf16.msra.mxu0 %v1727
        %1750 = vmatprep.subr.bf16.mxu0 0
        %1751 = vmatpush1.bf16.msra.mxu0 %v1728
        %1752 = vmatprep.subr.bf16.mxu0 0
        %1753 = vmatpush1.bf16.msra.mxu0 %v1729
        %1754 = vmatprep.subr.bf16.mxu0 0
        %1755 = vmatpush1.bf16.msra.mxu0 0
        %1756 = vmatprep.subr.bf16.mxu0 0
        %1757 = vmatpush1.bf16.msra.mxu0 0
        %1758 = vmatprep.subr.bf16.mxu0 0
        %1759 = vmatpush1.bf16.msra.mxu0 0
        %1760 = vmatprep.subr.bf16.mxu0 0
        %1761 = vmatpush1.bf16.msra.mxu0 0
        %1762 = vmatprep.subr.bf16.mxu0 0
        %1763 = vmatpush1.bf16.msra.mxu0 0
        %1764 = vmatprep.subr.bf16.mxu0 0
        %1765 = vmatpush1.bf16.msra.mxu0 0
        %1766 = vmatprep.subr.bf16.mxu0 0
        %1767 = vmatpush1.bf16.msra.mxu0 0
        %1768 = vmatprep.subr.bf16.mxu0 0
        %1769 = vmatpush1.bf16.msra.mxu0 0
        %1770 = vmatprep.mubr.bf16.mxu0 0
        %1771 = vmatmul.mubr.bf16.gmra.mrb[0].mxu0 %v1672
        %v1772 = vpop.f32.mrb[0].mxu0
        %v1773 = vadd.f32 0.0, %v1772
        %v1774 = vpop.f32.mrb[0].mxu0
        %v1775 = vpop.f32.mrb[0].mxu0
        %v1776 = vpop.f32.mrb[0].mxu0
        %1777 = vdwg.mxu0
        %v1778 = vadd.f32 %v1669, %v1773
        %s1779 = scalar_lea.vmem [#allocation5], 2
        %v1780 = vld [vmem:[%s1779] ss:$2 sm:$0xff]
        %v1781 = vpack.c.bf16 %v1780, %v1780
        %s1782 = scalar_lea.vmem %s8, 128
        %v1783 = vld [vmem:[%s1782] sm:$0xf]
        %v1784 = vld [vmem:[%s1782 + $0x4] sm:$0xf]
        %v1785 = vld [vmem:[%s1782 + $0x8] sm:$0xf]
        %v1786 = vld [vmem:[%s1782 + $0xc] sm:$0xf]
        %v1787 = vld [vmem:[%s1782 + $0x10] sm:$0xf]
        %v1788 = vld [vmem:[%s1782 + $0x14] sm:$0xf]
        %v1789 = vld [vmem:[%s1782 + $0x18] sm:$0xf]
        %v1790 = vld [vmem:[%s1782 + $0x1c] sm:$0xf]
        %v1791 = vld [vmem:[%s1782 + $0x20] sm:$0xf]
        %v1792 = vld [vmem:[%s1782 + $0x24] sm:$0xf]
        %v1793 = vld [vmem:[%s1782 + $0x28] sm:$0xf]
        %v1794 = vld [vmem:[%s1782 + $0x2c] sm:$0xf]
        %v1795 = vld [vmem:[%s1782 + $0x30] sm:$0xf]
        %v1796 = vld [vmem:[%s1782 + $0x34] sm:$0xf]
        %v1797 = vld [vmem:[%s1782 + $0x38] sm:$0xf]
        %v1798 = vld [vmem:[%s1782 + $0x3c] sm:$0xf]
        %v1815 = vunpack.c.l.b16 %v1783
        %v1816 = vunpack.c.l.b16 %v1784
        %v1817 = vunpack.c.l.b16 %v1785
        %v1818 = vunpack.c.l.b16 %v1786
        %v1819 = vunpack.c.l.b16 %v1787
        %v1820 = vunpack.c.l.b16 %v1788
        %v1821 = vunpack.c.l.b16 %v1789
        %v1822 = vunpack.c.l.b16 %v1790
        %v1823 = vunpack.c.l.b16 %v1791
        %v1824 = vunpack.c.l.b16 %v1792
        %v1825 = vunpack.c.l.b16 %v1793
        %v1826 = vunpack.c.l.b16 %v1794
        %v1827 = vunpack.c.l.b16 %v1795
        %v1828 = vunpack.c.l.b16 %v1796
        %v1829 = vunpack.c.l.b16 %v1797
        %v1830 = vunpack.c.l.b16 %v1798
        %v1831 = vpack.c.b16 %v1816, %v1815
        %v1832 = vpack.c.b16 %v1818, %v1817
        %v1833 = vpack.c.b16 %v1820, %v1819
        %v1834 = vpack.c.b16 %v1822, %v1821
        %v1835 = vpack.c.b16 %v1824, %v1823
        %v1836 = vpack.c.b16 %v1826, %v1825
        %v1837 = vpack.c.b16 %v1828, %v1827
        %v1838 = vpack.c.b16 %v1830, %v1829
        %1847 = vmatprep.subr.bf16.mxu0 0
        %1848 = vmatpush1.bf16.msra.mxu0 %v1831
        %1849 = vmatprep.subr.bf16.mxu0 0
        %1850 = vmatpush1.bf16.msra.mxu0 %v1832
        %1851 = vmatprep.subr.bf16.mxu0 0
        %1852 = vmatpush1.bf16.msra.mxu0 %v1833
        %1853 = vmatprep.subr.bf16.mxu0 0
        %1854 = vmatpush1.bf16.msra.mxu0 %v1834
        %1855 = vmatprep.subr.bf16.mxu0 0
        %1856 = vmatpush1.bf16.msra.mxu0 %v1835
        %1857 = vmatprep.subr.bf16.mxu0 0
        %1858 = vmatpush1.bf16.msra.mxu0 %v1836
        %1859 = vmatprep.subr.bf16.mxu0 0
        %1860 = vmatpush1.bf16.msra.mxu0 %v1837
        %1861 = vmatprep.subr.bf16.mxu0 0
        %1862 = vmatpush1.bf16.msra.mxu0 %v1838
        %1863 = vmatprep.subr.bf16.mxu0 0
        %1864 = vmatpush1.bf16.msra.mxu0 0
        %1865 = vmatprep.subr.bf16.mxu0 0
        %1866 = vmatpush1.bf16.msra.mxu0 0
        %1867 = vmatprep.subr.bf16.mxu0 0
        %1868 = vmatpush1.bf16.msra.mxu0 0
        %1869 = vmatprep.subr.bf16.mxu0 0
        %1870 = vmatpush1.bf16.msra.mxu0 0
        %1871 = vmatprep.subr.bf16.mxu0 0
        %1872 = vmatpush1.bf16.msra.mxu0 0
        %1873 = vmatprep.subr.bf16.mxu0 0
        %1874 = vmatpush1.bf16.msra.mxu0 0
        %1875 = vmatprep.subr.bf16.mxu0 0
        %1876 = vmatpush1.bf16.msra.mxu0 0
        %1877 = vmatprep.subr.bf16.mxu0 0
        %1878 = vmatpush1.bf16.msra.mxu0 0
        %1879 = vmatprep.mubr.bf16.mxu0 0
        %1880 = vmatmul.mubr.bf16.gmra.mrb[0].mxu0 %v1781
        %v1881 = vpop.f32.mrb[0].mxu0
        %v1882 = vadd.f32 0.0, %v1881
        %v1883 = vpop.f32.mrb[0].mxu0
        %v1884 = vpop.f32.mrb[0].mxu0
        %v1885 = vpop.f32.mrb[0].mxu0
        %1886 = vdwg.mxu0
        %v1887 = vadd.f32 %v1778, %v1882
        %v1888 = vmax.f32 %v1887, 0.0
        %v1889 = vpack.c.bf16 %v1888, %v1888
        %v1890 = vld [vmem:[%s10] sm:$0xf]
        %v1891 = vld [vmem:[%s10 + $0x4] sm:$0xf]
        %v1892 = vld [vmem:[%s10 + $0x8] sm:$0xf]
        %v1893 = vld [vmem:[%s10 + $0xc] sm:$0xf]
        %v1894 = vld [vmem:[%s10 + $0x10] sm:$0xf]
        %v1895 = vld [vmem:[%s10 + $0x14] sm:$0xf]
        %v1896 = vld [vmem:[%s10 + $0x18] sm:$0xf]
        %v1897 = vld [vmem:[%s10 + $0x1c] sm:$0xf]
        %v1898 = vld [vmem:[%s11] sm:$0x1]
        %v1900 = vlaneseq
        %v1901 = vshrl.u32 %v1900, 7
        %v1902 = vsub.s32 0, %v1901
        %v1903 = vrot.slane %v1898, %v1902
        %v1913 = vunpack.c.l.b16 %v1890
        %v1914 = vunpack.c.l.b16 %v1891
        %v1915 = vunpack.c.l.b16 %v1892
        %v1916 = vunpack.c.l.b16 %v1893
        %v1917 = vunpack.c.l.b16 %v1894
        %v1918 = vunpack.c.l.b16 %v1895
        %v1919 = vunpack.c.l.b16 %v1896
        %v1920 = vunpack.c.l.b16 %v1897
        %v1921 = vpack.c.b16 %v1914, %v1913
        %v1922 = vpack.c.b16 %v1916, %v1915
        %v1923 = vpack.c.b16 %v1918, %v1917
        %v1924 = vpack.c.b16 %v1920, %v1919
        %v1930 = vsel %vm994, %v1889, 0
        %1932 = vmatprep.subr.bf16.mxu0 0
        %1933 = vmatpush1.bf16.msra.mxu0 %v1921
        %1934 = vmatprep.subr.bf16.mxu0 0
        %1935 = vmatpush1.bf16.msra.mxu0 %v1922
        %1936 = vmatprep.subr.bf16.mxu0 0
        %1937 = vmatpush1.bf16.msra.mxu0 %v1923
        %1938 = vmatprep.subr.bf16.mxu0 0
        %1939 = vmatpush1.bf16.msra.mxu0 %v1924
        %1940 = vmatprep.subr.bf16.mxu0 0
        %1941 = vmatpush1.bf16.msra.mxu0 0
        %1942 = vmatprep.subr.bf16.mxu0 0
        %1943 = vmatpush1.bf16.msra.mxu0 0
        %1944 = vmatprep.subr.bf16.mxu0 0
        %1945 = vmatpush1.bf16.msra.mxu0 0
        %1946 = vmatprep.subr.bf16.mxu0 0
        %1947 = vmatpush1.bf16.msra.mxu0 0
        %1948 = vmatprep.subr.bf16.mxu0 0
        %1949 = vmatpush1.bf16.msra.mxu0 0
        %1950 = vmatprep.subr.bf16.mxu0 0
        %1951 = vmatpush1.bf16.msra.mxu0 0
        %1952 = vmatprep.subr.bf16.mxu0 0
        %1953 = vmatpush1.bf16.msra.mxu0 0
        %1954 = vmatprep.subr.bf16.mxu0 0
        %1955 = vmatpush1.bf16.msra.mxu0 0
        %1956 = vmatprep.subr.bf16.mxu0 0
        %1957 = vmatpush1.bf16.msra.mxu0 0
        %1958 = vmatprep.subr.bf16.mxu0 0
        %1959 = vmatpush1.bf16.msra.mxu0 0
        %1960 = vmatprep.subr.bf16.mxu0 0
        %1961 = vmatpush1.bf16.msra.mxu0 0
        %1962 = vmatprep.subr.bf16.mxu0 0
        %1963 = vmatpush1.bf16.msra.mxu0 0
        %1964 = vmatprep.mubr.bf16.mxu0 0
        %1965 = vmatmul.mubr.bf16.gmra.mrb[0].mxu0 %v1930
        %v1966 = vpop.f32.mrb[0].mxu0
        %v1967 = vadd.f32 %v1903, %v1966
        %v1968 = vpop.f32.mrb[0].mxu0
        %v1969 = vpop.f32.mrb[0].mxu0
        %v1970 = vpop.f32.mrb[0].mxu0
        %1971 = vdwg.mxu0
        %v1972 = vmax.f32 %v1967, 0.0
        %1973 = vst [vmem:[%s406] sm:$0xff] %v1972
        %s1974 = sand.u32 %s291, 1
        %s1975 = scalar_lea.sflag [#allocation7], %s1974
        %s1976 = sand.u32 %s291, 1
        %s1977 = smul.addr %s1976, 8
        %s1978 = scalar_lea.vmem [#allocation6], %s1977
        // Predicated region
        $region69: #{tpu_custom_call.1} parent=67 // pred_check
          %p1979 = pneg %p301
        $region70: #{tpu_custom_call.1} parent=67 // pred_check_branch
          %1981 = sbr.rel (%p1979) target = $region72
        $region71: #{tpu_custom_call.1} parent=67 // pred_region
          %s1983 = ssub.s32 128, 128
          %1984 = vsyncadd %s1975, %s1983
          %s1985 = smul.addr %s26, 128
          %s1986 = scalar_lea.hbm %s12, %s1985
          %s1988 = sshll.u32 %s1978, 4
          %s1989 = int_to_ptr.vmem [resolvable:$true] %s1988
          %1991 = dma.vmem_to_hbm [thread:$0]  %s1989, 128, %s1986, %s1975
        $region72: #{tpu_custom_call.1} parent=67 // pred_fallthru
          _
      $region68: #{tpu_custom_call.1} parent=5 // pred_fallthru
        _
      %p1992 = scmp.le.s32.totalorder 2, %s21
      // Predicated region
      $region73: #{tpu_custom_call.1} parent=5 // pred_check
        %p1993 = pneg %p1992
      $region74: #{tpu_custom_call.1} parent=5 // pred_check_branch
        %1995 = sbr.rel (%p1993) target = $region76
      $region75: #{tpu_custom_call.1} parent=5 // pred_region
        %s1996 = ssub.s32 %s21, 2
        // Predicated region
        $region77: #{tpu_custom_call.1} parent=75 // pred_check
          %p1997 = pneg %p307
        $region78: #{tpu_custom_call.1} parent=75 // pred_check_branch
          %1999 = sbr.rel (%p1997) target = $region80
        $region79: #{tpu_custom_call.1} parent=75 // pred_region
          %s2000 = sand.u32 %s292, 1
          %s2001 = scalar_lea.sflag [#allocation7], %s2000
          %s2002 = sand.u32 %s292, 1
          %s2003 = smul.addr %s2002, 8
          %s2004 = scalar_lea.vmem [#allocation6], %s2003
          %2005 = dma.done %s2001, 128
        $region80: #{tpu_custom_call.1} parent=75 // pred_fallthru
          _
      $region76: #{tpu_custom_call.1} parent=5 // pred_fallthru
        _
    $region6: #{tpu_custom_call.1} parent=1 // loop_footer
      %s25 = sadd.s32 1, %s21
    $region7: #{tpu_custom_call.1} parent=1 // loop_footer_branch
      %20 = sbr.rel target = $region3
    $region8: #{tpu_custom_call.1} parent=1 // loop_exit
      _
    %2006 = vsyncpa [#allocation7], 1
    %s2007 = scalar_lea.sflag [#allocation7], 1
    %2008 = vsyncpa %s2007, 1

</llo_original>
